<compile_context>
chip_gen: v7x
topology: tpu7x:2x2x1
jax: 0.10.0
libtpu: 0.0.40
codegen_flags: <defaults>
</compile_context>

<pallas_src>
import math

import jax
import jax.numpy as jnp
from jax import lax
from jax.experimental import pallas as pl
from jax.experimental.pallas import tpu as pltpu

NUM_GROUPS = 32
EPS = 1e-5
HIGHEST = lax.Precision.HIGHEST
_MIB = 1 << 20


# ----------------------------------------------------------------------------------------
# Kernel 1: chunked GroupNorm statistics -> fused per-channel scale / shift.
# ----------------------------------------------------------------------------------------
def _gn_stats_kernel(x_ref, gt_ref, gamma_ref, beta_ref, scale_ref, shift_ref,
                     mean_scr, m2_scr):
    si = pl.program_id(1)
    TS, C = x_ref.shape[1], x_ref.shape[2]
    n_b = float(TS * (C // NUM_GROUPS))           # rows per group contributed by this slab

    @pl.when(si == 0)
    def _():
        mean_scr[...] = jnp.zeros_like(mean_scr)
        m2_scr[...] = jnp.zeros_like(m2_scr)

    gt = gt_ref[...]                               # (G, C) one-hot group membership
    x2 = x_ref[0].astype(jnp.float32)              # (TS, C) — only one slab is live at a time

    # Per-slab group mean and M2 (squared deviations from the *slab* mean). The tiny
    # (1,C)x(C,G) one-hot gathers/scatters run once per slab and are kept exact in f32.
    ch_sum = jnp.sum(x2, axis=0, keepdims=True)                                     # (1, C)
    mean_b = lax.dot_general(ch_sum, gt, (((1,), (1,)), ((), ())),
                             precision=HIGHEST,
                             preferred_element_type=jnp.float32) / n_b              # (1, G)
    mean_b_c = jnp.dot(mean_b, gt, precision=HIGHEST,
                       preferred_element_type=jnp.float32)                          # (1, C)
    d = x2 - mean_b_c
    m2_c = jnp.sum(d * d, axis=0, keepdims=True)                                    # (1, C)
    m2_b = lax.dot_general(m2_c, gt, (((1,), (1,)), ((), ())),
                           precision=HIGHEST, preferred_element_type=jnp.float32)   # (1, G)

    # Chan / Welford combine with the running stats (mean-shifted -> no cancellation bias).
    n_a = n_b * si.astype(jnp.float32)
    n_tot = n_a + n_b
    mean_a = mean_scr[...]
    delta = mean_b - mean_a
    mean_scr[...] = mean_a + delta * (n_b / n_tot)
    m2_scr[...] = m2_scr[...] + m2_b + delta * delta * (n_a * n_b / n_tot)

    @pl.when(si == pl.num_programs(1) - 1)
    def _():
        inv_g = lax.rsqrt(m2_scr[...] / n_tot + EPS)                                # (1, G)
        mean_c = jnp.dot(mean_scr[...], gt, precision=HIGHEST,
                         preferred_element_type=jnp.float32)                        # (1, C)
        inv_c = jnp.dot(inv_g, gt, precision=HIGHEST,
                        preferred_element_type=jnp.float32)                         # (1, C)
        scale_c = inv_c * gamma_ref[...]
        scale_ref[0] = scale_c
        shift_ref[0] = beta_ref[...] - mean_c * scale_c


# ----------------------------------------------------------------------------------------
# Kernel 2: K^T / V projection to HBM (fully strip-parallel, off the attention crit path).
# ----------------------------------------------------------------------------------------
def _kv_kernel(x_ref, scale_ref, shift_ref, wk_ref, bk_ref, wv_ref, bv_ref,
               kt_ref, v_ref):
    C = x_ref.shape[2]
    xn = (x_ref[0].astype(jnp.float32) * scale_ref[0] + shift_ref[0]).astype(jnp.bfloat16)
    k = jnp.dot(xn, wk_ref[...], preferred_element_type=jnp.float32) + bk_ref[...]
    k = k * (1.0 / math.sqrt(C))       # fold softmax 1/sqrt(d_head) into K, once per image
    # One (TS,C)->(C,TS) transpose per slab here instead of per query strip later.
    kt_ref[0] = jnp.transpose(k).astype(jnp.bfloat16)
    v = jnp.dot(xn, wv_ref[...], preferred_element_type=jnp.float32) + bv_ref[...]
    v_ref[0] = v.astype(jnp.bfloat16)


# ----------------------------------------------------------------------------------------
# Kernel 3: attention over query strips (both grid axes parallel).
# ----------------------------------------------------------------------------------------
def _attn_kernel(x_ref, scale_ref, shift_ref, wq_ref, bq_ref, wo_ref, bo_ref,
                 kt_ref, v_ref, out_ref):
    x_t = x_ref[0].astype(jnp.float32)                                     # (TQ, C)
    xn_t = (x_t * scale_ref[0] + shift_ref[0]).astype(jnp.bfloat16)
    q = jnp.dot(xn_t, wq_ref[...], preferred_element_type=jnp.float32) + bq_ref[...]
    # scores (TQ, S): bf16 operands / f32 accumulation; 1/sqrt(C) already folded into K^T.
    s = jnp.dot(q.astype(jnp.bfloat16), kt_ref[0], preferred_element_type=jnp.float32)
    m = jnp.max(s, axis=-1, keepdims=True)
    p = jnp.exp(s - m)
    l = jnp.sum(p, axis=-1, keepdims=True)
    attn = jnp.dot(p.astype(jnp.bfloat16), v_ref[0], preferred_element_type=jnp.float32)
    attn = attn * pl.reciprocal(l, approx=True)            # EUP reciprocal (free slot)
    o = jnp.dot(attn.astype(jnp.bfloat16), wo_ref[...],
                preferred_element_type=jnp.float32) + bo_ref[...]
    out_ref[0] = (o + x_t).astype(out_ref.dtype)


# ----------------------------------------------------------------------------------------
# Wrapper
# ----------------------------------------------------------------------------------------
def _pick_tile(S, candidates):
    for t in candidates:
        if S % t == 0:
            return t
    # TODO(synk): pad S (with masked score columns) instead of degrading to one giant tile.
    return S


def _vmem_limit(nbytes):
    return int(min(100 * _MIB, max(16 * _MIB, int(1.5 * nbytes) + 4 * _MIB)))


def _weight_spec(shape, single_buffer):
    zeros = (0,) * len(shape)
    if single_buffer:
        # Grid-constant block: one VMEM buffer suffices (no refetch) -> halves its residency.
        return pl.BlockSpec(shape, lambda b, i, _z=zeros: _z, pipeline_mode=pl.Buffered(1))
    return pl.BlockSpec(shape, lambda b, i, _z=zeros: _z)


def _forward(xs, p, TQ, TS, single_buffer):
    B, S, C = xs.shape
    NS = S // TS
    NQ = S // TQ

    const2 = lambda b, i: (0, 0)           # small grid-constant params
    perb3 = lambda b, i: (b, 0, 0)         # per-batch (1,1,C) / full-image blocks

    # ---- 1. GroupNorm statistics (chunked over S) ----
    scale, shift = pl.pallas_call(
        _gn_stats_kernel,
        out_shape=(jax.ShapeDtypeStruct((B, 1, C), jnp.float32),
                   jax.ShapeDtypeStruct((B, 1, C), jnp.float32)),
        grid=(B, NS),
        in_specs=[
            pl.BlockSpec((1, TS, C), lambda b, i: (b, i, 0)),
            pl.BlockSpec((NUM_GROUPS, C), const2),
            pl.BlockSpec((1, C), const2),
            pl.BlockSpec((1, C), const2),
        ],
        out_specs=(pl.BlockSpec((1, 1, C), perb3),
                   pl.BlockSpec((1, 1, C), perb3)),
        scratch_shapes=[pltpu.VMEM((1, NUM_GROUPS), jnp.float32),
                        pltpu.VMEM((1, NUM_GROUPS), jnp.float32)],
        compiler_params=pltpu.CompilerParams(
            dimension_semantics=("parallel", "arbitrary"),
            vmem_limit_bytes=_vmem_limit(4 * TS * C * 4 + (NUM_GROUPS + 8) * C * 4)),
    )(xs, p["gt"], p["gamma"], p["beta"])

    # ---- 2. K^T / V projection to HBM (both axes parallel) ----
    kv_bytes = (2 * TS * C * 4 + 4 * TS * C * 2 + 2 * C * C * 2
                + 6 * TS * C * 4 + 8 * C * 4)
    kt, v = pl.pallas_call(
        _kv_kernel,
        out_shape=(jax.ShapeDtypeStruct((B, C, S), jnp.bfloat16),
                   jax.ShapeDtypeStruct((B, S, C), jnp.bfloat16)),
        grid=(B, NS),
        in_specs=[
            pl.BlockSpec((1, TS, C), lambda b, i: (b, i, 0)),
            pl.BlockSpec((1, 1, C), perb3),
            pl.BlockSpec((1, 1, C), perb3),
            _weight_spec((C, C), single_buffer),
            _weight_spec((1, C), single_buffer),
            _weight_spec((C, C), single_buffer),
            _weight_spec((1, C), single_buffer),
        ],
        out_specs=(pl.BlockSpec((1, C, TS), lambda b, i: (b, 0, i)),
                   pl.BlockSpec((1, TS, C), lambda b, i: (b, i, 0))),
        compiler_params=pltpu.CompilerParams(
            dimension_semantics=("parallel", "parallel"),
            vmem_limit_bytes=_vmem_limit(kv_bytes)),
    )(xs, scale, shift, p["wk"], p["bk"], p["wv"], p["bv"])

    # ---- 3. attention over query strips (both axes parallel; K^T / V VMEM-resident) ----
    attn_bytes = (2 * TQ * C * 4 + 2 * TQ * C * 4 + 8 * C * 4
                  + 2 * C * C * 2 + 4 * C * 4
                  + 4 * S * C * 2
                  + 2 * TQ * S * 4 + 6 * TQ * C * 4)
    cost = pl.CostEstimate(
        flops=2 * B * (2 * S * C * C + 2 * S * S * C),
        transcendentals=B * S * S,
        bytes_accessed=B * (2 * S * C * 4 + 4 * S * C * 2 + 2 * S * C * 4) + 2 * C * C * 2,
    )
    out = pl.pallas_call(
        _attn_kernel,
        out_shape=jax.ShapeDtypeStruct((B, S, C), xs.dtype),
        grid=(B, NQ),
        in_specs=[
            pl.BlockSpec((1, TQ, C), lambda b, i: (b, i, 0)),   # x strip: GN input + residual
            pl.BlockSpec((1, 1, C), perb3),
            pl.BlockSpec((1, 1, C), perb3),
            _weight_spec((C, C), single_buffer),
            _weight_spec((1, C), single_buffer),
            _weight_spec((C, C), single_buffer),
            _weight_spec((1, C), single_buffer),
            pl.BlockSpec((1, C, S), perb3),                     # K^T (bf16), resident per image
            pl.BlockSpec((1, S, C), perb3),                     # V  (bf16), resident per image
        ],
        out_specs=pl.BlockSpec((1, TQ, C), lambda b, i: (b, i, 0)),
        compiler_params=pltpu.CompilerParams(
            dimension_semantics=("parallel", "parallel"),
            vmem_limit_bytes=_vmem_limit(attn_bytes)),
        cost_estimate=cost,
    )(xs, scale, shift, p["wq"], p["bq"], p["wo"], p["bo"], kt, v)
    return out


def vae_attention_block(x, p, *, tq=None, ts=None):
    """x: (B, C, H, W) — PyTorch NCHW. Returns (B, C, H, W)."""
    B, C, H, W = x.shape
    assert C % NUM_GROUPS == 0, "GroupNorm(32, C) needs C % 32 == 0"
    S = H * W
    # TQ=256 amortises the 256x256 MXU on v6e/v7x; pass tq=128 on v5e.
    TQ = tq or _pick_tile(S, (256, 128, 64, 32, 16, 8))
    # K^T is written as (1, C, TS) blocks -> TS must be a multiple of 128 (or == S).
    TS = ts or _pick_tile(S, (512, 256, 128))
    assert S % TQ == 0 and S % TS == 0

    # NCHW -> (B, S, C): channels on the TPU lane axis. Pure layout plumbing outside kernels.
    xs = jnp.transpose(x.reshape(B, C, S), (0, 2, 1))

    pp = dict(p)
    for k in ("wq", "wk", "wv", "wo"):
        pp[k] = p[k].astype(jnp.bfloat16)      # bf16-in / f32-accumulate on the MXU

    try:
        out = _forward(xs, pp, TQ, TS, single_buffer=True)
    except Exception:
        # Fallback for Pallas versions that reject pl.Buffered(1) on grid-constant blocks.
        out = _forward(xs, pp, TQ, TS, single_buffer=False)

    return jnp.transpose(out, (0, 2, 1)).reshape(B, C, H, W)


# ----------------------------------------------------------------------------------------
# Parameters / reference / test
# ----------------------------------------------------------------------------------------
def _group_matrix(C):
    g = C // NUM_GROUPS
    return (jnp.arange(C)[None, :] // g == jnp.arange(NUM_GROUPS)[:, None]).astype(jnp.float32)


def _init_params(key, C):
    ks = jax.random.split(key, 10)
    w = 0.05
    # Wq/Wk/Wv are the column chunks of PyTorch's in_proj.weight.T; Wo is out_proj.weight.T
    # (PyTorch Linear stores (out, in)); loading a checkpoint is a transpose outside the kernel.
    return {
        "gt": _group_matrix(C),
        "gamma": (1.0 + 0.1 * jax.random.normal(ks[0], (C,))).reshape(1, C),
        "beta": (0.05 * jax.random.normal(ks[1], (C,))).reshape(1, C),
        "wq": w * jax.random.normal(ks[2], (C, C)),
        "bq": (w * jax.random.normal(ks[3], (C,))).reshape(1, C),
        "wk": w * jax.random.normal(ks[4], (C, C)),
        "bk": (w * jax.random.normal(ks[5], (C,))).reshape(1, C),
        "wv": w * jax.random.normal(ks[6], (C, C)),
        "bv": (w * jax.random.normal(ks[7], (C,))).reshape(1, C),
        "wo": w * jax.random.normal(ks[8], (C, C)),
        "bo": (w * jax.random.normal(ks[9], (C,))).reshape(1, C),
    }


def _reference(x, p):
    """Pure-JAX f32 reference of the PyTorch forward (NCHW in / NCHW out)."""
    B, C, H, W = x.shape
    S = H * W
    g = C // NUM_GROUPS
    xr = x.reshape(B, NUM_GROUPS, g, H, W)
    mean = xr.mean(axis=(2, 3, 4), keepdims=True)
    var = ((xr - mean) ** 2).mean(axis=(2, 3, 4), keepdims=True)
    xn = ((xr - mean) / jnp.sqrt(var + EPS)).reshape(B, C, H, W)
    xn = xn * p["gamma"].reshape(1, C, 1, 1) + p["beta"].reshape(1, C, 1, 1)
    xs = jnp.transpose(xn.reshape(B, C, S), (0, 2, 1))                       # (B, S, C)

    q = jnp.einsum("bsc,cd->bsd", xs, p["wq"], precision=HIGHEST) + p["bq"].reshape(1, 1, C)
    k = jnp.einsum("bsc,cd->bsd", xs, p["wk"], precision=HIGHEST) + p["bk"].reshape(1, 1, C)
    v = jnp.einsum("bsc,cd->bsd", xs, p["wv"], precision=HIGHEST) + p["bv"].reshape(1, 1, C)
    s = jnp.einsum("bqc,bkc->bqk", q, k, precision=HIGHEST) / math.sqrt(C)
    a = jax.nn.softmax(s, axis=-1)
    o = jnp.einsum("bqk,bkc->bqc", a, v, precision=HIGHEST)
    o = jnp.einsum("bsc,cd->bsd", o, p["wo"], precision=HIGHEST) + p["bo"].reshape(1, 1, C)
    return jnp.transpose(o, (0, 2, 1)).reshape(B, C, H, W) + x


if __name__ == "__main__":
    # GroupNorm(32, C) needs C % 32 == 0; C=128 keeps every store lane-dense.
    # tq=ts=128 with S=256 exercises the multi-slab stats combine and the parallel strip sweep.
    B, C, H, W = 2, 128, 16, 16

    key = jax.random.PRNGKey(0)
    kx, kp = jax.random.split(key)
    x = jax.random.normal(kx, (B, C, H, W), dtype=jnp.float32)
    params = _init_params(kp, C)

    out = jax.block_until_ready(vae_attention_block(x, params, tq=128, ts=128))
    ref = jax.block_until_ready(_reference(x, params))

    assert out.shape == (B, C, H, W), out.shape
    max_err = float(jnp.max(jnp.abs(out - ref)))
    assert jnp.allclose(out, ref, atol=2e-2, rtol=2e-2), max_err
    print("KERNEL_OK")
</pallas_src>

<mosaic_0001>
module attributes {stable_mosaic.version = 11 : i64} {
  func.func @_gn_stats_kernel(%arg0: i32, %arg1: i32, %arg2: memref<1x128x128xf32, #tpu.memory_space<vmem>>, %arg3: memref<32x128xf32, #tpu.memory_space<vmem>>, %arg4: memref<1x128xf32, #tpu.memory_space<vmem>>, %arg5: memref<1x128xf32, #tpu.memory_space<vmem>>, %arg6: memref<1x1x128xf32, #tpu.memory_space<vmem>>, %arg7: memref<1x1x128xf32, #tpu.memory_space<vmem>>, %arg8: memref<1x32xf32, #tpu.memory_space<vmem>>, %arg9: memref<1x32xf32, #tpu.memory_space<vmem>>) attributes {dimension_semantics = [#tpu.dimension_semantics<parallel>, #tpu.dimension_semantics<arbitrary>], iteration_bounds = array<i64: 2, 2>, scalar_prefetch = 0 : i64, scratch_operands = 2 : i64, tpu.core_type = #tpu.core_type<tc>, window_params = [{transform_indices = @transform_0, window_bounds = array<i64: 1, 128, 128>}, {pipeline_mode = #tpu.pipeline_mode<synchronous>, transform_indices = @transform_1, window_bounds = array<i64: 32, 128>}, {pipeline_mode = #tpu.pipeline_mode<synchronous>, transform_indices = @transform_2, window_bounds = array<i64: 1, 128>}, {pipeline_mode = #tpu.pipeline_mode<synchronous>, transform_indices = @transform_3, window_bounds = array<i64: 1, 128>}, {transform_indices = @transform_4, window_bounds = array<i64: 1, 1, 128>}, {transform_indices = @transform_5, window_bounds = array<i64: 1, 1, 128>}]} {
    %c0_i32 = arith.constant 0 : i32
    %0 = arith.cmpi eq, %arg1, %c0_i32 : i32
    %1 = arith.extui %0 : i1 to i32
    %c0_i32_0 = arith.constant 0 : i32
    %2 = arith.cmpi ne, %1, %c0_i32_0 : i32
    scf.if %2 {
      %cst_23 = arith.constant 0.000000e+00 : f32
      %40 = vector.broadcast %cst_23 : f32 to vector<1x32xf32>
      %c0_24 = arith.constant 0 : index
      %c0_25 = arith.constant 0 : index
      %41 = vector.load %arg8[%c0_24, %c0_25] : memref<1x32xf32, #tpu.memory_space<vmem>>, vector<1x32xf32>
      tpu.vector_store %arg8[%c0_24, %c0_25], %40 {strides = array<i32>} : memref<1x32xf32, #tpu.memory_space<vmem>>, vector<1x32xf32>,
      %cst_26 = arith.constant 0.000000e+00 : f32
      %42 = vector.broadcast %cst_26 : f32 to vector<1x32xf32>
      %c0_27 = arith.constant 0 : index
      %c0_28 = arith.constant 0 : index
      %43 = vector.load %arg9[%c0_27, %c0_28] : memref<1x32xf32, #tpu.memory_space<vmem>>, vector<1x32xf32>
      tpu.vector_store %arg9[%c0_27, %c0_28], %42 {strides = array<i32>} : memref<1x32xf32, #tpu.memory_space<vmem>>, vector<1x32xf32>,
    } else {
    }
    %c0 = arith.constant 0 : index
    %c0_1 = arith.constant 0 : index
    %3 = vector.load %arg3[%c0, %c0_1] : memref<32x128xf32, #tpu.memory_space<vmem>>, vector<32x128xf32>
    %c0_2 = arith.constant 0 : index
    %c0_3 = arith.constant 0 : index
    %c0_4 = arith.constant 0 : index
    %4 = vector.load %arg2[%c0_2, %c0_3, %c0_4] : memref<1x128x128xf32, #tpu.memory_space<vmem>>, vector<1x128x128xf32>
    %5 = vector.shape_cast %4 : vector<1x128x128xf32> to vector<128x128xf32>
    %cst = arith.constant dense<0.000000e+00> : vector<128xf32>
    %6 = vector.multi_reduction <add>, %5, %cst [0] : vector<128x128xf32> to vector<128xf32>
    %7 = vector.shape_cast %6 : vector<128xf32> to vector<1x128xf32>
    %cst_5 = arith.constant dense<0.000000e+00> : vector<1x32xf32>
    %8 = tpu.matmul %7, %3, %cst_5 {dimension_numbers = #tpu.dot_dimension_numbers<[1], [1], [0], [0], [0, 0, 1, 0], [], []>, precision = #tpu.contract_precision<fp32>} : vector<1x128xf32>, vector<32x128xf32>, vector<1x32xf32> -> vector<1x32xf32>
    %cst_6 = arith.constant 5.120000e+02 : f32
    %9 = vector.broadcast %cst_6 : f32 to vector<1x32xf32>
    %10 = arith.divf %8, %9 : vector<1x32xf32>
    %cst_7 = arith.constant dense<0.000000e+00> : vector<1x128xf32>
    %11 = tpu.matmul %10, %3, %cst_7 {dimension_numbers = #tpu.dot_dimension_numbers<[1], [0], [0], [1], [0, 0, 1, 1], [], []>, precision = #tpu.contract_precision<fp32>} : vector<1x32xf32>, vector<32x128xf32>, vector<1x128xf32> -> vector<1x128xf32>
    %12 = vector.broadcast %11 : vector<1x128xf32> to vector<128x128xf32>
    %13 = arith.subf %5, %12 : vector<128x128xf32>
    %14 = arith.mulf %13, %13 : vector<128x128xf32>
    %cst_8 = arith.constant dense<0.000000e+00> : vector<128xf32>
    %15 = vector.multi_reduction <add>, %14, %cst_8 [0] : vector<128x128xf32> to vector<128xf32>
    %16 = vector.shape_cast %15 : vector<128xf32> to vector<1x128xf32>
    %cst_9 = arith.constant dense<0.000000e+00> : vector<1x32xf32>
    %17 = tpu.matmul %16, %3, %cst_9 {dimension_numbers = #tpu.dot_dimension_numbers<[1], [1], [0], [0], [0, 0, 1, 0], [], []>, precision = #tpu.contract_precision<fp32>} : vector<1x128xf32>, vector<32x128xf32>, vector<1x32xf32> -> vector<1x32xf32>
    %18 = arith.sitofp %arg1 : i32 to f32
    %cst_10 = arith.constant 5.120000e+02 : f32
    %19 = arith.mulf %cst_10, %18 : f32
    %cst_11 = arith.constant 5.120000e+02 : f32
    %20 = arith.addf %19, %cst_11 : f32
    %c0_12 = arith.constant 0 : index
    %c0_13 = arith.constant 0 : index
    %21 = vector.load %arg8[%c0_12, %c0_13] : memref<1x32xf32, #tpu.memory_space<vmem>>, vector<1x32xf32>
    %22 = arith.subf %10, %21 : vector<1x32xf32>
    %cst_14 = arith.constant 5.120000e+02 : f32
    %23 = arith.divf %cst_14, %20 : f32
    %24 = vector.broadcast %23 : f32 to vector<1x32xf32>
    %25 = arith.mulf %22, %24 : vector<1x32xf32>
    %26 = arith.addf %21, %25 : vector<1x32xf32>
    %c0_15 = arith.constant 0 : index
    %c0_16 = arith.constant 0 : index
    %27 = vector.load %arg8[%c0_15, %c0_16] : memref<1x32xf32, #tpu.memory_space<vmem>>, vector<1x32xf32>
    tpu.vector_store %arg8[%c0_15, %c0_16], %26 {strides = array<i32>} : memref<1x32xf32, #tpu.memory_space<vmem>>, vector<1x32xf32>,
    %c0_17 = arith.constant 0 : index
    %c0_18 = arith.constant 0 : index
    %28 = vector.load %arg9[%c0_17, %c0_18] : memref<1x32xf32, #tpu.memory_space<vmem>>, vector<1x32xf32>
    %29 = arith.addf %28, %17 : vector<1x32xf32>
    %30 = arith.mulf %22, %22 : vector<1x32xf32>
    %cst_19 = arith.constant 5.120000e+02 : f32
    %31 = arith.mulf %19, %cst_19 : f32
    %32 = arith.divf %31, %20 : f32
    %33 = vector.broadcast %32 : f32 to vector<1x32xf32>
    %34 = arith.mulf %30, %33 : vector<1x32xf32>
    %35 = arith.addf %29, %34 : vector<1x32xf32>
    %c0_20 = arith.constant 0 : index
    %c0_21 = arith.constant 0 : index
    %36 = vector.load %arg9[%c0_20, %c0_21] : memref<1x32xf32, #tpu.memory_space<vmem>>, vector<1x32xf32>
    tpu.vector_store %arg9[%c0_20, %c0_21], %35 {strides = array<i32>} : memref<1x32xf32, #tpu.memory_space<vmem>>, vector<1x32xf32>,
    %c1_i32 = arith.constant 1 : i32
    %37 = arith.cmpi eq, %arg1, %c1_i32 : i32
    %38 = arith.extui %37 : i1 to i32
    %c0_i32_22 = arith.constant 0 : i32
    %39 = arith.cmpi ne, %38, %c0_i32_22 : i32
    scf.if %39 {
      %c0_23 = arith.constant 0 : index
      %c0_24 = arith.constant 0 : index
      %40 = vector.load %arg9[%c0_23, %c0_24] : memref<1x32xf32, #tpu.memory_space<vmem>>, vector<1x32xf32>
      %41 = vector.broadcast %20 : f32 to vector<1x32xf32>
      %42 = arith.divf %40, %41 : vector<1x32xf32>
      %cst_25 = arith.constant 9.99999974E-6 : f32
      %43 = vector.broadcast %cst_25 : f32 to vector<1x32xf32>
      %44 = arith.addf %42, %43 : vector<1x32xf32>
      %45 = math.rsqrt %44 : vector<1x32xf32>
      %c0_26 = arith.constant 0 : index
      %c0_27 = arith.constant 0 : index
      %46 = vector.load %arg8[%c0_26, %c0_27] : memref<1x32xf32, #tpu.memory_space<vmem>>, vector<1x32xf32>
      %cst_28 = arith.constant dense<0.000000e+00> : vector<1x128xf32>
      %47 = tpu.matmul %46, %3, %cst_28 {dimension_numbers = #tpu.dot_dimension_numbers<[1], [0], [0], [1], [0, 0, 1, 1], [], []>, precision = #tpu.contract_precision<fp32>} : vector<1x32xf32>, vector<32x128xf32>, vector<1x128xf32> -> vector<1x128xf32>
      %cst_29 = arith.constant dense<0.000000e+00> : vector<1x128xf32>
      %48 = tpu.matmul %45, %3, %cst_29 {dimension_numbers = #tpu.dot_dimension_numbers<[1], [0], [0], [1], [0, 0, 1, 1], [], []>, precision = #tpu.contract_precision<fp32>} : vector<1x32xf32>, vector<32x128xf32>, vector<1x128xf32> -> vector<1x128xf32>
      %c0_30 = arith.constant 0 : index
      %c0_31 = arith.constant 0 : index
      %49 = vector.load %arg4[%c0_30, %c0_31] : memref<1x128xf32, #tpu.memory_space<vmem>>, vector<1x128xf32>
      %50 = arith.mulf %48, %49 : vector<1x128xf32>
      %c0_32 = arith.constant 0 : index
      %c0_33 = arith.constant 0 : index
      %c0_34 = arith.constant 0 : index
      %51 = vector.load %arg6[%c0_32, %c0_33, %c0_34] : memref<1x1x128xf32, #tpu.memory_space<vmem>>, vector<1x1x128xf32>
      %52 = vector.shape_cast %51 : vector<1x1x128xf32> to vector<1x128xf32>
      %53 = vector.shape_cast %50 : vector<1x128xf32> to vector<1x1x128xf32>
      tpu.vector_store %arg6[%c0_32, %c0_33, %c0_34], %53 {strides = array<i32>} : memref<1x1x128xf32, #tpu.memory_space<vmem>>, vector<1x1x128xf32>,
      %c0_35 = arith.constant 0 : index
      %c0_36 = arith.constant 0 : index
      %54 = vector.load %arg5[%c0_35, %c0_36] : memref<1x128xf32, #tpu.memory_space<vmem>>, vector<1x128xf32>
      %55 = arith.mulf %47, %50 : vector<1x128xf32>
      %56 = arith.subf %54, %55 : vector<1x128xf32>
      %c0_37 = arith.constant 0 : index
      %c0_38 = arith.constant 0 : index
      %c0_39 = arith.constant 0 : index
      %57 = vector.load %arg7[%c0_37, %c0_38, %c0_39] : memref<1x1x128xf32, #tpu.memory_space<vmem>>, vector<1x1x128xf32>
      %58 = vector.shape_cast %57 : vector<1x1x128xf32> to vector<1x128xf32>
      %59 = vector.shape_cast %56 : vector<1x128xf32> to vector<1x1x128xf32>
      tpu.vector_store %arg7[%c0_37, %c0_38, %c0_39], %59 {strides = array<i32>} : memref<1x1x128xf32, #tpu.memory_space<vmem>>, vector<1x1x128xf32>,
    } else {
    }
    return
  }
  func.func @transform_0(%arg0: i32, %arg1: i32) -> (i32, i32, i32) {
    %c0_i32 = arith.constant 0 : i32
    %c0_i32_0 = arith.constant 0 : i32
    return %arg0, %arg1, %c0_i32 : i32, i32, i32
  }
  func.func @transform_1(%arg0: i32, %arg1: i32) -> (i32, i32) {
    %c0_i32 = arith.constant 0 : i32
    %c0_i32_0 = arith.constant 0 : i32
    %c0_i32_1 = arith.constant 0 : i32
    return %c0_i32, %c0_i32_0 : i32, i32
  }
  func.func @transform_2(%arg0: i32, %arg1: i32) -> (i32, i32) {
    %c0_i32 = arith.constant 0 : i32
    %c0_i32_0 = arith.constant 0 : i32
    %c0_i32_1 = arith.constant 0 : i32
    return %c0_i32, %c0_i32_0 : i32, i32
  }
  func.func @transform_3(%arg0: i32, %arg1: i32) -> (i32, i32) {
    %c0_i32 = arith.constant 0 : i32
    %c0_i32_0 = arith.constant 0 : i32
    %c0_i32_1 = arith.constant 0 : i32
    return %c0_i32, %c0_i32_0 : i32, i32
  }
  func.func @transform_4(%arg0: i32, %arg1: i32) -> (i32, i32, i32) {
    %c0_i32 = arith.constant 0 : i32
    %c0_i32_0 = arith.constant 0 : i32
    %c0_i32_1 = arith.constant 0 : i32
    return %arg0, %c0_i32, %c0_i32_0 : i32, i32, i32
  }
  func.func @transform_5(%arg0: i32, %arg1: i32) -> (i32, i32, i32) {
    %c0_i32 = arith.constant 0 : i32
    %c0_i32_0 = arith.constant 0 : i32
    %c0_i32_1 = arith.constant 0 : i32
    return %arg0, %c0_i32, %c0_i32_0 : i32, i32, i32
  }
}

module attributes {stable_mosaic.version = 11 : i64} {
  func.func @_gn_stats_kernel(%arg0: i32, %arg1: i32, %arg2: memref<1x128x128xf32, #tpu.memory_space<vmem>>, %arg3: memref<32x128xf32, #tpu.memory_space<vmem>>, %arg4: memref<1x128xf32, #tpu.memory_space<vmem>>, %arg5: memref<1x128xf32, #tpu.memory_space<vmem>>, %arg6: memref<1x1x128xf32, #tpu.memory_space<vmem>>, %arg7: memref<1x1x128xf32, #tpu.memory_space<vmem>>, %arg8: memref<1x32xf32, #tpu.memory_space<vmem>>, %arg9: memref<1x32xf32, #tpu.memory_space<vmem>>) attributes {dimension_semantics = [#tpu.dimension_semantics<parallel>, #tpu.dimension_semantics<arbitrary>], iteration_bounds = array<i64: 2, 2>, scalar_prefetch = 0 : i64, scratch_operands = 2 : i64, tpu.core_type = #tpu.core_type<tc>, window_params = [{transform_indices = @transform_0, window_bounds = array<i64: 1, 128, 128>}, {pipeline_mode = #tpu.pipeline_mode<synchronous>, transform_indices = @transform_1, window_bounds = array<i64: 32, 128>}, {pipeline_mode = #tpu.pipeline_mode<synchronous>, transform_indices = @transform_2, window_bounds = array<i64: 1, 128>}, {pipeline_mode = #tpu.pipeline_mode<synchronous>, transform_indices = @transform_3, window_bounds = array<i64: 1, 128>}, {transform_indices = @transform_4, window_bounds = array<i64: 1, 1, 128>}, {transform_indices = @transform_5, window_bounds = array<i64: 1, 1, 128>}]} {
    %c0_i32 = arith.constant 0 : i32
    %0 = arith.cmpi eq, %arg1, %c0_i32 : i32
    %1 = arith.extui %0 : i1 to i32
    %c0_i32_0 = arith.constant 0 : i32
    %2 = arith.cmpi ne, %1, %c0_i32_0 : i32
    scf.if %2 {
      %cst_23 = arith.constant 0.000000e+00 : f32
      %40 = vector.broadcast %cst_23 : f32 to vector<1x32xf32>
      %c0_24 = arith.constant 0 : index
      %c0_25 = arith.constant 0 : index
      %41 = vector.load %arg8[%c0_24, %c0_25] : memref<1x32xf32, #tpu.memory_space<vmem>>, vector<1x32xf32>
      tpu.vector_store %arg8[%c0_24, %c0_25], %40 {strides = array<i32>} : memref<1x32xf32, #tpu.memory_space<vmem>>, vector<1x32xf32>,
      %cst_26 = arith.constant 0.000000e+00 : f32
      %42 = vector.broadcast %cst_26 : f32 to vector<1x32xf32>
      %c0_27 = arith.constant 0 : index
      %c0_28 = arith.constant 0 : index
      %43 = vector.load %arg9[%c0_27, %c0_28] : memref<1x32xf32, #tpu.memory_space<vmem>>, vector<1x32xf32>
      tpu.vector_store %arg9[%c0_27, %c0_28], %42 {strides = array<i32>} : memref<1x32xf32, #tpu.memory_space<vmem>>, vector<1x32xf32>,
    } else {
    }
    %c0 = arith.constant 0 : index
    %c0_1 = arith.constant 0 : index
    %3 = vector.load %arg3[%c0, %c0_1] : memref<32x128xf32, #tpu.memory_space<vmem>>, vector<32x128xf32>
    %c0_2 = arith.constant 0 : index
    %c0_3 = arith.constant 0 : index
    %c0_4 = arith.constant 0 : index
    %4 = vector.load %arg2[%c0_2, %c0_3, %c0_4] : memref<1x128x128xf32, #tpu.memory_space<vmem>>, vector<1x128x128xf32>
    %5 = vector.shape_cast %4 : vector<1x128x128xf32> to vector<128x128xf32>
    %cst = arith.constant dense<0.000000e+00> : vector<128xf32>
    %6 = vector.multi_reduction <add>, %5, %cst [0] : vector<128x128xf32> to vector<128xf32>
    %7 = vector.shape_cast %6 : vector<128xf32> to vector<1x128xf32>
    %cst_5 = arith.constant dense<0.000000e+00> : vector<1x32xf32>
    %8 = tpu.matmul %7, %3, %cst_5 {dimension_numbers = #tpu.dot_dimension_numbers<[1], [1], [0], [0], [0, 0, 1, 0], [], []>, precision = #tpu.contract_precision<fp32>} : vector<1x128xf32>, vector<32x128xf32>, vector<1x32xf32> -> vector<1x32xf32>
    %cst_6 = arith.constant 5.120000e+02 : f32
    %9 = vector.broadcast %cst_6 : f32 to vector<1x32xf32>
    %10 = arith.divf %8, %9 : vector<1x32xf32>
    %cst_7 = arith.constant dense<0.000000e+00> : vector<1x128xf32>
    %11 = tpu.matmul %10, %3, %cst_7 {dimension_numbers = #tpu.dot_dimension_numbers<[1], [0], [0], [1], [0, 0, 1, 1], [], []>, precision = #tpu.contract_precision<fp32>} : vector<1x32xf32>, vector<32x128xf32>, vector<1x128xf32> -> vector<1x128xf32>
    %12 = vector.broadcast %11 : vector<1x128xf32> to vector<128x128xf32>
    %13 = arith.subf %5, %12 : vector<128x128xf32>
    %14 = arith.mulf %13, %13 : vector<128x128xf32>
    %cst_8 = arith.constant dense<0.000000e+00> : vector<128xf32>
    %15 = vector.multi_reduction <add>, %14, %cst_8 [0] : vector<128x128xf32> to vector<128xf32>
    %16 = vector.shape_cast %15 : vector<128xf32> to vector<1x128xf32>
    %cst_9 = arith.constant dense<0.000000e+00> : vector<1x32xf32>
    %17 = tpu.matmul %16, %3, %cst_9 {dimension_numbers = #tpu.dot_dimension_numbers<[1], [1], [0], [0], [0, 0, 1, 0], [], []>, precision = #tpu.contract_precision<fp32>} : vector<1x128xf32>, vector<32x128xf32>, vector<1x32xf32> -> vector<1x32xf32>
    %18 = arith.sitofp %arg1 : i32 to f32
    %cst_10 = arith.constant 5.120000e+02 : f32
    %19 = arith.mulf %cst_10, %18 : f32
    %cst_11 = arith.constant 5.120000e+02 : f32
    %20 = arith.addf %19, %cst_11 : f32
    %c0_12 = arith.constant 0 : index
    %c0_13 = arith.constant 0 : index
    %21 = vector.load %arg8[%c0_12, %c0_13] : memref<1x32xf32, #tpu.memory_space<vmem>>, vector<1x32xf32>
    %22 = arith.subf %10, %21 : vector<1x32xf32>
    %cst_14 = arith.constant 5.120000e+02 : f32
    %23 = arith.divf %cst_14, %20 : f32
    %24 = vector.broadcast %23 : f32 to vector<1x32xf32>
    %25 = arith.mulf %22, %24 : vector<1x32xf32>
    %26 = arith.addf %21, %25 : vector<1x32xf32>
    %c0_15 = arith.constant 0 : index
    %c0_16 = arith.constant 0 : index
    %27 = vector.load %arg8[%c0_15, %c0_16] : memref<1x32xf32, #tpu.memory_space<vmem>>, vector<1x32xf32>
    tpu.vector_store %arg8[%c0_15, %c0_16], %26 {strides = array<i32>} : memref<1x32xf32, #tpu.memory_space<vmem>>, vector<1x32xf32>,
    %c0_17 = arith.constant 0 : index
    %c0_18 = arith.constant 0 : index
    %28 = vector.load %arg9[%c0_17, %c0_18] : memref<1x32xf32, #tpu.memory_space<vmem>>, vector<1x32xf32>
    %29 = arith.addf %28, %17 : vector<1x32xf32>
    %30 = arith.mulf %22, %22 : vector<1x32xf32>
    %cst_19 = arith.constant 5.120000e+02 : f32
    %31 = arith.mulf %19, %cst_19 : f32
    %32 = arith.divf %31, %20 : f32
    %33 = vector.broadcast %32 : f32 to vector<1x32xf32>
    %34 = arith.mulf %30, %33 : vector<1x32xf32>
    %35 = arith.addf %29, %34 : vector<1x32xf32>
    %c0_20 = arith.constant 0 : index
    %c0_21 = arith.constant 0 : index
    %36 = vector.load %arg9[%c0_20, %c0_21] : memref<1x32xf32, #tpu.memory_space<vmem>>, vector<1x32xf32>
    tpu.vector_store %arg9[%c0_20, %c0_21], %35 {strides = array<i32>} : memref<1x32xf32, #tpu.memory_space<vmem>>, vector<1x32xf32>,
    %c1_i32 = arith.constant 1 : i32
    %37 = arith.cmpi eq, %arg1, %c1_i32 : i32
    %38 = arith.extui %37 : i1 to i32
    %c0_i32_22 = arith.constant 0 : i32
    %39 = arith.cmpi ne, %38, %c0_i32_22 : i32
    scf.if %39 {
      %c0_23 = arith.constant 0 : index
      %c0_24 = arith.constant 0 : index
      %40 = vector.load %arg9[%c0_23, %c0_24] : memref<1x32xf32, #tpu.memory_space<vmem>>, vector<1x32xf32>
      %41 = vector.broadcast %20 : f32 to vector<1x32xf32>
      %42 = arith.divf %40, %41 : vector<1x32xf32>
      %cst_25 = arith.constant 9.99999974E-6 : f32
      %43 = vector.broadcast %cst_25 : f32 to vector<1x32xf32>
      %44 = arith.addf %42, %43 : vector<1x32xf32>
      %45 = math.rsqrt %44 : vector<1x32xf32>
      %c0_26 = arith.constant 0 : index
      %c0_27 = arith.constant 0 : index
      %46 = vector.load %arg8[%c0_26, %c0_27] : memref<1x32xf32, #tpu.memory_space<vmem>>, vector<1x32xf32>
      %cst_28 = arith.constant dense<0.000000e+00> : vector<1x128xf32>
      %47 = tpu.matmul %46, %3, %cst_28 {dimension_numbers = #tpu.dot_dimension_numbers<[1], [0], [0], [1], [0, 0, 1, 1], [], []>, precision = #tpu.contract_precision<fp32>} : vector<1x32xf32>, vector<32x128xf32>, vector<1x128xf32> -> vector<1x128xf32>
      %cst_29 = arith.constant dense<0.000000e+00> : vector<1x128xf32>
      %48 = tpu.matmul %45, %3, %cst_29 {dimension_numbers = #tpu.dot_dimension_numbers<[1], [0], [0], [1], [0, 0, 1, 1], [], []>, precision = #tpu.contract_precision<fp32>} : vector<1x32xf32>, vector<32x128xf32>, vector<1x128xf32> -> vector<1x128xf32>
      %c0_30 = arith.constant 0 : index
      %c0_31 = arith.constant 0 : index
      %49 = vector.load %arg4[%c0_30, %c0_31] : memref<1x128xf32, #tpu.memory_space<vmem>>, vector<1x128xf32>
      %50 = arith.mulf %48, %49 : vector<1x128xf32>
      %c0_32 = arith.constant 0 : index
      %c0_33 = arith.constant 0 : index
      %c0_34 = arith.constant 0 : index
      %51 = vector.load %arg6[%c0_32, %c0_33, %c0_34] : memref<1x1x128xf32, #tpu.memory_space<vmem>>, vector<1x1x128xf32>
      %52 = vector.shape_cast %51 : vector<1x1x128xf32> to vector<1x128xf32>
      %53 = vector.shape_cast %50 : vector<1x128xf32> to vector<1x1x128xf32>
      tpu.vector_store %arg6[%c0_32, %c0_33, %c0_34], %53 {strides = array<i32>} : memref<1x1x128xf32, #tpu.memory_space<vmem>>, vector<1x1x128xf32>,
      %c0_35 = arith.constant 0 : index
      %c0_36 = arith.constant 0 : index
      %54 = vector.load %arg5[%c0_35, %c0_36] : memref<1x128xf32, #tpu.memory_space<vmem>>, vector<1x128xf32>
      %55 = arith.mulf %47, %50 : vector<1x128xf32>
      %56 = arith.subf %54, %55 : vector<1x128xf32>
      %c0_37 = arith.constant 0 : index
      %c0_38 = arith.constant 0 : index
      %c0_39 = arith.constant 0 : index
      %57 = vector.load %arg7[%c0_37, %c0_38, %c0_39] : memref<1x1x128xf32, #tpu.memory_space<vmem>>, vector<1x1x128xf32>
      %58 = vector.shape_cast %57 : vector<1x1x128xf32> to vector<1x128xf32>
      %59 = vector.shape_cast %56 : vector<1x128xf32> to vector<1x1x128xf32>
      tpu.vector_store %arg7[%c0_37, %c0_38, %c0_39], %59 {strides = array<i32>} : memref<1x1x128xf32, #tpu.memory_space<vmem>>, vector<1x1x128xf32>,
    } else {
    }
    return
  }
  func.func @transform_0(%arg0: i32, %arg1: i32) -> (i32, i32, i32) {
    %c0_i32 = arith.constant 0 : i32
    %c0_i32_0 = arith.constant 0 : i32
    return %arg0, %arg1, %c0_i32 : i32, i32, i32
  }
  func.func @transform_1(%arg0: i32, %arg1: i32) -> (i32, i32) {
    %c0_i32 = arith.constant 0 : i32
    %c0_i32_0 = arith.constant 0 : i32
    %c0_i32_1 = arith.constant 0 : i32
    return %c0_i32, %c0_i32_0 : i32, i32
  }
  func.func @transform_2(%arg0: i32, %arg1: i32) -> (i32, i32) {
    %c0_i32 = arith.constant 0 : i32
    %c0_i32_0 = arith.constant 0 : i32
    %c0_i32_1 = arith.constant 0 : i32
    return %c0_i32, %c0_i32_0 : i32, i32
  }
  func.func @transform_3(%arg0: i32, %arg1: i32) -> (i32, i32) {
    %c0_i32 = arith.constant 0 : i32
    %c0_i32_0 = arith.constant 0 : i32
    %c0_i32_1 = arith.constant 0 : i32
    return %c0_i32, %c0_i32_0 : i32, i32
  }
  func.func @transform_4(%arg0: i32, %arg1: i32) -> (i32, i32, i32) {
    %c0_i32 = arith.constant 0 : i32
    %c0_i32_0 = arith.constant 0 : i32
    %c0_i32_1 = arith.constant 0 : i32
    return %arg0, %c0_i32, %c0_i32_0 : i32, i32, i32
  }
  func.func @transform_5(%arg0: i32, %arg1: i32) -> (i32, i32, i32) {
    %c0_i32 = arith.constant 0 : i32
    %c0_i32_0 = arith.constant 0 : i32
    %c0_i32_1 = arith.constant 0 : i32
    return %arg0, %c0_i32, %c0_i32_0 : i32, i32, i32
  }
}

</mosaic_0001>

<llo_original>
// kernel: tpu_custom_call.1
$region0: #{tpu_custom_call.1}
  #allocation0 [shape = 'u32[]', space=smem, size = 0x4, offset = 0x4, fixed_abs, tag = 'smem constant byte address 0x4 - core index']
  #allocation1 [shape = 'u32[144,128]{1,0:T(1,128)}', space=vmem, size = 0x12000, scoped, tag = 'internal scratch']
  #allocation2 [shape = 'f32[1,32]{1,0:T(1,128)}', space=vmem, size = 0x200, scoped, tag = 'scratch operand']
  #allocation3 [shape = 'f32[1,32]{1,0:T(1,128)}', space=vmem, size = 0x200, scoped, tag = 'scratch operand']
  %s0 = inlined_call_operand.hbm [shape: f32[2,256,128], index: 0, kind: input, shape index: {}]
  %s1 = inlined_call_operand.hbm [shape: f32[32,128], index: 1, kind: input, shape index: {}]
  %s2 = inlined_call_operand.vmem [shape: f32[1,128], index: 2, kind: input, shape index: {}]
  %s3 = inlined_call_operand.vmem [shape: f32[1,128], index: 3, kind: input, shape index: {}]
  %s4 = inlined_call_operand.hbm [shape: f32[2,1,128], index: 4, kind: output, shape index: {0}]
  %s5 = inlined_call_operand.hbm [shape: f32[2,1,128], index: 5, kind: output, shape index: {1}]
  %6 = xla_tuple %s4, %s5
  %s7 = sld [smem:[#allocation0]]
  $region73: #{tpu_custom_call.1} parent=0
    _
  %s9 = ssub.s32 1, %s7
  %s10 = scalar_select 0, %s9, %s7
  $region1: #{tpu_custom_call.1} parent=0
    #allocation4 [shape = 'u8[131072]{0}', space=vmem, size = 0x20000, scoped, tag = 'input window, operand 0']
    #allocation5 [shape = 's32[2]{0}', space=sflag, size = 0x8, scoped, tag = 'scoped memory for tpu_custom_call.1']
    #allocation6 [shape = 's32[2]{0}', space=sflag, size = 0x8, scoped, tag = 'scoped memory for tpu_custom_call.1']
    #allocation7 [shape = 'u8[16384]{0}', space=vmem, size = 0x4000, scoped, tag = 'input window, operand 1, single buffered']
    #allocation8 [shape = 's32[1]{0}', space=sflag, size = 0x4, scoped, tag = 'scoped memory for tpu_custom_call.1']
    #allocation9 [shape = 'u8[1024]{0}', space=vmem, size = 0x400, scoped, tag = 'output window, operand 0']
    #allocation10 [shape = 'u8[1024]{0}', space=vmem, size = 0x400, scoped, tag = 'output window, operand 1']
    #allocation11 [shape = 's32[2]{0}', space=sflag, size = 0x8, scoped, tag = 'scoped memory for tpu_custom_call.1']
    %11 = vsyncpa [#allocation5], 0
    %s12 = scalar_lea.sflag [#allocation5], 1
    %13 = vsyncpa %s12, 0
    %14 = vsyncpa [#allocation8], 0
    %15 = vsyncpa [#allocation6], 0
    %s16 = scalar_lea.sflag [#allocation6], 1
    %17 = vsyncpa %s16, 0
    %18 = vsyncpa [#allocation11], 0
    %s19 = scalar_lea.sflag [#allocation11], 1
    %20 = vsyncpa %s19, 0
    loop: start=0, step=1, limit=6
    $region2: #{tpu_custom_call.1} parent=1 // loop_pre_header
      _
    $region3: #{tpu_custom_call.1} parent=1 // loop_header
      %s22 = sphi 0, %s26
      %p23 = scmp.ge.s32.totalorder %s22, 6
      %s29 = sphi 0, %s41
      %s30 = sphi 0, %s37
      %s31 = sphi 0, %s29
      %s32 = sphi 0, %s30
      %s33 = sphi 0, %s31
      %s34 = sphi 0, %s32
      %s46 = sphi 0, %s48
      %s49 = sphi 0, %s46
      %s50 = sphi 0, %s49
      %s66 = sphi 0, %s50
      %s70 = sphi 0, %s70
      %s72 = sphi 0, %s70
      %s73 = sphi 0, %s72
      %s87 = sphi 0, %s73
      %s91 = sphi 0, %s91
      %s93 = sphi 0, %s91
      %s94 = sphi 0, %s93
      %s108 = sphi 0, %s94
      %s112 = sphi 0, %s112
      %s114 = sphi 0, %s112
      %s115 = sphi 0, %s114
      %s129 = sphi 0, %s115
      %s135 = sphi 0, %s137
      %s138 = sphi 0, %s135
      %s139 = sphi 0, %s138
      %s155 = sphi 0, %s139
      %s161 = sphi 0, %s163
      %s164 = sphi 0, %s161
      %s165 = sphi 0, %s164
      %s181 = sphi 0, %s165
    $region4: #{tpu_custom_call.1} parent=1 // loop_header_branch
      %25 = sbr.rel (%p23) target = $region8
    $region5: #{tpu_custom_call.1} parent=1 // loop_body
      %s27 = ssub.s32 %s22, 1
      %s28 = ssub.s32 %s22, 2
      %s35 = sadd.s32 1, %s30
      %p36 = scmp.ge.s32.totalorder %s35, 2
      %s37 = scalar_select %p36, 0, %s35
      %s38 = sadd.s32 1, %s29
      %s39 = scalar_select %p36, %s38, %s29
      %p40 = scmp.ge.s32.totalorder %s39, 2
      %s41 = scalar_select %p40, 0, %s39
      %s42 = ssub.s32 %s29, %s41
      %s43 = ssub.s32 %s30, %s37
      %s44 = sor.u32 %s42, %s43
      %p45 = scmp.eq.s32.totalorder %s44, 0
      %s47 = sadd.s32 %s46, 1
      %s48 = scalar_select %p45, %s46, %s47
      %p51 = pneg %p45
      %p52 = scmp.eq.s32.totalorder %s22, 3
      %p53 = por %p51, %p52
      %p54 = scmp.ne.s32.totalorder %s46, %s49
      %p55 = scmp.eq.s32.totalorder %s22, 0
      %p56 = por %p54, %p55
      %p57 = scmp.ne.s32.totalorder %s46, %s49
      %p58 = scmp.eq.s32.totalorder %s27, 3
      %p59 = por %p57, %p58
      %p60 = scmp.ne.s32.totalorder %s49, %s50
      %p61 = scmp.eq.s32.totalorder %s27, 0
      %p62 = por %p60, %p61
      %p63 = scmp.ne.s32.totalorder %s49, %s50
      %p64 = scmp.eq.s32.totalorder %s28, 3
      %p65 = por %p63, %p64
      %p67 = scmp.ne.s32.totalorder %s50, %s66
      %p68 = scmp.eq.s32.totalorder %s28, 0
      %p69 = por %p67, %p68
      %s71 = sadd.s32 %s70, 1
      %p74 = scmp.eq.s32.totalorder %s22, 3
      %p75 = scmp.ne.s32.totalorder %s70, %s72
      %p76 = scmp.eq.s32.totalorder %s22, 0
      %p77 = por %p75, %p76
      %p78 = scmp.ne.s32.totalorder %s70, %s72
      %p79 = scmp.eq.s32.totalorder %s27, 3
      %p80 = por %p78, %p79
      %p81 = scmp.ne.s32.totalorder %s72, %s73
      %p82 = scmp.eq.s32.totalorder %s27, 0
      %p83 = por %p81, %p82
      %p84 = scmp.ne.s32.totalorder %s72, %s73
      %p85 = scmp.eq.s32.totalorder %s28, 3
      %p86 = por %p84, %p85
      %p88 = scmp.ne.s32.totalorder %s73, %s87
      %p89 = scmp.eq.s32.totalorder %s28, 0
      %p90 = por %p88, %p89
      %s92 = sadd.s32 %s91, 1
      %p95 = scmp.eq.s32.totalorder %s22, 3
      %p96 = scmp.ne.s32.totalorder %s91, %s93
      %p97 = scmp.eq.s32.totalorder %s22, 0
      %p98 = por %p96, %p97
      %p99 = scmp.ne.s32.totalorder %s91, %s93
      %p100 = scmp.eq.s32.totalorder %s27, 3
      %p101 = por %p99, %p100
      %p102 = scmp.ne.s32.totalorder %s93, %s94
      %p103 = scmp.eq.s32.totalorder %s27, 0
      %p104 = por %p102, %p103
      %p105 = scmp.ne.s32.totalorder %s93, %s94
      %p106 = scmp.eq.s32.totalorder %s28, 3
      %p107 = por %p105, %p106
      %p109 = scmp.ne.s32.totalorder %s94, %s108
      %p110 = scmp.eq.s32.totalorder %s28, 0
      %p111 = por %p109, %p110
      %s113 = sadd.s32 %s112, 1
      %p116 = scmp.eq.s32.totalorder %s22, 3
      %p117 = scmp.ne.s32.totalorder %s112, %s114
      %p118 = scmp.eq.s32.totalorder %s22, 0
      %p119 = por %p117, %p118
      %p120 = scmp.ne.s32.totalorder %s112, %s114
      %p121 = scmp.eq.s32.totalorder %s27, 3
      %p122 = por %p120, %p121
      %p123 = scmp.ne.s32.totalorder %s114, %s115
      %p124 = scmp.eq.s32.totalorder %s27, 0
      %p125 = por %p123, %p124
      %p126 = scmp.ne.s32.totalorder %s114, %s115
      %p127 = scmp.eq.s32.totalorder %s28, 3
      %p128 = por %p126, %p127
      %p130 = scmp.ne.s32.totalorder %s115, %s129
      %p131 = scmp.eq.s32.totalorder %s28, 0
      %p132 = por %p130, %p131
      %s133 = ssub.s32 %s29, %s41
      %p134 = scmp.eq.s32.totalorder %s133, 0
      %s136 = sadd.s32 %s135, 1
      %s137 = scalar_select %p134, %s135, %s136
      %p140 = pneg %p134
      %p141 = scmp.eq.s32.totalorder %s22, 3
      %p142 = por %p140, %p141
      %p143 = scmp.ne.s32.totalorder %s135, %s138
      %p144 = scmp.eq.s32.totalorder %s22, 0
      %p145 = por %p143, %p144
      %p146 = scmp.ne.s32.totalorder %s135, %s138
      %p147 = scmp.eq.s32.totalorder %s27, 3
      %p148 = por %p146, %p147
      %p149 = scmp.ne.s32.totalorder %s138, %s139
      %p150 = scmp.eq.s32.totalorder %s27, 0
      %p151 = por %p149, %p150
      %p152 = scmp.ne.s32.totalorder %s138, %s139
      %p153 = scmp.eq.s32.totalorder %s28, 3
      %p154 = por %p152, %p153
      %p156 = scmp.ne.s32.totalorder %s139, %s155
      %p157 = scmp.eq.s32.totalorder %s28, 0
      %p158 = por %p156, %p157
      %s159 = ssub.s32 %s29, %s41
      %p160 = scmp.eq.s32.totalorder %s159, 0
      %s162 = sadd.s32 %s161, 1
      %s163 = scalar_select %p160, %s161, %s162
      %p166 = pneg %p160
      %p167 = scmp.eq.s32.totalorder %s22, 3
      %p168 = por %p166, %p167
      %p169 = scmp.ne.s32.totalorder %s161, %s164
      %p170 = scmp.eq.s32.totalorder %s22, 0
      %p171 = por %p169, %p170
      %p172 = scmp.ne.s32.totalorder %s161, %s164
      %p173 = scmp.eq.s32.totalorder %s27, 3
      %p174 = por %p172, %p173
      %p175 = scmp.ne.s32.totalorder %s164, %s165
      %p176 = scmp.eq.s32.totalorder %s27, 0
      %p177 = por %p175, %p176
      %p178 = scmp.ne.s32.totalorder %s164, %s165
      %p179 = scmp.eq.s32.totalorder %s28, 3
      %p180 = por %p178, %p179
      %p182 = scmp.ne.s32.totalorder %s165, %s181
      %p183 = scmp.eq.s32.totalorder %s28, 0
      %p184 = por %p182, %p183
      %p185 = scmp.le.s32.totalorder 1, %s22
      %p186 = scmp.lt.s32.totalorder %s22, 5
      %p187 = pnand %p185, %p186
      %p188 = pneg %p187
      // Predicated region
      $region9: #{tpu_custom_call.1} parent=5 // pred_check
        _
      $region10: #{tpu_custom_call.1} parent=5 // pred_check_branch
        %190 = sbr.rel (%p187) target = $region12
      $region11: #{tpu_custom_call.1} parent=5 // pred_region
        %s191 = ssub.s32 %s22, 1
        // Predicated region
        $region13: #{tpu_custom_call.1} parent=11 // pred_check
          %p192 = pneg %p83
        $region14: #{tpu_custom_call.1} parent=11 // pred_check_branch
          %194 = sbr.rel (%p192) target = $region16
        $region15: #{tpu_custom_call.1} parent=11 // pred_region
          %s196 = ssub.s32 512, 512
          %197 = vsyncadd [#allocation8], %s196
          %s198 = sshll.u32 [#allocation7], 4
          %s199 = int_to_ptr.vmem [resolvable:$true] %s198
          %204 = dma.hbm_to_vmem [thread:$0]  %s1, 512, %s199, [#allocation8], 128, 128, 8
        $region16: #{tpu_custom_call.1} parent=11 // pred_fallthru
          _
        // Predicated region
        $region17: #{tpu_custom_call.1} parent=11 // pred_check
          %p205 = pneg %p104
        $region18: #{tpu_custom_call.1} parent=11 // pred_check_branch
          %207 = sbr.rel (%p205) target = $region20
        $region19: #{tpu_custom_call.1} parent=11 // pred_region
          _
        $region20: #{tpu_custom_call.1} parent=11 // pred_fallthru
          _
        // Predicated region
        $region21: #{tpu_custom_call.1} parent=11 // pred_check
          %p208 = pneg %p125
        $region22: #{tpu_custom_call.1} parent=11 // pred_check_branch
          %210 = sbr.rel (%p208) target = $region24
        $region23: #{tpu_custom_call.1} parent=11 // pred_region
          _
        $region24: #{tpu_custom_call.1} parent=11 // pred_fallthru
          _
      $region12: #{tpu_custom_call.1} parent=5 // pred_fallthru
        _
      %p211 = scmp.lt.s32.totalorder %s22, 4
      // Predicated region
      $region25: #{tpu_custom_call.1} parent=5 // pred_check
        %p212 = pneg %p211
      $region26: #{tpu_custom_call.1} parent=5 // pred_check_branch
        %214 = sbr.rel (%p212) target = $region28
      $region27: #{tpu_custom_call.1} parent=5 // pred_region
        // Predicated region
        $region29: #{tpu_custom_call.1} parent=27 // pred_check
          %p215 = pneg %p56
        $region30: #{tpu_custom_call.1} parent=27 // pred_check_branch
          %217 = sbr.rel (%p215) target = $region32
        $region31: #{tpu_custom_call.1} parent=27 // pred_region
          %s218 = sand.u32 %s46, 1
          %s219 = scalar_lea.sflag [#allocation5], %s218
          %s220 = sand.u32 %s46, 1
          %s221 = smul.addr %s220, 128
          %s222 = scalar_lea.vmem [#allocation4], %s221
          %s223 = smul.u32 16, %s30
          %s225 = ssub.s32 2048, 2048
          %226 = vsyncadd %s219, %s225
          %s227 = smul.addr %s29, 32
          %s228 = sadd.s32 %s223, %s227
          %s229 = smul.addr %s228, 128
          %s230 = scalar_lea.hbm %s0, %s229
          %s231 = sshll.u32 %s222, 4
          %s232 = int_to_ptr.vmem [resolvable:$true] %s231
          %237 = dma.hbm_to_vmem [thread:$0]  %s230, 2048, %s232, %s219, 128, 128, 8
        $region32: #{tpu_custom_call.1} parent=27 // pred_fallthru
          _
      $region28: #{tpu_custom_call.1} parent=5 // pred_fallthru
        _
      %p238 = scmp.le.s32.totalorder 1, %s22
      %p239 = scmp.lt.s32.totalorder %s22, 5
      %p240 = pnand %p238, %p239
      %p241 = pneg %p240
      // Predicated region
      $region33: #{tpu_custom_call.1} parent=5 // pred_check
        _
      $region34: #{tpu_custom_call.1} parent=5 // pred_check_branch
        %243 = sbr.rel (%p240) target = $region36
      $region35: #{tpu_custom_call.1} parent=5 // pred_region
        %s244 = ssub.s32 %s22, 1
        %s245 = sand.u32 %s49, 1
        %s246 = scalar_lea.sflag [#allocation5], %s245
        %s247 = sand.u32 %s49, 1
        %s248 = smul.addr %s247, 128
        %s249 = scalar_lea.vmem [#allocation4], %s248
        // Predicated region
        $region37: #{tpu_custom_call.1} parent=35 // pred_check
          %p250 = pneg %p62
        $region38: #{tpu_custom_call.1} parent=35 // pred_check_branch
          %252 = sbr.rel (%p250) target = $region40
        $region39: #{tpu_custom_call.1} parent=35 // pred_region
          %253 = dma.done %s246, 2048
        $region40: #{tpu_custom_call.1} parent=35 // pred_fallthru
          _
        // Predicated region
        $region41: #{tpu_custom_call.1} parent=35 // pred_check
          %p254 = pneg %p83
        $region42: #{tpu_custom_call.1} parent=35 // pred_check_branch
          %256 = sbr.rel (%p254) target = $region44
        $region43: #{tpu_custom_call.1} parent=35 // pred_region
          %257 = dma.done [#allocation8], 512
        $region44: #{tpu_custom_call.1} parent=35 // pred_fallthru
          _
        %s258 = sand.u32 %s49, 1
        %s259 = scalar_lea.sflag [#allocation5], %s258
        %s260 = sand.u32 %s49, 1
        %s261 = smul.addr %s260, 128
        %s262 = scalar_lea.vmem [#allocation4], %s261
        %p263 = pneg %p62
        %p264 = pneg %p59
        %p265 = pneg %p83
        %p266 = pneg %p80
        %p267 = pneg %p104
        %p268 = pneg %p101
        %p269 = pneg %p125
        %p270 = pneg %p122
        %p271 = pneg %p151
        %p272 = pneg %p148
        %s273 = sand.u32 %s138, 1
        %s274 = scalar_lea.sflag [#allocation6], %s273
        %s275 = sand.u32 %s138, 1
        %s276 = scalar_lea.vmem [#allocation9], %s275
        %p277 = pneg %p177
        %p278 = pneg %p174
        %s279 = sand.u32 %s164, 1
        %s280 = scalar_lea.sflag [#allocation11], %s279
        %s281 = sand.u32 %s164, 1
        %s282 = scalar_lea.vmem [#allocation10], %s281
        %s283 = smul.u32 16, %s32
        %p284 = scmp.eq.s32.totalorder %s32, 0
        // Predicated region
        $region45: #{tpu_custom_call.1} parent=35 // pred_check
          %p285 = pneg %p284
        $region46: #{tpu_custom_call.1} parent=35 // pred_check_branch
          %287 = sbr.rel (%p285) target = $region48
        $region47: #{tpu_custom_call.1} parent=35 // pred_region
          %vm288 = vcmask 253952
          %289 = vst.msk [vmem:[#allocation2] sm:$0x1] %vm288, 0.0
          %290 = vst.msk [vmem:[#allocation3] sm:$0x1] %vm288, 0.0
        $region48: #{tpu_custom_call.1} parent=35 // pred_fallthru
          _
        %v291 = vld [vmem:[#allocation7] sm:$0xff]
        %v292 = vld [vmem:[#allocation7 + $0x8] sm:$0xff]
        %v293 = vld [vmem:[#allocation7 + $0x10] sm:$0xff]
        %v294 = vld [vmem:[#allocation7 + $0x18] sm:$0xff]
        %v295 = vld [vmem:[%s249] sm:$0xff]
        %v296 = vld [vmem:[%s249 + $0x8] sm:$0xff]
        %v297 = vld [vmem:[%s249 + $0x10] sm:$0xff]
        %v298 = vld [vmem:[%s249 + $0x18] sm:$0xff]
        %v299 = vld [vmem:[%s249 + $0x20] sm:$0xff]
        %v300 = vld [vmem:[%s249 + $0x28] sm:$0xff]
        %v301 = vld [vmem:[%s249 + $0x30] sm:$0xff]
        %v302 = vld [vmem:[%s249 + $0x38] sm:$0xff]
        %v303 = vld [vmem:[%s249 + $0x40] sm:$0xff]
        %v304 = vld [vmem:[%s249 + $0x48] sm:$0xff]
        %v305 = vld [vmem:[%s249 + $0x50] sm:$0xff]
        %v306 = vld [vmem:[%s249 + $0x58] sm:$0xff]
        %v307 = vld [vmem:[%s249 + $0x60] sm:$0xff]
        %v308 = vld [vmem:[%s249 + $0x68] sm:$0xff]
        %v309 = vld [vmem:[%s249 + $0x70] sm:$0xff]
        %v310 = vld [vmem:[%s249 + $0x78] sm:$0xff]
        %v311 = vadd.f32 %v295, %v296
        %v312 = vadd.f32 %v311, %v297
        %v313 = vadd.f32 %v312, %v298
        %v314 = vadd.f32 %v313, %v299
        %v315 = vadd.f32 %v314, %v300
        %v316 = vadd.f32 %v315, %v301
        %v317 = vadd.f32 %v316, %v302
        %v318 = vadd.f32 %v317, %v303
        %v319 = vadd.f32 %v318, %v304
        %v320 = vadd.f32 %v319, %v305
        %v321 = vadd.f32 %v320, %v306
        %v322 = vadd.f32 %v321, %v307
        %v323 = vadd.f32 %v322, %v308
        %v324 = vadd.f32 %v323, %v309
        %v325 = vadd.f32 %v324, %v310
        %v326 = vrot.slane %v325, 4
        %v327 = vadd.f32 %v325, %v326
        %v328 = vrot.slane %v327, 2
        %v329 = vadd.f32 %v327, %v328
        %v330 = vrot.slane %v329, 1
        %v331 = vadd.f32 %v329, %v330
        %332 = vmatprep.subr.mxu0 0.0
        %v333 = vand.u32 %v291, 4294901760
        %334 = vmatpush1.xpose.msra.mxu0 %v333
        %335 = vmatprep.subr.mxu0 0.0
        %v336 = vand.u32 %v292, 4294901760
        %337 = vmatpush1.xpose.msra.mxu0 %v336
        %338 = vmatprep.subr.mxu0 0.0
        %v339 = vand.u32 %v293, 4294901760
        %340 = vmatpush1.xpose.msra.mxu0 %v339
        %341 = vmatprep.subr.mxu0 0.0
        %v342 = vand.u32 %v294, 4294901760
        %343 = vmatpush1.xpose.msra.mxu0 %v342
        %344 = vmatprep.subr.mxu0 0.0
        %345 = vmatpush1.xpose.msra.mxu0 0.0
        %346 = vmatprep.subr.mxu0 0.0
        %347 = vmatpush1.xpose.msra.mxu0 0.0
        %348 = vmatprep.subr.mxu0 0.0
        %349 = vmatpush1.xpose.msra.mxu0 0.0
        %350 = vmatprep.subr.mxu0 0.0
        %351 = vmatpush1.xpose.msra.mxu0 0.0
        %352 = vmatprep.subr.mxu0 0.0
        %353 = vmatpush1.xpose.msra.mxu0 0.0
        %354 = vmatprep.subr.mxu0 0.0
        %355 = vmatpush1.xpose.msra.mxu0 0.0
        %356 = vmatprep.subr.mxu0 0.0
        %357 = vmatpush1.xpose.msra.mxu0 0.0
        %358 = vmatprep.subr.mxu0 0.0
        %359 = vmatpush1.xpose.msra.mxu0 0.0
        %360 = vmatprep.subr.mxu0 0.0
        %361 = vmatpush1.xpose.msra.mxu0 0.0
        %362 = vmatprep.subr.mxu0 0.0
        %363 = vmatpush1.xpose.msra.mxu0 0.0
        %364 = vmatprep.subr.mxu0 0.0
        %365 = vmatpush1.xpose.msra.mxu0 0.0
        %366 = vmatprep.subr.mxu0 0.0
        %367 = vmatpush1.xpose.msra.mxu0 0.0
        %368 = vmatprep.subr.mxu0 0.0
        %369 = vmatpush1.xpose.msra.mxu0 0.0
        %370 = vmatprep.subr.mxu0 0.0
        %371 = vmatpush1.xpose.msra.mxu0 0.0
        %372 = vmatprep.subr.mxu0 0.0
        %373 = vmatpush1.xpose.msra.mxu0 0.0
        %374 = vmatprep.subr.mxu0 0.0
        %375 = vmatpush1.xpose.msra.mxu0 0.0
        %376 = vmatprep.subr.mxu0 0.0
        %377 = vmatpush1.xpose.msra.mxu0 0.0
        %378 = vmatprep.subr.mxu0 0.0
        %379 = vmatpush1.xpose.msra.mxu0 0.0
        %380 = vmatprep.subr.mxu0 0.0
        %381 = vmatpush1.xpose.msra.mxu0 0.0
        %382 = vmatprep.subr.mxu0 0.0
        %383 = vmatpush1.xpose.msra.mxu0 0.0
        %384 = vmatprep.subr.mxu0 0.0
        %385 = vmatpush1.xpose.msra.mxu0 0.0
        %386 = vmatprep.subr.mxu0 0.0
        %387 = vmatpush1.xpose.msra.mxu0 0.0
        %388 = vmatprep.subr.mxu0 0.0
        %389 = vmatpush1.xpose.msra.mxu0 0.0
        %390 = vmatprep.subr.mxu0 0.0
        %391 = vmatpush1.xpose.msra.mxu0 0.0
        %392 = vmatprep.subr.mxu0 0.0
        %393 = vmatpush1.xpose.msra.mxu0 0.0
        %394 = vmatprep.subr.mxu0 0.0
        %395 = vmatpush1.xpose.msra.mxu0 0.0
        %396 = vmatprep.subr.mxu0 0.0
        %397 = vmatpush1.xpose.msra.mxu0 0.0
        %398 = vmatprep.subr.mxu0 0.0
        %399 = vmatpush1.xpose.msra.mxu0 0.0
        %400 = vmatprep.mubr.f32.mxu0 0.0
        %v401 = vand.u32 %v331, 4294901760
        %v402 = vsub.f32 %v331, %v401
        %v403 = vand.u32 %v402, 4294901760
        %v404 = vsub.f32 %v402, %v403
        %v405 = vand.u32 %v404, 4294901760
        %406 = vmatmul.mubr.f32.gmra.mrb[0].mxu0 %v405
        %v407 = vpop.f32.mrb[0].mxu0
        %v408 = vadd.f32 0.0, %v407
        %v409 = vpop.f32.mrb[0].mxu0
        %410 = vdwg.mxu0
        %411 = vmatprep.subr.mxu0 0.0
        %v412 = vand.u32 %v291, 4294901760
        %v413 = vsub.f32 %v291, %v412
        %v414 = vand.u32 %v413, 4294901760
        %v415 = vsub.f32 %v413, %v414
        %v416 = vand.u32 %v415, 4294901760
        %417 = vmatpush1.xpose.msra.mxu0 %v416
        %418 = vmatprep.subr.mxu0 0.0
        %v419 = vand.u32 %v292, 4294901760
        %v420 = vsub.f32 %v292, %v419
        %v421 = vand.u32 %v420, 4294901760
        %v422 = vsub.f32 %v420, %v421
        %v423 = vand.u32 %v422, 4294901760
        %424 = vmatpush1.xpose.msra.mxu0 %v423
        %425 = vmatprep.subr.mxu0 0.0
        %v426 = vand.u32 %v293, 4294901760
        %v427 = vsub.f32 %v293, %v426
        %v428 = vand.u32 %v427, 4294901760
        %v429 = vsub.f32 %v427, %v428
        %v430 = vand.u32 %v429, 4294901760
        %431 = vmatpush1.xpose.msra.mxu0 %v430
        %432 = vmatprep.subr.mxu0 0.0
        %v433 = vand.u32 %v294, 4294901760
        %v434 = vsub.f32 %v294, %v433
        %v435 = vand.u32 %v434, 4294901760
        %v436 = vsub.f32 %v434, %v435
        %v437 = vand.u32 %v436, 4294901760
        %438 = vmatpush1.xpose.msra.mxu0 %v437
        %439 = vmatprep.subr.mxu0 0.0
        %440 = vmatpush1.xpose.msra.mxu0 0.0
        %441 = vmatprep.subr.mxu0 0.0
        %442 = vmatpush1.xpose.msra.mxu0 0.0
        %443 = vmatprep.subr.mxu0 0.0
        %444 = vmatpush1.xpose.msra.mxu0 0.0
        %445 = vmatprep.subr.mxu0 0.0
        %446 = vmatpush1.xpose.msra.mxu0 0.0
        %447 = vmatprep.subr.mxu0 0.0
        %448 = vmatpush1.xpose.msra.mxu0 0.0
        %449 = vmatprep.subr.mxu0 0.0
        %450 = vmatpush1.xpose.msra.mxu0 0.0
        %451 = vmatprep.subr.mxu0 0.0
        %452 = vmatpush1.xpose.msra.mxu0 0.0
        %453 = vmatprep.subr.mxu0 0.0
        %454 = vmatpush1.xpose.msra.mxu0 0.0
        %455 = vmatprep.subr.mxu0 0.0
        %456 = vmatpush1.xpose.msra.mxu0 0.0
        %457 = vmatprep.subr.mxu0 0.0
        %458 = vmatpush1.xpose.msra.mxu0 0.0
        %459 = vmatprep.subr.mxu0 0.0
        %460 = vmatpush1.xpose.msra.mxu0 0.0
        %461 = vmatprep.subr.mxu0 0.0
        %462 = vmatpush1.xpose.msra.mxu0 0.0
        %463 = vmatprep.subr.mxu0 0.0
        %464 = vmatpush1.xpose.msra.mxu0 0.0
        %465 = vmatprep.subr.mxu0 0.0
        %466 = vmatpush1.xpose.msra.mxu0 0.0
        %467 = vmatprep.subr.mxu0 0.0
        %468 = vmatpush1.xpose.msra.mxu0 0.0
        %469 = vmatprep.subr.mxu0 0.0
        %470 = vmatpush1.xpose.msra.mxu0 0.0
        %471 = vmatprep.subr.mxu0 0.0
        %472 = vmatpush1.xpose.msra.mxu0 0.0
        %473 = vmatprep.subr.mxu0 0.0
        %474 = vmatpush1.xpose.msra.mxu0 0.0
        %475 = vmatprep.subr.mxu0 0.0
        %476 = vmatpush1.xpose.msra.mxu0 0.0
        %477 = vmatprep.subr.mxu0 0.0
        %478 = vmatpush1.xpose.msra.mxu0 0.0
        %479 = vmatprep.subr.mxu0 0.0
        %480 = vmatpush1.xpose.msra.mxu0 0.0
        %481 = vmatprep.subr.mxu0 0.0
        %482 = vmatpush1.xpose.msra.mxu0 0.0
        %483 = vmatprep.subr.mxu0 0.0
        %484 = vmatpush1.xpose.msra.mxu0 0.0
        %485 = vmatprep.subr.mxu0 0.0
        %486 = vmatpush1.xpose.msra.mxu0 0.0
        %487 = vmatprep.subr.mxu0 0.0
        %488 = vmatpush1.xpose.msra.mxu0 0.0
        %489 = vmatprep.subr.mxu0 0.0
        %490 = vmatpush1.xpose.msra.mxu0 0.0
        %491 = vmatprep.subr.mxu0 0.0
        %492 = vmatpush1.xpose.msra.mxu0 0.0
        %493 = vmatprep.subr.mxu0 0.0
        %494 = vmatpush1.xpose.msra.mxu0 0.0
        %495 = vmatprep.mubr.f32.mxu0 0.0
        %v496 = vand.u32 %v331, 4294901760
        %497 = vmatmul.mubr.f32.gmra.mrb[0].mxu0 %v496
        %v498 = vpop.f32.mrb[0].mxu0
        %v499 = vadd.f32 %v408, %v498
        %v500 = vpop.f32.mrb[0].mxu0
        %501 = vdwg.mxu0
        %502 = vmatprep.subr.mxu0 0.0
        %v503 = vand.u32 %v291, 4294901760
        %v504 = vsub.f32 %v291, %v503
        %505 = vmatpush1.xpose.msra.mxu0 %v504
        %506 = vmatprep.subr.mxu0 0.0
        %v507 = vand.u32 %v292, 4294901760
        %v508 = vsub.f32 %v292, %v507
        %509 = vmatpush1.xpose.msra.mxu0 %v508
        %510 = vmatprep.subr.mxu0 0.0
        %v511 = vand.u32 %v293, 4294901760
        %v512 = vsub.f32 %v293, %v511
        %513 = vmatpush1.xpose.msra.mxu0 %v512
        %514 = vmatprep.subr.mxu0 0.0
        %v515 = vand.u32 %v294, 4294901760
        %v516 = vsub.f32 %v294, %v515
        %517 = vmatpush1.xpose.msra.mxu0 %v516
        %518 = vmatprep.subr.mxu0 0.0
        %519 = vmatpush1.xpose.msra.mxu0 0.0
        %520 = vmatprep.subr.mxu0 0.0
        %521 = vmatpush1.xpose.msra.mxu0 0.0
        %522 = vmatprep.subr.mxu0 0.0
        %523 = vmatpush1.xpose.msra.mxu0 0.0
        %524 = vmatprep.subr.mxu0 0.0
        %525 = vmatpush1.xpose.msra.mxu0 0.0
        %526 = vmatprep.subr.mxu0 0.0
        %527 = vmatpush1.xpose.msra.mxu0 0.0
        %528 = vmatprep.subr.mxu0 0.0
        %529 = vmatpush1.xpose.msra.mxu0 0.0
        %530 = vmatprep.subr.mxu0 0.0
        %531 = vmatpush1.xpose.msra.mxu0 0.0
        %532 = vmatprep.subr.mxu0 0.0
        %533 = vmatpush1.xpose.msra.mxu0 0.0
        %534 = vmatprep.subr.mxu0 0.0
        %535 = vmatpush1.xpose.msra.mxu0 0.0
        %536 = vmatprep.subr.mxu0 0.0
        %537 = vmatpush1.xpose.msra.mxu0 0.0
        %538 = vmatprep.subr.mxu0 0.0
        %539 = vmatpush1.xpose.msra.mxu0 0.0
        %540 = vmatprep.subr.mxu0 0.0
        %541 = vmatpush1.xpose.msra.mxu0 0.0
        %542 = vmatprep.subr.mxu0 0.0
        %543 = vmatpush1.xpose.msra.mxu0 0.0
        %544 = vmatprep.subr.mxu0 0.0
        %545 = vmatpush1.xpose.msra.mxu0 0.0
        %546 = vmatprep.subr.mxu0 0.0
        %547 = vmatpush1.xpose.msra.mxu0 0.0
        %548 = vmatprep.subr.mxu0 0.0
        %549 = vmatpush1.xpose.msra.mxu0 0.0
        %550 = vmatprep.subr.mxu0 0.0
        %551 = vmatpush1.xpose.msra.mxu0 0.0
        %552 = vmatprep.subr.mxu0 0.0
        %553 = vmatpush1.xpose.msra.mxu0 0.0
        %554 = vmatprep.subr.mxu0 0.0
        %555 = vmatpush1.xpose.msra.mxu0 0.0
        %556 = vmatprep.subr.mxu0 0.0
        %557 = vmatpush1.xpose.msra.mxu0 0.0
        %558 = vmatprep.subr.mxu0 0.0
        %559 = vmatpush1.xpose.msra.mxu0 0.0
        %560 = vmatprep.subr.mxu0 0.0
        %561 = vmatpush1.xpose.msra.mxu0 0.0
        %562 = vmatprep.subr.mxu0 0.0
        %563 = vmatpush1.xpose.msra.mxu0 0.0
        %564 = vmatprep.subr.mxu0 0.0
        %565 = vmatpush1.xpose.msra.mxu0 0.0
        %566 = vmatprep.subr.mxu0 0.0
        %567 = vmatpush1.xpose.msra.mxu0 0.0
        %568 = vmatprep.subr.mxu0 0.0
        %569 = vmatpush1.xpose.msra.mxu0 0.0
        %570 = vmatprep.subr.mxu0 0.0
        %571 = vmatpush1.xpose.msra.mxu0 0.0
        %572 = vmatprep.subr.mxu0 0.0
        %573 = vmatpush1.xpose.msra.mxu0 0.0
        %574 = vmatprep.mubr.f32.mxu0 0.0
        %v575 = vand.u32 %v331, 4294901760
        %v576 = vsub.f32 %v331, %v575
        %577 = vmatmul.mubr.f32.gmra.mrb[0].mxu0 %v576
        %v578 = vpop.f32.mrb[0].mxu0
        %v579 = vadd.f32 %v499, %v578
        %v580 = vpop.f32.mrb[0].mxu0
        %581 = vdwg.mxu0
        %582 = vmatprep.subr.mxu0 0.0
        %v583 = vand.u32 %v291, 4294901760
        %584 = vmatpush1.xpose.msra.mxu0 %v583
        %585 = vmatprep.subr.mxu0 0.0
        %v586 = vand.u32 %v292, 4294901760
        %587 = vmatpush1.xpose.msra.mxu0 %v586
        %588 = vmatprep.subr.mxu0 0.0
        %v589 = vand.u32 %v293, 4294901760
        %590 = vmatpush1.xpose.msra.mxu0 %v589
        %591 = vmatprep.subr.mxu0 0.0
        %v592 = vand.u32 %v294, 4294901760
        %593 = vmatpush1.xpose.msra.mxu0 %v592
        %594 = vmatprep.subr.mxu0 0.0
        %595 = vmatpush1.xpose.msra.mxu0 0.0
        %596 = vmatprep.subr.mxu0 0.0
        %597 = vmatpush1.xpose.msra.mxu0 0.0
        %598 = vmatprep.subr.mxu0 0.0
        %599 = vmatpush1.xpose.msra.mxu0 0.0
        %600 = vmatprep.subr.mxu0 0.0
        %601 = vmatpush1.xpose.msra.mxu0 0.0
        %602 = vmatprep.subr.mxu0 0.0
        %603 = vmatpush1.xpose.msra.mxu0 0.0
        %604 = vmatprep.subr.mxu0 0.0
        %605 = vmatpush1.xpose.msra.mxu0 0.0
        %606 = vmatprep.subr.mxu0 0.0
        %607 = vmatpush1.xpose.msra.mxu0 0.0
        %608 = vmatprep.subr.mxu0 0.0
        %609 = vmatpush1.xpose.msra.mxu0 0.0
        %610 = vmatprep.subr.mxu0 0.0
        %611 = vmatpush1.xpose.msra.mxu0 0.0
        %612 = vmatprep.subr.mxu0 0.0
        %613 = vmatpush1.xpose.msra.mxu0 0.0
        %614 = vmatprep.subr.mxu0 0.0
        %615 = vmatpush1.xpose.msra.mxu0 0.0
        %616 = vmatprep.subr.mxu0 0.0
        %617 = vmatpush1.xpose.msra.mxu0 0.0
        %618 = vmatprep.subr.mxu0 0.0
        %619 = vmatpush1.xpose.msra.mxu0 0.0
        %620 = vmatprep.subr.mxu0 0.0
        %621 = vmatpush1.xpose.msra.mxu0 0.0
        %622 = vmatprep.subr.mxu0 0.0
        %623 = vmatpush1.xpose.msra.mxu0 0.0
        %624 = vmatprep.subr.mxu0 0.0
        %625 = vmatpush1.xpose.msra.mxu0 0.0
        %626 = vmatprep.subr.mxu0 0.0
        %627 = vmatpush1.xpose.msra.mxu0 0.0
        %628 = vmatprep.subr.mxu0 0.0
        %629 = vmatpush1.xpose.msra.mxu0 0.0
        %630 = vmatprep.subr.mxu0 0.0
        %631 = vmatpush1.xpose.msra.mxu0 0.0
        %632 = vmatprep.subr.mxu0 0.0
        %633 = vmatpush1.xpose.msra.mxu0 0.0
        %634 = vmatprep.subr.mxu0 0.0
        %635 = vmatpush1.xpose.msra.mxu0 0.0
        %636 = vmatprep.subr.mxu0 0.0
        %637 = vmatpush1.xpose.msra.mxu0 0.0
        %638 = vmatprep.subr.mxu0 0.0
        %639 = vmatpush1.xpose.msra.mxu0 0.0
        %640 = vmatprep.subr.mxu0 0.0
        %641 = vmatpush1.xpose.msra.mxu0 0.0
        %642 = vmatprep.subr.mxu0 0.0
        %643 = vmatpush1.xpose.msra.mxu0 0.0
        %644 = vmatprep.subr.mxu0 0.0
        %645 = vmatpush1.xpose.msra.mxu0 0.0
        %646 = vmatprep.subr.mxu0 0.0
        %647 = vmatpush1.xpose.msra.mxu0 0.0
        %648 = vmatprep.subr.mxu0 0.0
        %649 = vmatpush1.xpose.msra.mxu0 0.0
        %650 = vmatprep.mubr.f32.mxu0 0.0
        %v651 = vand.u32 %v331, 4294901760
        %v652 = vsub.f32 %v331, %v651
        %v653 = vand.u32 %v652, 4294901760
        %654 = vmatmul.mubr.f32.gmra.mrb[0].mxu0 %v653
        %v655 = vpop.f32.mrb[0].mxu0
        %v656 = vadd.f32 %v579, %v655
        %v657 = vpop.f32.mrb[0].mxu0
        %658 = vdwg.mxu0
        %659 = vmatprep.subr.mxu0 0.0
        %v660 = vand.u32 %v291, 4294901760
        %v661 = vsub.f32 %v291, %v660
        %v662 = vand.u32 %v661, 4294901760
        %663 = vmatpush1.xpose.msra.mxu0 %v662
        %664 = vmatprep.subr.mxu0 0.0
        %v665 = vand.u32 %v292, 4294901760
        %v666 = vsub.f32 %v292, %v665
        %v667 = vand.u32 %v666, 4294901760
        %668 = vmatpush1.xpose.msra.mxu0 %v667
        %669 = vmatprep.subr.mxu0 0.0
        %v670 = vand.u32 %v293, 4294901760
        %v671 = vsub.f32 %v293, %v670
        %v672 = vand.u32 %v671, 4294901760
        %673 = vmatpush1.xpose.msra.mxu0 %v672
        %674 = vmatprep.subr.mxu0 0.0
        %v675 = vand.u32 %v294, 4294901760
        %v676 = vsub.f32 %v294, %v675
        %v677 = vand.u32 %v676, 4294901760
        %678 = vmatpush1.xpose.msra.mxu0 %v677
        %679 = vmatprep.subr.mxu0 0.0
        %680 = vmatpush1.xpose.msra.mxu0 0.0
        %681 = vmatprep.subr.mxu0 0.0
        %682 = vmatpush1.xpose.msra.mxu0 0.0
        %683 = vmatprep.subr.mxu0 0.0
        %684 = vmatpush1.xpose.msra.mxu0 0.0
        %685 = vmatprep.subr.mxu0 0.0
        %686 = vmatpush1.xpose.msra.mxu0 0.0
        %687 = vmatprep.subr.mxu0 0.0
        %688 = vmatpush1.xpose.msra.mxu0 0.0
        %689 = vmatprep.subr.mxu0 0.0
        %690 = vmatpush1.xpose.msra.mxu0 0.0
        %691 = vmatprep.subr.mxu0 0.0
        %692 = vmatpush1.xpose.msra.mxu0 0.0
        %693 = vmatprep.subr.mxu0 0.0
        %694 = vmatpush1.xpose.msra.mxu0 0.0
        %695 = vmatprep.subr.mxu0 0.0
        %696 = vmatpush1.xpose.msra.mxu0 0.0
        %697 = vmatprep.subr.mxu0 0.0
        %698 = vmatpush1.xpose.msra.mxu0 0.0
        %699 = vmatprep.subr.mxu0 0.0
        %700 = vmatpush1.xpose.msra.mxu0 0.0
        %701 = vmatprep.subr.mxu0 0.0
        %702 = vmatpush1.xpose.msra.mxu0 0.0
        %703 = vmatprep.subr.mxu0 0.0
        %704 = vmatpush1.xpose.msra.mxu0 0.0
        %705 = vmatprep.subr.mxu0 0.0
        %706 = vmatpush1.xpose.msra.mxu0 0.0
        %707 = vmatprep.subr.mxu0 0.0
        %708 = vmatpush1.xpose.msra.mxu0 0.0
        %709 = vmatprep.subr.mxu0 0.0
        %710 = vmatpush1.xpose.msra.mxu0 0.0
        %711 = vmatprep.subr.mxu0 0.0
        %712 = vmatpush1.xpose.msra.mxu0 0.0
        %713 = vmatprep.subr.mxu0 0.0
        %714 = vmatpush1.xpose.msra.mxu0 0.0
        %715 = vmatprep.subr.mxu0 0.0
        %716 = vmatpush1.xpose.msra.mxu0 0.0
        %717 = vmatprep.subr.mxu0 0.0
        %718 = vmatpush1.xpose.msra.mxu0 0.0
        %719 = vmatprep.subr.mxu0 0.0
        %720 = vmatpush1.xpose.msra.mxu0 0.0
        %721 = vmatprep.subr.mxu0 0.0
        %722 = vmatpush1.xpose.msra.mxu0 0.0
        %723 = vmatprep.subr.mxu0 0.0
        %724 = vmatpush1.xpose.msra.mxu0 0.0
        %725 = vmatprep.subr.mxu0 0.0
        %726 = vmatpush1.xpose.msra.mxu0 0.0
        %727 = vmatprep.subr.mxu0 0.0
        %728 = vmatpush1.xpose.msra.mxu0 0.0
        %729 = vmatprep.subr.mxu0 0.0
        %730 = vmatpush1.xpose.msra.mxu0 0.0
        %731 = vmatprep.subr.mxu0 0.0
        %732 = vmatpush1.xpose.msra.mxu0 0.0
        %733 = vmatprep.subr.mxu0 0.0
        %734 = vmatpush1.xpose.msra.mxu0 0.0
        %735 = vmatprep.mubr.f32.mxu0 0.0
        %v736 = vand.u32 %v331, 4294901760
        %737 = vmatmul.mubr.f32.gmra.mrb[0].mxu0 %v736
        %v738 = vpop.f32.mrb[0].mxu0
        %v739 = vadd.f32 %v656, %v738
        %v740 = vpop.f32.mrb[0].mxu0
        %741 = vdwg.mxu0
        %742 = vmatprep.subr.mxu0 0.0
        %v743 = vand.u32 %v291, 4294901760
        %744 = vmatpush1.xpose.msra.mxu0 %v743
        %745 = vmatprep.subr.mxu0 0.0
        %v746 = vand.u32 %v292, 4294901760
        %747 = vmatpush1.xpose.msra.mxu0 %v746
        %748 = vmatprep.subr.mxu0 0.0
        %v749 = vand.u32 %v293, 4294901760
        %750 = vmatpush1.xpose.msra.mxu0 %v749
        %751 = vmatprep.subr.mxu0 0.0
        %v752 = vand.u32 %v294, 4294901760
        %753 = vmatpush1.xpose.msra.mxu0 %v752
        %754 = vmatprep.subr.mxu0 0.0
        %755 = vmatpush1.xpose.msra.mxu0 0.0
        %756 = vmatprep.subr.mxu0 0.0
        %757 = vmatpush1.xpose.msra.mxu0 0.0
        %758 = vmatprep.subr.mxu0 0.0
        %759 = vmatpush1.xpose.msra.mxu0 0.0
        %760 = vmatprep.subr.mxu0 0.0
        %761 = vmatpush1.xpose.msra.mxu0 0.0
        %762 = vmatprep.subr.mxu0 0.0
        %763 = vmatpush1.xpose.msra.mxu0 0.0
        %764 = vmatprep.subr.mxu0 0.0
        %765 = vmatpush1.xpose.msra.mxu0 0.0
        %766 = vmatprep.subr.mxu0 0.0
        %767 = vmatpush1.xpose.msra.mxu0 0.0
        %768 = vmatprep.subr.mxu0 0.0
        %769 = vmatpush1.xpose.msra.mxu0 0.0
        %770 = vmatprep.subr.mxu0 0.0
        %771 = vmatpush1.xpose.msra.mxu0 0.0
        %772 = vmatprep.subr.mxu0 0.0
        %773 = vmatpush1.xpose.msra.mxu0 0.0
        %774 = vmatprep.subr.mxu0 0.0
        %775 = vmatpush1.xpose.msra.mxu0 0.0
        %776 = vmatprep.subr.mxu0 0.0
        %777 = vmatpush1.xpose.msra.mxu0 0.0
        %778 = vmatprep.subr.mxu0 0.0
        %779 = vmatpush1.xpose.msra.mxu0 0.0
        %780 = vmatprep.subr.mxu0 0.0
        %781 = vmatpush1.xpose.msra.mxu0 0.0
        %782 = vmatprep.subr.mxu0 0.0
        %783 = vmatpush1.xpose.msra.mxu0 0.0
        %784 = vmatprep.subr.mxu0 0.0
        %785 = vmatpush1.xpose.msra.mxu0 0.0
        %786 = vmatprep.subr.mxu0 0.0
        %787 = vmatpush1.xpose.msra.mxu0 0.0
        %788 = vmatprep.subr.mxu0 0.0
        %789 = vmatpush1.xpose.msra.mxu0 0.0
        %790 = vmatprep.subr.mxu0 0.0
        %791 = vmatpush1.xpose.msra.mxu0 0.0
        %792 = vmatprep.subr.mxu0 0.0
        %793 = vmatpush1.xpose.msra.mxu0 0.0
        %794 = vmatprep.subr.mxu0 0.0
        %795 = vmatpush1.xpose.msra.mxu0 0.0
        %796 = vmatprep.subr.mxu0 0.0
        %797 = vmatpush1.xpose.msra.mxu0 0.0
        %798 = vmatprep.subr.mxu0 0.0
        %799 = vmatpush1.xpose.msra.mxu0 0.0
        %800 = vmatprep.subr.mxu0 0.0
        %801 = vmatpush1.xpose.msra.mxu0 0.0
        %802 = vmatprep.subr.mxu0 0.0
        %803 = vmatpush1.xpose.msra.mxu0 0.0
        %804 = vmatprep.subr.mxu0 0.0
        %805 = vmatpush1.xpose.msra.mxu0 0.0
        %806 = vmatprep.subr.mxu0 0.0
        %807 = vmatpush1.xpose.msra.mxu0 0.0
        %808 = vmatprep.subr.mxu0 0.0
        %809 = vmatpush1.xpose.msra.mxu0 0.0
        %810 = vmatprep.mubr.f32.mxu0 0.0
        %v811 = vand.u32 %v331, 4294901760
        %812 = vmatmul.mubr.f32.gmra.mrb[0].mxu0 %v811
        %v813 = vpop.f32.mrb[0].mxu0
        %v814 = vadd.f32 %v739, %v813
        %v815 = vpop.f32.mrb[0].mxu0
        %816 = vdwg.mxu0
        %v817 = vrcp.pop 512.0
        %v818 = vmul.f32 %v814, %v817
        %vm819 = vcmask 261120
        %v821 = vsel %vm819, %v818, 0
        %823 = vmatprep.subr.mxu0 0.0
        %v824 = vand.u32 %v291, 4294901760
        %825 = vmatpush1.msra.mxu0 %v824
        %826 = vmatprep.subr.mxu0 0.0
        %v827 = vand.u32 %v292, 4294901760
        %828 = vmatpush1.msra.mxu0 %v827
        %829 = vmatprep.subr.mxu0 0.0
        %v830 = vand.u32 %v293, 4294901760
        %831 = vmatpush1.msra.mxu0 %v830
        %832 = vmatprep.subr.mxu0 0.0
        %v833 = vand.u32 %v294, 4294901760
        %834 = vmatpush1.msra.mxu0 %v833
        %835 = vmatprep.subr.mxu0 0.0
        %836 = vmatpush1.msra.mxu0 0.0
        %837 = vmatprep.subr.mxu0 0.0
        %838 = vmatpush1.msra.mxu0 0.0
        %839 = vmatprep.subr.mxu0 0.0
        %840 = vmatpush1.msra.mxu0 0.0
        %841 = vmatprep.subr.mxu0 0.0
        %842 = vmatpush1.msra.mxu0 0.0
        %843 = vmatprep.subr.mxu0 0.0
        %844 = vmatpush1.msra.mxu0 0.0
        %845 = vmatprep.subr.mxu0 0.0
        %846 = vmatpush1.msra.mxu0 0.0
        %847 = vmatprep.subr.mxu0 0.0
        %848 = vmatpush1.msra.mxu0 0.0
        %849 = vmatprep.subr.mxu0 0.0
        %850 = vmatpush1.msra.mxu0 0.0
        %851 = vmatprep.subr.mxu0 0.0
        %852 = vmatpush1.msra.mxu0 0.0
        %853 = vmatprep.subr.mxu0 0.0
        %854 = vmatpush1.msra.mxu0 0.0
        %855 = vmatprep.subr.mxu0 0.0
        %856 = vmatpush1.msra.mxu0 0.0
        %857 = vmatprep.subr.mxu0 0.0
        %858 = vmatpush1.msra.mxu0 0.0
        %859 = vmatprep.subr.mxu0 0.0
        %860 = vmatpush1.msra.mxu0 0.0
        %861 = vmatprep.subr.mxu0 0.0
        %862 = vmatpush1.msra.mxu0 0.0
        %863 = vmatprep.subr.mxu0 0.0
        %864 = vmatpush1.msra.mxu0 0.0
        %865 = vmatprep.subr.mxu0 0.0
        %866 = vmatpush1.msra.mxu0 0.0
        %867 = vmatprep.subr.mxu0 0.0
        %868 = vmatpush1.msra.mxu0 0.0
        %869 = vmatprep.subr.mxu0 0.0
        %870 = vmatpush1.msra.mxu0 0.0
        %871 = vmatprep.subr.mxu0 0.0
        %872 = vmatpush1.msra.mxu0 0.0
        %873 = vmatprep.subr.mxu0 0.0
        %874 = vmatpush1.msra.mxu0 0.0
        %875 = vmatprep.subr.mxu0 0.0
        %876 = vmatpush1.msra.mxu0 0.0
        %877 = vmatprep.subr.mxu0 0.0
        %878 = vmatpush1.msra.mxu0 0.0
        %879 = vmatprep.subr.mxu0 0.0
        %880 = vmatpush1.msra.mxu0 0.0
        %881 = vmatprep.subr.mxu0 0.0
        %882 = vmatpush1.msra.mxu0 0.0
        %883 = vmatprep.subr.mxu0 0.0
        %884 = vmatpush1.msra.mxu0 0.0
        %885 = vmatprep.subr.mxu0 0.0
        %886 = vmatpush1.msra.mxu0 0.0
        %887 = vmatprep.subr.mxu0 0.0
        %888 = vmatpush1.msra.mxu0 0.0
        %889 = vmatprep.subr.mxu0 0.0
        %890 = vmatpush1.msra.mxu0 0.0
        %891 = vmatprep.mubr.f32.mxu0 0.0
        %v892 = vand.u32 %v821, 4294901760
        %v893 = vsub.f32 %v821, %v892
        %v894 = vand.u32 %v893, 4294901760
        %v895 = vsub.f32 %v893, %v894
        %v896 = vand.u32 %v895, 4294901760
        %897 = vmatmul.mubr.f32.gmra.mrb[0].mxu0 %v896
        %v898 = vpop.f32.mrb[0].mxu0
        %v899 = vadd.f32 0.0, %v898
        %v900 = vpop.f32.mrb[0].mxu0
        %901 = vdwg.mxu0
        %902 = vmatprep.subr.mxu0 0.0
        %v903 = vand.u32 %v291, 4294901760
        %v904 = vsub.f32 %v291, %v903
        %v905 = vand.u32 %v904, 4294901760
        %v906 = vsub.f32 %v904, %v905
        %v907 = vand.u32 %v906, 4294901760
        %908 = vmatpush1.msra.mxu0 %v907
        %909 = vmatprep.subr.mxu0 0.0
        %v910 = vand.u32 %v292, 4294901760
        %v911 = vsub.f32 %v292, %v910
        %v912 = vand.u32 %v911, 4294901760
        %v913 = vsub.f32 %v911, %v912
        %v914 = vand.u32 %v913, 4294901760
        %915 = vmatpush1.msra.mxu0 %v914
        %916 = vmatprep.subr.mxu0 0.0
        %v917 = vand.u32 %v293, 4294901760
        %v918 = vsub.f32 %v293, %v917
        %v919 = vand.u32 %v918, 4294901760
        %v920 = vsub.f32 %v918, %v919
        %v921 = vand.u32 %v920, 4294901760
        %922 = vmatpush1.msra.mxu0 %v921
        %923 = vmatprep.subr.mxu0 0.0
        %v924 = vand.u32 %v294, 4294901760
        %v925 = vsub.f32 %v294, %v924
        %v926 = vand.u32 %v925, 4294901760
        %v927 = vsub.f32 %v925, %v926
        %v928 = vand.u32 %v927, 4294901760
        %929 = vmatpush1.msra.mxu0 %v928
        %930 = vmatprep.subr.mxu0 0.0
        %931 = vmatpush1.msra.mxu0 0.0
        %932 = vmatprep.subr.mxu0 0.0
        %933 = vmatpush1.msra.mxu0 0.0
        %934 = vmatprep.subr.mxu0 0.0
        %935 = vmatpush1.msra.mxu0 0.0
        %936 = vmatprep.subr.mxu0 0.0
        %937 = vmatpush1.msra.mxu0 0.0
        %938 = vmatprep.subr.mxu0 0.0
        %939 = vmatpush1.msra.mxu0 0.0
        %940 = vmatprep.subr.mxu0 0.0
        %941 = vmatpush1.msra.mxu0 0.0
        %942 = vmatprep.subr.mxu0 0.0
        %943 = vmatpush1.msra.mxu0 0.0
        %944 = vmatprep.subr.mxu0 0.0
        %945 = vmatpush1.msra.mxu0 0.0
        %946 = vmatprep.subr.mxu0 0.0
        %947 = vmatpush1.msra.mxu0 0.0
        %948 = vmatprep.subr.mxu0 0.0
        %949 = vmatpush1.msra.mxu0 0.0
        %950 = vmatprep.subr.mxu0 0.0
        %951 = vmatpush1.msra.mxu0 0.0
        %952 = vmatprep.subr.mxu0 0.0
        %953 = vmatpush1.msra.mxu0 0.0
        %954 = vmatprep.subr.mxu0 0.0
        %955 = vmatpush1.msra.mxu0 0.0
        %956 = vmatprep.subr.mxu0 0.0
        %957 = vmatpush1.msra.mxu0 0.0
        %958 = vmatprep.subr.mxu0 0.0
        %959 = vmatpush1.msra.mxu0 0.0
        %960 = vmatprep.subr.mxu0 0.0
        %961 = vmatpush1.msra.mxu0 0.0
        %962 = vmatprep.subr.mxu0 0.0
        %963 = vmatpush1.msra.mxu0 0.0
        %964 = vmatprep.subr.mxu0 0.0
        %965 = vmatpush1.msra.mxu0 0.0
        %966 = vmatprep.subr.mxu0 0.0
        %967 = vmatpush1.msra.mxu0 0.0
        %968 = vmatprep.subr.mxu0 0.0
        %969 = vmatpush1.msra.mxu0 0.0
        %970 = vmatprep.subr.mxu0 0.0
        %971 = vmatpush1.msra.mxu0 0.0
        %972 = vmatprep.subr.mxu0 0.0
        %973 = vmatpush1.msra.mxu0 0.0
        %974 = vmatprep.subr.mxu0 0.0
        %975 = vmatpush1.msra.mxu0 0.0
        %976 = vmatprep.subr.mxu0 0.0
        %977 = vmatpush1.msra.mxu0 0.0
        %978 = vmatprep.subr.mxu0 0.0
        %979 = vmatpush1.msra.mxu0 0.0
        %980 = vmatprep.subr.mxu0 0.0
        %981 = vmatpush1.msra.mxu0 0.0
        %982 = vmatprep.subr.mxu0 0.0
        %983 = vmatpush1.msra.mxu0 0.0
        %984 = vmatprep.subr.mxu0 0.0
        %985 = vmatpush1.msra.mxu0 0.0
        %986 = vmatprep.mubr.f32.mxu0 0.0
        %v987 = vand.u32 %v821, 4294901760
        %988 = vmatmul.mubr.f32.gmra.mrb[0].mxu0 %v987
        %v989 = vpop.f32.mrb[0].mxu0
        %v990 = vadd.f32 %v899, %v989
        %v991 = vpop.f32.mrb[0].mxu0
        %992 = vdwg.mxu0
        %993 = vmatprep.subr.mxu0 0.0
        %v994 = vand.u32 %v291, 4294901760
        %v995 = vsub.f32 %v291, %v994
        %996 = vmatpush1.msra.mxu0 %v995
        %997 = vmatprep.subr.mxu0 0.0
        %v998 = vand.u32 %v292, 4294901760
        %v999 = vsub.f32 %v292, %v998
        %1000 = vmatpush1.msra.mxu0 %v999
        %1001 = vmatprep.subr.mxu0 0.0
        %v1002 = vand.u32 %v293, 4294901760
        %v1003 = vsub.f32 %v293, %v1002
        %1004 = vmatpush1.msra.mxu0 %v1003
        %1005 = vmatprep.subr.mxu0 0.0
        %v1006 = vand.u32 %v294, 4294901760
        %v1007 = vsub.f32 %v294, %v1006
        %1008 = vmatpush1.msra.mxu0 %v1007
        %1009 = vmatprep.subr.mxu0 0.0
        %1010 = vmatpush1.msra.mxu0 0.0
        %1011 = vmatprep.subr.mxu0 0.0
        %1012 = vmatpush1.msra.mxu0 0.0
        %1013 = vmatprep.subr.mxu0 0.0
        %1014 = vmatpush1.msra.mxu0 0.0
        %1015 = vmatprep.subr.mxu0 0.0
        %1016 = vmatpush1.msra.mxu0 0.0
        %1017 = vmatprep.subr.mxu0 0.0
        %1018 = vmatpush1.msra.mxu0 0.0
        %1019 = vmatprep.subr.mxu0 0.0
        %1020 = vmatpush1.msra.mxu0 0.0
        %1021 = vmatprep.subr.mxu0 0.0
        %1022 = vmatpush1.msra.mxu0 0.0
        %1023 = vmatprep.subr.mxu0 0.0
        %1024 = vmatpush1.msra.mxu0 0.0
        %1025 = vmatprep.subr.mxu0 0.0
        %1026 = vmatpush1.msra.mxu0 0.0
        %1027 = vmatprep.subr.mxu0 0.0
        %1028 = vmatpush1.msra.mxu0 0.0
        %1029 = vmatprep.subr.mxu0 0.0
        %1030 = vmatpush1.msra.mxu0 0.0
        %1031 = vmatprep.subr.mxu0 0.0
        %1032 = vmatpush1.msra.mxu0 0.0
        %1033 = vmatprep.subr.mxu0 0.0
        %1034 = vmatpush1.msra.mxu0 0.0
        %1035 = vmatprep.subr.mxu0 0.0
        %1036 = vmatpush1.msra.mxu0 0.0
        %1037 = vmatprep.subr.mxu0 0.0
        %1038 = vmatpush1.msra.mxu0 0.0
        %1039 = vmatprep.subr.mxu0 0.0
        %1040 = vmatpush1.msra.mxu0 0.0
        %1041 = vmatprep.subr.mxu0 0.0
        %1042 = vmatpush1.msra.mxu0 0.0
        %1043 = vmatprep.subr.mxu0 0.0
        %1044 = vmatpush1.msra.mxu0 0.0
        %1045 = vmatprep.subr.mxu0 0.0
        %1046 = vmatpush1.msra.mxu0 0.0
        %1047 = vmatprep.subr.mxu0 0.0
        %1048 = vmatpush1.msra.mxu0 0.0
        %1049 = vmatprep.subr.mxu0 0.0
        %1050 = vmatpush1.msra.mxu0 0.0
        %1051 = vmatprep.subr.mxu0 0.0
        %1052 = vmatpush1.msra.mxu0 0.0
        %1053 = vmatprep.subr.mxu0 0.0
        %1054 = vmatpush1.msra.mxu0 0.0
        %1055 = vmatprep.subr.mxu0 0.0
        %1056 = vmatpush1.msra.mxu0 0.0
        %1057 = vmatprep.subr.mxu0 0.0
        %1058 = vmatpush1.msra.mxu0 0.0
        %1059 = vmatprep.subr.mxu0 0.0
        %1060 = vmatpush1.msra.mxu0 0.0
        %1061 = vmatprep.subr.mxu0 0.0
        %1062 = vmatpush1.msra.mxu0 0.0
        %1063 = vmatprep.subr.mxu0 0.0
        %1064 = vmatpush1.msra.mxu0 0.0
        %1065 = vmatprep.mubr.f32.mxu0 0.0
        %v1066 = vand.u32 %v821, 4294901760
        %v1067 = vsub.f32 %v821, %v1066
        %1068 = vmatmul.mubr.f32.gmra.mrb[0].mxu0 %v1067
        %v1069 = vpop.f32.mrb[0].mxu0
        %v1070 = vadd.f32 %v990, %v1069
        %v1071 = vpop.f32.mrb[0].mxu0
        %1072 = vdwg.mxu0
        %1073 = vmatprep.subr.mxu0 0.0
        %v1074 = vand.u32 %v291, 4294901760
        %1075 = vmatpush1.msra.mxu0 %v1074
        %1076 = vmatprep.subr.mxu0 0.0
        %v1077 = vand.u32 %v292, 4294901760
        %1078 = vmatpush1.msra.mxu0 %v1077
        %1079 = vmatprep.subr.mxu0 0.0
        %v1080 = vand.u32 %v293, 4294901760
        %1081 = vmatpush1.msra.mxu0 %v1080
        %1082 = vmatprep.subr.mxu0 0.0
        %v1083 = vand.u32 %v294, 4294901760
        %1084 = vmatpush1.msra.mxu0 %v1083
        %1085 = vmatprep.subr.mxu0 0.0
        %1086 = vmatpush1.msra.mxu0 0.0
        %1087 = vmatprep.subr.mxu0 0.0
        %1088 = vmatpush1.msra.mxu0 0.0
        %1089 = vmatprep.subr.mxu0 0.0
        %1090 = vmatpush1.msra.mxu0 0.0
        %1091 = vmatprep.subr.mxu0 0.0
        %1092 = vmatpush1.msra.mxu0 0.0
        %1093 = vmatprep.subr.mxu0 0.0
        %1094 = vmatpush1.msra.mxu0 0.0
        %1095 = vmatprep.subr.mxu0 0.0
        %1096 = vmatpush1.msra.mxu0 0.0
        %1097 = vmatprep.subr.mxu0 0.0
        %1098 = vmatpush1.msra.mxu0 0.0
        %1099 = vmatprep.subr.mxu0 0.0
        %1100 = vmatpush1.msra.mxu0 0.0
        %1101 = vmatprep.subr.mxu0 0.0
        %1102 = vmatpush1.msra.mxu0 0.0
        %1103 = vmatprep.subr.mxu0 0.0
        %1104 = vmatpush1.msra.mxu0 0.0
        %1105 = vmatprep.subr.mxu0 0.0
        %1106 = vmatpush1.msra.mxu0 0.0
        %1107 = vmatprep.subr.mxu0 0.0
        %1108 = vmatpush1.msra.mxu0 0.0
        %1109 = vmatprep.subr.mxu0 0.0
        %1110 = vmatpush1.msra.mxu0 0.0
        %1111 = vmatprep.subr.mxu0 0.0
        %1112 = vmatpush1.msra.mxu0 0.0
        %1113 = vmatprep.subr.mxu0 0.0
        %1114 = vmatpush1.msra.mxu0 0.0
        %1115 = vmatprep.subr.mxu0 0.0
        %1116 = vmatpush1.msra.mxu0 0.0
        %1117 = vmatprep.subr.mxu0 0.0
        %1118 = vmatpush1.msra.mxu0 0.0
        %1119 = vmatprep.subr.mxu0 0.0
        %1120 = vmatpush1.msra.mxu0 0.0
        %1121 = vmatprep.subr.mxu0 0.0
        %1122 = vmatpush1.msra.mxu0 0.0
        %1123 = vmatprep.subr.mxu0 0.0
        %1124 = vmatpush1.msra.mxu0 0.0
        %1125 = vmatprep.subr.mxu0 0.0
        %1126 = vmatpush1.msra.mxu0 0.0
        %1127 = vmatprep.subr.mxu0 0.0
        %1128 = vmatpush1.msra.mxu0 0.0
        %1129 = vmatprep.subr.mxu0 0.0
        %1130 = vmatpush1.msra.mxu0 0.0
        %1131 = vmatprep.subr.mxu0 0.0
        %1132 = vmatpush1.msra.mxu0 0.0
        %1133 = vmatprep.subr.mxu0 0.0
        %1134 = vmatpush1.msra.mxu0 0.0
        %1135 = vmatprep.subr.mxu0 0.0
        %1136 = vmatpush1.msra.mxu0 0.0
        %1137 = vmatprep.subr.mxu0 0.0
        %1138 = vmatpush1.msra.mxu0 0.0
        %1139 = vmatprep.subr.mxu0 0.0
        %1140 = vmatpush1.msra.mxu0 0.0
        %1141 = vmatprep.mubr.f32.mxu0 0.0
        %v1142 = vand.u32 %v821, 4294901760
        %v1143 = vsub.f32 %v821, %v1142
        %v1144 = vand.u32 %v1143, 4294901760
        %1145 = vmatmul.mubr.f32.gmra.mrb[0].mxu0 %v1144
        %v1146 = vpop.f32.mrb[0].mxu0
        %v1147 = vadd.f32 %v1070, %v1146
        %v1148 = vpop.f32.mrb[0].mxu0
        %1149 = vdwg.mxu0
        %1150 = vmatprep.subr.mxu0 0.0
        %v1151 = vand.u32 %v291, 4294901760
        %v1152 = vsub.f32 %v291, %v1151
        %v1153 = vand.u32 %v1152, 4294901760
        %1154 = vmatpush1.msra.mxu0 %v1153
        %1155 = vmatprep.subr.mxu0 0.0
        %v1156 = vand.u32 %v292, 4294901760
        %v1157 = vsub.f32 %v292, %v1156
        %v1158 = vand.u32 %v1157, 4294901760
        %1159 = vmatpush1.msra.mxu0 %v1158
        %1160 = vmatprep.subr.mxu0 0.0
        %v1161 = vand.u32 %v293, 4294901760
        %v1162 = vsub.f32 %v293, %v1161
        %v1163 = vand.u32 %v1162, 4294901760
        %1164 = vmatpush1.msra.mxu0 %v1163
        %1165 = vmatprep.subr.mxu0 0.0
        %v1166 = vand.u32 %v294, 4294901760
        %v1167 = vsub.f32 %v294, %v1166
        %v1168 = vand.u32 %v1167, 4294901760
        %1169 = vmatpush1.msra.mxu0 %v1168
        %1170 = vmatprep.subr.mxu0 0.0
        %1171 = vmatpush1.msra.mxu0 0.0
        %1172 = vmatprep.subr.mxu0 0.0
        %1173 = vmatpush1.msra.mxu0 0.0
        %1174 = vmatprep.subr.mxu0 0.0
        %1175 = vmatpush1.msra.mxu0 0.0
        %1176 = vmatprep.subr.mxu0 0.0
        %1177 = vmatpush1.msra.mxu0 0.0
        %1178 = vmatprep.subr.mxu0 0.0
        %1179 = vmatpush1.msra.mxu0 0.0
        %1180 = vmatprep.subr.mxu0 0.0
        %1181 = vmatpush1.msra.mxu0 0.0
        %1182 = vmatprep.subr.mxu0 0.0
        %1183 = vmatpush1.msra.mxu0 0.0
        %1184 = vmatprep.subr.mxu0 0.0
        %1185 = vmatpush1.msra.mxu0 0.0
        %1186 = vmatprep.subr.mxu0 0.0
        %1187 = vmatpush1.msra.mxu0 0.0
        %1188 = vmatprep.subr.mxu0 0.0
        %1189 = vmatpush1.msra.mxu0 0.0
        %1190 = vmatprep.subr.mxu0 0.0
        %1191 = vmatpush1.msra.mxu0 0.0
        %1192 = vmatprep.subr.mxu0 0.0
        %1193 = vmatpush1.msra.mxu0 0.0
        %1194 = vmatprep.subr.mxu0 0.0
        %1195 = vmatpush1.msra.mxu0 0.0
        %1196 = vmatprep.subr.mxu0 0.0
        %1197 = vmatpush1.msra.mxu0 0.0
        %1198 = vmatprep.subr.mxu0 0.0
        %1199 = vmatpush1.msra.mxu0 0.0
        %1200 = vmatprep.subr.mxu0 0.0
        %1201 = vmatpush1.msra.mxu0 0.0
        %1202 = vmatprep.subr.mxu0 0.0
        %1203 = vmatpush1.msra.mxu0 0.0
        %1204 = vmatprep.subr.mxu0 0.0
        %1205 = vmatpush1.msra.mxu0 0.0
        %1206 = vmatprep.subr.mxu0 0.0
        %1207 = vmatpush1.msra.mxu0 0.0
        %1208 = vmatprep.subr.mxu0 0.0
        %1209 = vmatpush1.msra.mxu0 0.0
        %1210 = vmatprep.subr.mxu0 0.0
        %1211 = vmatpush1.msra.mxu0 0.0
        %1212 = vmatprep.subr.mxu0 0.0
        %1213 = vmatpush1.msra.mxu0 0.0
        %1214 = vmatprep.subr.mxu0 0.0
        %1215 = vmatpush1.msra.mxu0 0.0
        %1216 = vmatprep.subr.mxu0 0.0
        %1217 = vmatpush1.msra.mxu0 0.0
        %1218 = vmatprep.subr.mxu0 0.0
        %1219 = vmatpush1.msra.mxu0 0.0
        %1220 = vmatprep.subr.mxu0 0.0
        %1221 = vmatpush1.msra.mxu0 0.0
        %1222 = vmatprep.subr.mxu0 0.0
        %1223 = vmatpush1.msra.mxu0 0.0
        %1224 = vmatprep.subr.mxu0 0.0
        %1225 = vmatpush1.msra.mxu0 0.0
        %1226 = vmatprep.mubr.f32.mxu0 0.0
        %v1227 = vand.u32 %v821, 4294901760
        %1228 = vmatmul.mubr.f32.gmra.mrb[0].mxu0 %v1227
        %v1229 = vpop.f32.mrb[0].mxu0
        %v1230 = vadd.f32 %v1147, %v1229
        %v1231 = vpop.f32.mrb[0].mxu0
        %1232 = vdwg.mxu0
        %1233 = vmatprep.subr.mxu0 0.0
        %v1234 = vand.u32 %v291, 4294901760
        %1235 = vmatpush1.msra.mxu0 %v1234
        %1236 = vmatprep.subr.mxu0 0.0
        %v1237 = vand.u32 %v292, 4294901760
        %1238 = vmatpush1.msra.mxu0 %v1237
        %1239 = vmatprep.subr.mxu0 0.0
        %v1240 = vand.u32 %v293, 4294901760
        %1241 = vmatpush1.msra.mxu0 %v1240
        %1242 = vmatprep.subr.mxu0 0.0
        %v1243 = vand.u32 %v294, 4294901760
        %1244 = vmatpush1.msra.mxu0 %v1243
        %1245 = vmatprep.subr.mxu0 0.0
        %1246 = vmatpush1.msra.mxu0 0.0
        %1247 = vmatprep.subr.mxu0 0.0
        %1248 = vmatpush1.msra.mxu0 0.0
        %1249 = vmatprep.subr.mxu0 0.0
        %1250 = vmatpush1.msra.mxu0 0.0
        %1251 = vmatprep.subr.mxu0 0.0
        %1252 = vmatpush1.msra.mxu0 0.0
        %1253 = vmatprep.subr.mxu0 0.0
        %1254 = vmatpush1.msra.mxu0 0.0
        %1255 = vmatprep.subr.mxu0 0.0
        %1256 = vmatpush1.msra.mxu0 0.0
        %1257 = vmatprep.subr.mxu0 0.0
        %1258 = vmatpush1.msra.mxu0 0.0
        %1259 = vmatprep.subr.mxu0 0.0
        %1260 = vmatpush1.msra.mxu0 0.0
        %1261 = vmatprep.subr.mxu0 0.0
        %1262 = vmatpush1.msra.mxu0 0.0
        %1263 = vmatprep.subr.mxu0 0.0
        %1264 = vmatpush1.msra.mxu0 0.0
        %1265 = vmatprep.subr.mxu0 0.0
        %1266 = vmatpush1.msra.mxu0 0.0
        %1267 = vmatprep.subr.mxu0 0.0
        %1268 = vmatpush1.msra.mxu0 0.0
        %1269 = vmatprep.subr.mxu0 0.0
        %1270 = vmatpush1.msra.mxu0 0.0
        %1271 = vmatprep.subr.mxu0 0.0
        %1272 = vmatpush1.msra.mxu0 0.0
        %1273 = vmatprep.subr.mxu0 0.0
        %1274 = vmatpush1.msra.mxu0 0.0
        %1275 = vmatprep.subr.mxu0 0.0
        %1276 = vmatpush1.msra.mxu0 0.0
        %1277 = vmatprep.subr.mxu0 0.0
        %1278 = vmatpush1.msra.mxu0 0.0
        %1279 = vmatprep.subr.mxu0 0.0
        %1280 = vmatpush1.msra.mxu0 0.0
        %1281 = vmatprep.subr.mxu0 0.0
        %1282 = vmatpush1.msra.mxu0 0.0
        %1283 = vmatprep.subr.mxu0 0.0
        %1284 = vmatpush1.msra.mxu0 0.0
        %1285 = vmatprep.subr.mxu0 0.0
        %1286 = vmatpush1.msra.mxu0 0.0
        %1287 = vmatprep.subr.mxu0 0.0
        %1288 = vmatpush1.msra.mxu0 0.0
        %1289 = vmatprep.subr.mxu0 0.0
        %1290 = vmatpush1.msra.mxu0 0.0
        %1291 = vmatprep.subr.mxu0 0.0
        %1292 = vmatpush1.msra.mxu0 0.0
        %1293 = vmatprep.subr.mxu0 0.0
        %1294 = vmatpush1.msra.mxu0 0.0
        %1295 = vmatprep.subr.mxu0 0.0
        %1296 = vmatpush1.msra.mxu0 0.0
        %1297 = vmatprep.subr.mxu0 0.0
        %1298 = vmatpush1.msra.mxu0 0.0
        %1299 = vmatprep.subr.mxu0 0.0
        %1300 = vmatpush1.msra.mxu0 0.0
        %1301 = vmatprep.mubr.f32.mxu0 0.0
        %v1302 = vand.u32 %v821, 4294901760
        %1303 = vmatmul.mubr.f32.gmra.mrb[0].mxu0 %v1302
        %v1304 = vpop.f32.mrb[0].mxu0
        %v1305 = vadd.f32 %v1230, %v1304
        %v1306 = vpop.f32.mrb[0].mxu0
        %1307 = vdwg.mxu0
        %v1308 = vlaneseq
        %v1309 = vshrl.u32 %v1308, 7
        %v1310 = vsub.s32 0, %v1309
        %v1311 = vrot.slane %v1305, %v1310
        %v1312 = vsub.f32 %v295, %v1311
        %v1313 = vsub.f32 %v296, %v1311
        %v1314 = vsub.f32 %v297, %v1311
        %v1315 = vsub.f32 %v298, %v1311
        %v1316 = vsub.f32 %v299, %v1311
        %v1317 = vsub.f32 %v300, %v1311
        %v1318 = vsub.f32 %v301, %v1311
        %v1319 = vsub.f32 %v302, %v1311
        %v1320 = vsub.f32 %v303, %v1311
        %v1321 = vsub.f32 %v304, %v1311
        %v1322 = vsub.f32 %v305, %v1311
        %v1323 = vsub.f32 %v306, %v1311
        %v1324 = vsub.f32 %v307, %v1311
        %v1325 = vsub.f32 %v308, %v1311
        %v1326 = vsub.f32 %v309, %v1311
        %v1327 = vsub.f32 %v310, %v1311
        %v1328 = vmul.f32 %v1312, %v1312
        %v1329 = vmul.f32 %v1313, %v1313
        %v1330 = vmul.f32 %v1314, %v1314
        %v1331 = vmul.f32 %v1315, %v1315
        %v1332 = vmul.f32 %v1316, %v1316
        %v1333 = vmul.f32 %v1317, %v1317
        %v1334 = vmul.f32 %v1318, %v1318
        %v1335 = vmul.f32 %v1319, %v1319
        %v1336 = vmul.f32 %v1320, %v1320
        %v1337 = vmul.f32 %v1321, %v1321
        %v1338 = vmul.f32 %v1322, %v1322
        %v1339 = vmul.f32 %v1323, %v1323
        %v1340 = vmul.f32 %v1324, %v1324
        %v1341 = vmul.f32 %v1325, %v1325
        %v1342 = vmul.f32 %v1326, %v1326
        %v1343 = vmul.f32 %v1327, %v1327
        %v1344 = vadd.f32 %v1328, %v1329
        %v1345 = vadd.f32 %v1344, %v1330
        %v1346 = vadd.f32 %v1345, %v1331
        %v1347 = vadd.f32 %v1346, %v1332
        %v1348 = vadd.f32 %v1347, %v1333
        %v1349 = vadd.f32 %v1348, %v1334
        %v1350 = vadd.f32 %v1349, %v1335
        %v1351 = vadd.f32 %v1350, %v1336
        %v1352 = vadd.f32 %v1351, %v1337
        %v1353 = vadd.f32 %v1352, %v1338
        %v1354 = vadd.f32 %v1353, %v1339
        %v1355 = vadd.f32 %v1354, %v1340
        %v1356 = vadd.f32 %v1355, %v1341
        %v1357 = vadd.f32 %v1356, %v1342
        %v1358 = vadd.f32 %v1357, %v1343
        %v1359 = vrot.slane %v1358, 4
        %v1360 = vadd.f32 %v1358, %v1359
        %v1361 = vrot.slane %v1360, 2
        %v1362 = vadd.f32 %v1360, %v1361
        %v1363 = vrot.slane %v1362, 1
        %v1364 = vadd.f32 %v1362, %v1363
        %1365 = vmatprep.subr.mxu0 0.0
        %v1366 = vand.u32 %v291, 4294901760
        %1367 = vmatpush1.xpose.msra.mxu0 %v1366
        %1368 = vmatprep.subr.mxu0 0.0
        %v1369 = vand.u32 %v292, 4294901760
        %1370 = vmatpush1.xpose.msra.mxu0 %v1369
        %1371 = vmatprep.subr.mxu0 0.0
        %v1372 = vand.u32 %v293, 4294901760
        %1373 = vmatpush1.xpose.msra.mxu0 %v1372
        %1374 = vmatprep.subr.mxu0 0.0
        %v1375 = vand.u32 %v294, 4294901760
        %1376 = vmatpush1.xpose.msra.mxu0 %v1375
        %1377 = vmatprep.subr.mxu0 0.0
        %1378 = vmatpush1.xpose.msra.mxu0 0.0
        %1379 = vmatprep.subr.mxu0 0.0
        %1380 = vmatpush1.xpose.msra.mxu0 0.0
        %1381 = vmatprep.subr.mxu0 0.0
        %1382 = vmatpush1.xpose.msra.mxu0 0.0
        %1383 = vmatprep.subr.mxu0 0.0
        %1384 = vmatpush1.xpose.msra.mxu0 0.0
        %1385 = vmatprep.subr.mxu0 0.0
        %1386 = vmatpush1.xpose.msra.mxu0 0.0
        %1387 = vmatprep.subr.mxu0 0.0
        %1388 = vmatpush1.xpose.msra.mxu0 0.0
        %1389 = vmatprep.subr.mxu0 0.0
        %1390 = vmatpush1.xpose.msra.mxu0 0.0
        %1391 = vmatprep.subr.mxu0 0.0
        %1392 = vmatpush1.xpose.msra.mxu0 0.0
        %1393 = vmatprep.subr.mxu0 0.0
        %1394 = vmatpush1.xpose.msra.mxu0 0.0
        %1395 = vmatprep.subr.mxu0 0.0
        %1396 = vmatpush1.xpose.msra.mxu0 0.0
        %1397 = vmatprep.subr.mxu0 0.0
        %1398 = vmatpush1.xpose.msra.mxu0 0.0
        %1399 = vmatprep.subr.mxu0 0.0
        %1400 = vmatpush1.xpose.msra.mxu0 0.0
        %1401 = vmatprep.subr.mxu0 0.0
        %1402 = vmatpush1.xpose.msra.mxu0 0.0
        %1403 = vmatprep.subr.mxu0 0.0
        %1404 = vmatpush1.xpose.msra.mxu0 0.0
        %1405 = vmatprep.subr.mxu0 0.0
        %1406 = vmatpush1.xpose.msra.mxu0 0.0
        %1407 = vmatprep.subr.mxu0 0.0
        %1408 = vmatpush1.xpose.msra.mxu0 0.0
        %1409 = vmatprep.subr.mxu0 0.0
        %1410 = vmatpush1.xpose.msra.mxu0 0.0
        %1411 = vmatprep.subr.mxu0 0.0
        %1412 = vmatpush1.xpose.msra.mxu0 0.0
        %1413 = vmatprep.subr.mxu0 0.0
        %1414 = vmatpush1.xpose.msra.mxu0 0.0
        %1415 = vmatprep.subr.mxu0 0.0
        %1416 = vmatpush1.xpose.msra.mxu0 0.0
        %1417 = vmatprep.subr.mxu0 0.0
        %1418 = vmatpush1.xpose.msra.mxu0 0.0
        %1419 = vmatprep.subr.mxu0 0.0
        %1420 = vmatpush1.xpose.msra.mxu0 0.0
        %1421 = vmatprep.subr.mxu0 0.0
        %1422 = vmatpush1.xpose.msra.mxu0 0.0
        %1423 = vmatprep.subr.mxu0 0.0
        %1424 = vmatpush1.xpose.msra.mxu0 0.0
        %1425 = vmatprep.subr.mxu0 0.0
        %1426 = vmatpush1.xpose.msra.mxu0 0.0
        %1427 = vmatprep.subr.mxu0 0.0
        %1428 = vmatpush1.xpose.msra.mxu0 0.0
        %1429 = vmatprep.subr.mxu0 0.0
        %1430 = vmatpush1.xpose.msra.mxu0 0.0
        %1431 = vmatprep.subr.mxu0 0.0
        %1432 = vmatpush1.xpose.msra.mxu0 0.0
        %1433 = vmatprep.mubr.f32.mxu0 0.0
        %v1434 = vand.u32 %v1364, 4294901760
        %v1435 = vsub.f32 %v1364, %v1434
        %v1436 = vand.u32 %v1435, 4294901760
        %v1437 = vsub.f32 %v1435, %v1436
        %v1438 = vand.u32 %v1437, 4294901760
        %1439 = vmatmul.mubr.f32.gmra.mrb[0].mxu0 %v1438
        %v1440 = vpop.f32.mrb[0].mxu0
        %v1441 = vadd.f32 0.0, %v1440
        %v1442 = vpop.f32.mrb[0].mxu0
        %1443 = vdwg.mxu0
        %1444 = vmatprep.subr.mxu0 0.0
        %v1445 = vand.u32 %v291, 4294901760
        %v1446 = vsub.f32 %v291, %v1445
        %v1447 = vand.u32 %v1446, 4294901760
        %v1448 = vsub.f32 %v1446, %v1447
        %v1449 = vand.u32 %v1448, 4294901760
        %1450 = vmatpush1.xpose.msra.mxu0 %v1449
        %1451 = vmatprep.subr.mxu0 0.0
        %v1452 = vand.u32 %v292, 4294901760
        %v1453 = vsub.f32 %v292, %v1452
        %v1454 = vand.u32 %v1453, 4294901760
        %v1455 = vsub.f32 %v1453, %v1454
        %v1456 = vand.u32 %v1455, 4294901760
        %1457 = vmatpush1.xpose.msra.mxu0 %v1456
        %1458 = vmatprep.subr.mxu0 0.0
        %v1459 = vand.u32 %v293, 4294901760
        %v1460 = vsub.f32 %v293, %v1459
        %v1461 = vand.u32 %v1460, 4294901760
        %v1462 = vsub.f32 %v1460, %v1461
        %v1463 = vand.u32 %v1462, 4294901760
        %1464 = vmatpush1.xpose.msra.mxu0 %v1463
        %1465 = vmatprep.subr.mxu0 0.0
        %v1466 = vand.u32 %v294, 4294901760
        %v1467 = vsub.f32 %v294, %v1466
        %v1468 = vand.u32 %v1467, 4294901760
        %v1469 = vsub.f32 %v1467, %v1468
        %v1470 = vand.u32 %v1469, 4294901760
        %1471 = vmatpush1.xpose.msra.mxu0 %v1470
        %1472 = vmatprep.subr.mxu0 0.0
        %1473 = vmatpush1.xpose.msra.mxu0 0.0
        %1474 = vmatprep.subr.mxu0 0.0
        %1475 = vmatpush1.xpose.msra.mxu0 0.0
        %1476 = vmatprep.subr.mxu0 0.0
        %1477 = vmatpush1.xpose.msra.mxu0 0.0
        %1478 = vmatprep.subr.mxu0 0.0
        %1479 = vmatpush1.xpose.msra.mxu0 0.0
        %1480 = vmatprep.subr.mxu0 0.0
        %1481 = vmatpush1.xpose.msra.mxu0 0.0
        %1482 = vmatprep.subr.mxu0 0.0
        %1483 = vmatpush1.xpose.msra.mxu0 0.0
        %1484 = vmatprep.subr.mxu0 0.0
        %1485 = vmatpush1.xpose.msra.mxu0 0.0
        %1486 = vmatprep.subr.mxu0 0.0
        %1487 = vmatpush1.xpose.msra.mxu0 0.0
        %1488 = vmatprep.subr.mxu0 0.0
        %1489 = vmatpush1.xpose.msra.mxu0 0.0
        %1490 = vmatprep.subr.mxu0 0.0
        %1491 = vmatpush1.xpose.msra.mxu0 0.0
        %1492 = vmatprep.subr.mxu0 0.0
        %1493 = vmatpush1.xpose.msra.mxu0 0.0
        %1494 = vmatprep.subr.mxu0 0.0
        %1495 = vmatpush1.xpose.msra.mxu0 0.0
        %1496 = vmatprep.subr.mxu0 0.0
        %1497 = vmatpush1.xpose.msra.mxu0 0.0
        %1498 = vmatprep.subr.mxu0 0.0
        %1499 = vmatpush1.xpose.msra.mxu0 0.0
        %1500 = vmatprep.subr.mxu0 0.0
        %1501 = vmatpush1.xpose.msra.mxu0 0.0
        %1502 = vmatprep.subr.mxu0 0.0
        %1503 = vmatpush1.xpose.msra.mxu0 0.0
        %1504 = vmatprep.subr.mxu0 0.0
        %1505 = vmatpush1.xpose.msra.mxu0 0.0
        %1506 = vmatprep.subr.mxu0 0.0
        %1507 = vmatpush1.xpose.msra.mxu0 0.0
        %1508 = vmatprep.subr.mxu0 0.0
        %1509 = vmatpush1.xpose.msra.mxu0 0.0
        %1510 = vmatprep.subr.mxu0 0.0
        %1511 = vmatpush1.xpose.msra.mxu0 0.0
        %1512 = vmatprep.subr.mxu0 0.0
        %1513 = vmatpush1.xpose.msra.mxu0 0.0
        %1514 = vmatprep.subr.mxu0 0.0
        %1515 = vmatpush1.xpose.msra.mxu0 0.0
        %1516 = vmatprep.subr.mxu0 0.0
        %1517 = vmatpush1.xpose.msra.mxu0 0.0
        %1518 = vmatprep.subr.mxu0 0.0
        %1519 = vmatpush1.xpose.msra.mxu0 0.0
        %1520 = vmatprep.subr.mxu0 0.0
        %1521 = vmatpush1.xpose.msra.mxu0 0.0
        %1522 = vmatprep.subr.mxu0 0.0
        %1523 = vmatpush1.xpose.msra.mxu0 0.0
        %1524 = vmatprep.subr.mxu0 0.0
        %1525 = vmatpush1.xpose.msra.mxu0 0.0
        %1526 = vmatprep.subr.mxu0 0.0
        %1527 = vmatpush1.xpose.msra.mxu0 0.0
        %1528 = vmatprep.mubr.f32.mxu0 0.0
        %v1529 = vand.u32 %v1364, 4294901760
        %1530 = vmatmul.mubr.f32.gmra.mrb[0].mxu0 %v1529
        %v1531 = vpop.f32.mrb[0].mxu0
        %v1532 = vadd.f32 %v1441, %v1531
        %v1533 = vpop.f32.mrb[0].mxu0
        %1534 = vdwg.mxu0
        %1535 = vmatprep.subr.mxu0 0.0
        %v1536 = vand.u32 %v291, 4294901760
        %v1537 = vsub.f32 %v291, %v1536
        %1538 = vmatpush1.xpose.msra.mxu0 %v1537
        %1539 = vmatprep.subr.mxu0 0.0
        %v1540 = vand.u32 %v292, 4294901760
        %v1541 = vsub.f32 %v292, %v1540
        %1542 = vmatpush1.xpose.msra.mxu0 %v1541
        %1543 = vmatprep.subr.mxu0 0.0
        %v1544 = vand.u32 %v293, 4294901760
        %v1545 = vsub.f32 %v293, %v1544
        %1546 = vmatpush1.xpose.msra.mxu0 %v1545
        %1547 = vmatprep.subr.mxu0 0.0
        %v1548 = vand.u32 %v294, 4294901760
        %v1549 = vsub.f32 %v294, %v1548
        %1550 = vmatpush1.xpose.msra.mxu0 %v1549
        %1551 = vmatprep.subr.mxu0 0.0
        %1552 = vmatpush1.xpose.msra.mxu0 0.0
        %1553 = vmatprep.subr.mxu0 0.0
        %1554 = vmatpush1.xpose.msra.mxu0 0.0
        %1555 = vmatprep.subr.mxu0 0.0
        %1556 = vmatpush1.xpose.msra.mxu0 0.0
        %1557 = vmatprep.subr.mxu0 0.0
        %1558 = vmatpush1.xpose.msra.mxu0 0.0
        %1559 = vmatprep.subr.mxu0 0.0
        %1560 = vmatpush1.xpose.msra.mxu0 0.0
        %1561 = vmatprep.subr.mxu0 0.0
        %1562 = vmatpush1.xpose.msra.mxu0 0.0
        %1563 = vmatprep.subr.mxu0 0.0
        %1564 = vmatpush1.xpose.msra.mxu0 0.0
        %1565 = vmatprep.subr.mxu0 0.0
        %1566 = vmatpush1.xpose.msra.mxu0 0.0
        %1567 = vmatprep.subr.mxu0 0.0
        %1568 = vmatpush1.xpose.msra.mxu0 0.0
        %1569 = vmatprep.subr.mxu0 0.0
        %1570 = vmatpush1.xpose.msra.mxu0 0.0
        %1571 = vmatprep.subr.mxu0 0.0
        %1572 = vmatpush1.xpose.msra.mxu0 0.0
        %1573 = vmatprep.subr.mxu0 0.0
        %1574 = vmatpush1.xpose.msra.mxu0 0.0
        %1575 = vmatprep.subr.mxu0 0.0
        %1576 = vmatpush1.xpose.msra.mxu0 0.0
        %1577 = vmatprep.subr.mxu0 0.0
        %1578 = vmatpush1.xpose.msra.mxu0 0.0
        %1579 = vmatprep.subr.mxu0 0.0
        %1580 = vmatpush1.xpose.msra.mxu0 0.0
        %1581 = vmatprep.subr.mxu0 0.0
        %1582 = vmatpush1.xpose.msra.mxu0 0.0
        %1583 = vmatprep.subr.mxu0 0.0
        %1584 = vmatpush1.xpose.msra.mxu0 0.0
        %1585 = vmatprep.subr.mxu0 0.0
        %1586 = vmatpush1.xpose.msra.mxu0 0.0
        %1587 = vmatprep.subr.mxu0 0.0
        %1588 = vmatpush1.xpose.msra.mxu0 0.0
        %1589 = vmatprep.subr.mxu0 0.0
        %1590 = vmatpush1.xpose.msra.mxu0 0.0
        %1591 = vmatprep.subr.mxu0 0.0
        %1592 = vmatpush1.xpose.msra.mxu0 0.0
        %1593 = vmatprep.subr.mxu0 0.0
        %1594 = vmatpush1.xpose.msra.mxu0 0.0
        %1595 = vmatprep.subr.mxu0 0.0
        %1596 = vmatpush1.xpose.msra.mxu0 0.0
        %1597 = vmatprep.subr.mxu0 0.0
        %1598 = vmatpush1.xpose.msra.mxu0 0.0
        %1599 = vmatprep.subr.mxu0 0.0
        %1600 = vmatpush1.xpose.msra.mxu0 0.0
        %1601 = vmatprep.subr.mxu0 0.0
        %1602 = vmatpush1.xpose.msra.mxu0 0.0
        %1603 = vmatprep.subr.mxu0 0.0
        %1604 = vmatpush1.xpose.msra.mxu0 0.0
        %1605 = vmatprep.subr.mxu0 0.0
        %1606 = vmatpush1.xpose.msra.mxu0 0.0
        %1607 = vmatprep.mubr.f32.mxu0 0.0
        %v1608 = vand.u32 %v1364, 4294901760
        %v1609 = vsub.f32 %v1364, %v1608
        %1610 = vmatmul.mubr.f32.gmra.mrb[0].mxu0 %v1609
        %v1611 = vpop.f32.mrb[0].mxu0
        %v1612 = vadd.f32 %v1532, %v1611
        %v1613 = vpop.f32.mrb[0].mxu0
        %1614 = vdwg.mxu0
        %1615 = vmatprep.subr.mxu0 0.0
        %v1616 = vand.u32 %v291, 4294901760
        %1617 = vmatpush1.xpose.msra.mxu0 %v1616
        %1618 = vmatprep.subr.mxu0 0.0
        %v1619 = vand.u32 %v292, 4294901760
        %1620 = vmatpush1.xpose.msra.mxu0 %v1619
        %1621 = vmatprep.subr.mxu0 0.0
        %v1622 = vand.u32 %v293, 4294901760
        %1623 = vmatpush1.xpose.msra.mxu0 %v1622
        %1624 = vmatprep.subr.mxu0 0.0
        %v1625 = vand.u32 %v294, 4294901760
        %1626 = vmatpush1.xpose.msra.mxu0 %v1625
        %1627 = vmatprep.subr.mxu0 0.0
        %1628 = vmatpush1.xpose.msra.mxu0 0.0
        %1629 = vmatprep.subr.mxu0 0.0
        %1630 = vmatpush1.xpose.msra.mxu0 0.0
        %1631 = vmatprep.subr.mxu0 0.0
        %1632 = vmatpush1.xpose.msra.mxu0 0.0
        %1633 = vmatprep.subr.mxu0 0.0
        %1634 = vmatpush1.xpose.msra.mxu0 0.0
        %1635 = vmatprep.subr.mxu0 0.0
        %1636 = vmatpush1.xpose.msra.mxu0 0.0
        %1637 = vmatprep.subr.mxu0 0.0
        %1638 = vmatpush1.xpose.msra.mxu0 0.0
        %1639 = vmatprep.subr.mxu0 0.0
        %1640 = vmatpush1.xpose.msra.mxu0 0.0
        %1641 = vmatprep.subr.mxu0 0.0
        %1642 = vmatpush1.xpose.msra.mxu0 0.0
        %1643 = vmatprep.subr.mxu0 0.0
        %1644 = vmatpush1.xpose.msra.mxu0 0.0
        %1645 = vmatprep.subr.mxu0 0.0
        %1646 = vmatpush1.xpose.msra.mxu0 0.0
        %1647 = vmatprep.subr.mxu0 0.0
        %1648 = vmatpush1.xpose.msra.mxu0 0.0
        %1649 = vmatprep.subr.mxu0 0.0
        %1650 = vmatpush1.xpose.msra.mxu0 0.0
        %1651 = vmatprep.subr.mxu0 0.0
        %1652 = vmatpush1.xpose.msra.mxu0 0.0
        %1653 = vmatprep.subr.mxu0 0.0
        %1654 = vmatpush1.xpose.msra.mxu0 0.0
        %1655 = vmatprep.subr.mxu0 0.0
        %1656 = vmatpush1.xpose.msra.mxu0 0.0
        %1657 = vmatprep.subr.mxu0 0.0
        %1658 = vmatpush1.xpose.msra.mxu0 0.0
        %1659 = vmatprep.subr.mxu0 0.0
        %1660 = vmatpush1.xpose.msra.mxu0 0.0
        %1661 = vmatprep.subr.mxu0 0.0
        %1662 = vmatpush1.xpose.msra.mxu0 0.0
        %1663 = vmatprep.subr.mxu0 0.0
        %1664 = vmatpush1.xpose.msra.mxu0 0.0
        %1665 = vmatprep.subr.mxu0 0.0
        %1666 = vmatpush1.xpose.msra.mxu0 0.0
        %1667 = vmatprep.subr.mxu0 0.0
        %1668 = vmatpush1.xpose.msra.mxu0 0.0
        %1669 = vmatprep.subr.mxu0 0.0
        %1670 = vmatpush1.xpose.msra.mxu0 0.0
        %1671 = vmatprep.subr.mxu0 0.0
        %1672 = vmatpush1.xpose.msra.mxu0 0.0
        %1673 = vmatprep.subr.mxu0 0.0
        %1674 = vmatpush1.xpose.msra.mxu0 0.0
        %1675 = vmatprep.subr.mxu0 0.0
        %1676 = vmatpush1.xpose.msra.mxu0 0.0
        %1677 = vmatprep.subr.mxu0 0.0
        %1678 = vmatpush1.xpose.msra.mxu0 0.0
        %1679 = vmatprep.subr.mxu0 0.0
        %1680 = vmatpush1.xpose.msra.mxu0 0.0
        %1681 = vmatprep.subr.mxu0 0.0
        %1682 = vmatpush1.xpose.msra.mxu0 0.0
        %1683 = vmatprep.mubr.f32.mxu0 0.0
        %v1684 = vand.u32 %v1364, 4294901760
        %v1685 = vsub.f32 %v1364, %v1684
        %v1686 = vand.u32 %v1685, 4294901760
        %1687 = vmatmul.mubr.f32.gmra.mrb[0].mxu0 %v1686
        %v1688 = vpop.f32.mrb[0].mxu0
        %v1689 = vadd.f32 %v1612, %v1688
        %v1690 = vpop.f32.mrb[0].mxu0
        %1691 = vdwg.mxu0
        %1692 = vmatprep.subr.mxu0 0.0
        %v1693 = vand.u32 %v291, 4294901760
        %v1694 = vsub.f32 %v291, %v1693
        %v1695 = vand.u32 %v1694, 4294901760
        %1696 = vmatpush1.xpose.msra.mxu0 %v1695
        %1697 = vmatprep.subr.mxu0 0.0
        %v1698 = vand.u32 %v292, 4294901760
        %v1699 = vsub.f32 %v292, %v1698
        %v1700 = vand.u32 %v1699, 4294901760
        %1701 = vmatpush1.xpose.msra.mxu0 %v1700
        %1702 = vmatprep.subr.mxu0 0.0
        %v1703 = vand.u32 %v293, 4294901760
        %v1704 = vsub.f32 %v293, %v1703
        %v1705 = vand.u32 %v1704, 4294901760
        %1706 = vmatpush1.xpose.msra.mxu0 %v1705
        %1707 = vmatprep.subr.mxu0 0.0
        %v1708 = vand.u32 %v294, 4294901760
        %v1709 = vsub.f32 %v294, %v1708
        %v1710 = vand.u32 %v1709, 4294901760
        %1711 = vmatpush1.xpose.msra.mxu0 %v1710
        %1712 = vmatprep.subr.mxu0 0.0
        %1713 = vmatpush1.xpose.msra.mxu0 0.0
        %1714 = vmatprep.subr.mxu0 0.0
        %1715 = vmatpush1.xpose.msra.mxu0 0.0
        %1716 = vmatprep.subr.mxu0 0.0
        %1717 = vmatpush1.xpose.msra.mxu0 0.0
        %1718 = vmatprep.subr.mxu0 0.0
        %1719 = vmatpush1.xpose.msra.mxu0 0.0
        %1720 = vmatprep.subr.mxu0 0.0
        %1721 = vmatpush1.xpose.msra.mxu0 0.0
        %1722 = vmatprep.subr.mxu0 0.0
        %1723 = vmatpush1.xpose.msra.mxu0 0.0
        %1724 = vmatprep.subr.mxu0 0.0
        %1725 = vmatpush1.xpose.msra.mxu0 0.0
        %1726 = vmatprep.subr.mxu0 0.0
        %1727 = vmatpush1.xpose.msra.mxu0 0.0
        %1728 = vmatprep.subr.mxu0 0.0
        %1729 = vmatpush1.xpose.msra.mxu0 0.0
        %1730 = vmatprep.subr.mxu0 0.0
        %1731 = vmatpush1.xpose.msra.mxu0 0.0
        %1732 = vmatprep.subr.mxu0 0.0
        %1733 = vmatpush1.xpose.msra.mxu0 0.0
        %1734 = vmatprep.subr.mxu0 0.0
        %1735 = vmatpush1.xpose.msra.mxu0 0.0
        %1736 = vmatprep.subr.mxu0 0.0
        %1737 = vmatpush1.xpose.msra.mxu0 0.0
        %1738 = vmatprep.subr.mxu0 0.0
        %1739 = vmatpush1.xpose.msra.mxu0 0.0
        %1740 = vmatprep.subr.mxu0 0.0
        %1741 = vmatpush1.xpose.msra.mxu0 0.0
        %1742 = vmatprep.subr.mxu0 0.0
        %1743 = vmatpush1.xpose.msra.mxu0 0.0
        %1744 = vmatprep.subr.mxu0 0.0
        %1745 = vmatpush1.xpose.msra.mxu0 0.0
        %1746 = vmatprep.subr.mxu0 0.0
        %1747 = vmatpush1.xpose.msra.mxu0 0.0
        %1748 = vmatprep.subr.mxu0 0.0
        %1749 = vmatpush1.xpose.msra.mxu0 0.0
        %1750 = vmatprep.subr.mxu0 0.0
        %1751 = vmatpush1.xpose.msra.mxu0 0.0
        %1752 = vmatprep.subr.mxu0 0.0
        %1753 = vmatpush1.xpose.msra.mxu0 0.0
        %1754 = vmatprep.subr.mxu0 0.0
        %1755 = vmatpush1.xpose.msra.mxu0 0.0
        %1756 = vmatprep.subr.mxu0 0.0
        %1757 = vmatpush1.xpose.msra.mxu0 0.0
        %1758 = vmatprep.subr.mxu0 0.0
        %1759 = vmatpush1.xpose.msra.mxu0 0.0
        %1760 = vmatprep.subr.mxu0 0.0
        %1761 = vmatpush1.xpose.msra.mxu0 0.0
        %1762 = vmatprep.subr.mxu0 0.0
        %1763 = vmatpush1.xpose.msra.mxu0 0.0
        %1764 = vmatprep.subr.mxu0 0.0
        %1765 = vmatpush1.xpose.msra.mxu0 0.0
        %1766 = vmatprep.subr.mxu0 0.0
        %1767 = vmatpush1.xpose.msra.mxu0 0.0
        %1768 = vmatprep.mubr.f32.mxu0 0.0
        %v1769 = vand.u32 %v1364, 4294901760
        %1770 = vmatmul.mubr.f32.gmra.mrb[0].mxu0 %v1769
        %v1771 = vpop.f32.mrb[0].mxu0
        %v1772 = vadd.f32 %v1689, %v1771
        %v1773 = vpop.f32.mrb[0].mxu0
        %1774 = vdwg.mxu0
        %1775 = vmatprep.subr.mxu0 0.0
        %v1776 = vand.u32 %v291, 4294901760
        %1777 = vmatpush1.xpose.msra.mxu0 %v1776
        %1778 = vmatprep.subr.mxu0 0.0
        %v1779 = vand.u32 %v292, 4294901760
        %1780 = vmatpush1.xpose.msra.mxu0 %v1779
        %1781 = vmatprep.subr.mxu0 0.0
        %v1782 = vand.u32 %v293, 4294901760
        %1783 = vmatpush1.xpose.msra.mxu0 %v1782
        %1784 = vmatprep.subr.mxu0 0.0
        %v1785 = vand.u32 %v294, 4294901760
        %1786 = vmatpush1.xpose.msra.mxu0 %v1785
        %1787 = vmatprep.subr.mxu0 0.0
        %1788 = vmatpush1.xpose.msra.mxu0 0.0
        %1789 = vmatprep.subr.mxu0 0.0
        %1790 = vmatpush1.xpose.msra.mxu0 0.0
        %1791 = vmatprep.subr.mxu0 0.0
        %1792 = vmatpush1.xpose.msra.mxu0 0.0
        %1793 = vmatprep.subr.mxu0 0.0
        %1794 = vmatpush1.xpose.msra.mxu0 0.0
        %1795 = vmatprep.subr.mxu0 0.0
        %1796 = vmatpush1.xpose.msra.mxu0 0.0
        %1797 = vmatprep.subr.mxu0 0.0
        %1798 = vmatpush1.xpose.msra.mxu0 0.0
        %1799 = vmatprep.subr.mxu0 0.0
        %1800 = vmatpush1.xpose.msra.mxu0 0.0
        %1801 = vmatprep.subr.mxu0 0.0
        %1802 = vmatpush1.xpose.msra.mxu0 0.0
        %1803 = vmatprep.subr.mxu0 0.0
        %1804 = vmatpush1.xpose.msra.mxu0 0.0
        %1805 = vmatprep.subr.mxu0 0.0
        %1806 = vmatpush1.xpose.msra.mxu0 0.0
        %1807 = vmatprep.subr.mxu0 0.0
        %1808 = vmatpush1.xpose.msra.mxu0 0.0
        %1809 = vmatprep.subr.mxu0 0.0
        %1810 = vmatpush1.xpose.msra.mxu0 0.0
        %1811 = vmatprep.subr.mxu0 0.0
        %1812 = vmatpush1.xpose.msra.mxu0 0.0
        %1813 = vmatprep.subr.mxu0 0.0
        %1814 = vmatpush1.xpose.msra.mxu0 0.0
        %1815 = vmatprep.subr.mxu0 0.0
        %1816 = vmatpush1.xpose.msra.mxu0 0.0
        %1817 = vmatprep.subr.mxu0 0.0
        %1818 = vmatpush1.xpose.msra.mxu0 0.0
        %1819 = vmatprep.subr.mxu0 0.0
        %1820 = vmatpush1.xpose.msra.mxu0 0.0
        %1821 = vmatprep.subr.mxu0 0.0
        %1822 = vmatpush1.xpose.msra.mxu0 0.0
        %1823 = vmatprep.subr.mxu0 0.0
        %1824 = vmatpush1.xpose.msra.mxu0 0.0
        %1825 = vmatprep.subr.mxu0 0.0
        %1826 = vmatpush1.xpose.msra.mxu0 0.0
        %1827 = vmatprep.subr.mxu0 0.0
        %1828 = vmatpush1.xpose.msra.mxu0 0.0
        %1829 = vmatprep.subr.mxu0 0.0
        %1830 = vmatpush1.xpose.msra.mxu0 0.0
        %1831 = vmatprep.subr.mxu0 0.0
        %1832 = vmatpush1.xpose.msra.mxu0 0.0
        %1833 = vmatprep.subr.mxu0 0.0
        %1834 = vmatpush1.xpose.msra.mxu0 0.0
        %1835 = vmatprep.subr.mxu0 0.0
        %1836 = vmatpush1.xpose.msra.mxu0 0.0
        %1837 = vmatprep.subr.mxu0 0.0
        %1838 = vmatpush1.xpose.msra.mxu0 0.0
        %1839 = vmatprep.subr.mxu0 0.0
        %1840 = vmatpush1.xpose.msra.mxu0 0.0
        %1841 = vmatprep.subr.mxu0 0.0
        %1842 = vmatpush1.xpose.msra.mxu0 0.0
        %1843 = vmatprep.mubr.f32.mxu0 0.0
        %v1844 = vand.u32 %v1364, 4294901760
        %1845 = vmatmul.mubr.f32.gmra.mrb[0].mxu0 %v1844
        %v1846 = vpop.f32.mrb[0].mxu0
        %v1847 = vadd.f32 %v1772, %v1846
        %v1848 = vpop.f32.mrb[0].mxu0
        %1849 = vdwg.mxu0
        %s1850 = scvt.s32.f32 %s32
        %s1851 = smul.f32 %s1850, 512.0
        %s1852 = sadd.f32 %s1851, 512.0
        %v1853 = vld [vmem:[#allocation2] sm:$0x1]
        %v1854 = vsub.f32 %v818, %v1853
        %v1855 = vstv %s1852
        %v1856 = vrcp.pop %v1855
        %s1857 = vtos %v1856
        %s1858 = smul.f32 512.0, %s1857
        %v1859 = vstv %s1858
        %v1860 = vmul.f32 %v1854, %v1859
        %v1861 = vadd.f32 %v1853, %v1860
        %vm1862 = vcmask 253952
        %1863 = vst.msk [vmem:[#allocation2] sm:$0x1] %vm1862, %v1861
        %v1864 = vld [vmem:[#allocation3] sm:$0x1]
        %v1865 = vadd.f32 %v1864, %v1847
        %v1866 = vmul.f32 %v1854, %v1854
        %s1867 = smul.f32 %s1851, 512.0
        %v1868 = vstv %s1852
        %v1869 = vrcp.pop %v1868
        %s1870 = vtos %v1869
        %s1871 = smul.f32 %s1867, %s1870
        %v1872 = vstv %s1871
        %v1873 = vmul.f32 %v1866, %v1872
        %v1874 = vadd.f32 %v1865, %v1873
        %1875 = vst.msk [vmem:[#allocation3] sm:$0x1] %vm1862, %v1874
        %p1876 = scmp.eq.s32.totalorder %s32, 1
        // Predicated region
        $region49: #{tpu_custom_call.1} parent=35 // pred_check
          %p1877 = pneg %p1876
        $region50: #{tpu_custom_call.1} parent=35 // pred_check_branch
          %1879 = sbr.rel (%p1877) target = $region52
        $region51: #{tpu_custom_call.1} parent=35 // pred_region
          %v1880 = vld [vmem:[#allocation3] sm:$0x1]
          %v1881 = vstv %s1852
          %v1882 = vrcp.pop %v1881
          %v1883 = vmul.f32 %v1880, %v1882
          %v1884 = vadd.f32 %v1883, 1e-05
          %v1885 = vrsqrt.pop %v1884
          %v1886 = vld [vmem:[#allocation2] sm:$0x1]
          %v1888 = vsel %vm819, %v1886, 0
          %1890 = vmatprep.subr.mxu0 0.0
          %v1891 = vand.u32 %v291, 4294901760
          %1892 = vmatpush1.msra.mxu0 %v1891
          %1893 = vmatprep.subr.mxu0 0.0
          %v1894 = vand.u32 %v292, 4294901760
          %1895 = vmatpush1.msra.mxu0 %v1894
          %1896 = vmatprep.subr.mxu0 0.0
          %v1897 = vand.u32 %v293, 4294901760
          %1898 = vmatpush1.msra.mxu0 %v1897
          %1899 = vmatprep.subr.mxu0 0.0
          %v1900 = vand.u32 %v294, 4294901760
          %1901 = vmatpush1.msra.mxu0 %v1900
          %1902 = vmatprep.subr.mxu0 0.0
          %1903 = vmatpush1.msra.mxu0 0.0
          %1904 = vmatprep.subr.mxu0 0.0
          %1905 = vmatpush1.msra.mxu0 0.0
          %1906 = vmatprep.subr.mxu0 0.0
          %1907 = vmatpush1.msra.mxu0 0.0
          %1908 = vmatprep.subr.mxu0 0.0
          %1909 = vmatpush1.msra.mxu0 0.0
          %1910 = vmatprep.subr.mxu0 0.0
          %1911 = vmatpush1.msra.mxu0 0.0
          %1912 = vmatprep.subr.mxu0 0.0
          %1913 = vmatpush1.msra.mxu0 0.0
          %1914 = vmatprep.subr.mxu0 0.0
          %1915 = vmatpush1.msra.mxu0 0.0
          %1916 = vmatprep.subr.mxu0 0.0
          %1917 = vmatpush1.msra.mxu0 0.0
          %1918 = vmatprep.subr.mxu0 0.0
          %1919 = vmatpush1.msra.mxu0 0.0
          %1920 = vmatprep.subr.mxu0 0.0
          %1921 = vmatpush1.msra.mxu0 0.0
          %1922 = vmatprep.subr.mxu0 0.0
          %1923 = vmatpush1.msra.mxu0 0.0
          %1924 = vmatprep.subr.mxu0 0.0
          %1925 = vmatpush1.msra.mxu0 0.0
          %1926 = vmatprep.subr.mxu0 0.0
          %1927 = vmatpush1.msra.mxu0 0.0
          %1928 = vmatprep.subr.mxu0 0.0
          %1929 = vmatpush1.msra.mxu0 0.0
          %1930 = vmatprep.subr.mxu0 0.0
          %1931 = vmatpush1.msra.mxu0 0.0
          %1932 = vmatprep.subr.mxu0 0.0
          %1933 = vmatpush1.msra.mxu0 0.0
          %1934 = vmatprep.subr.mxu0 0.0
          %1935 = vmatpush1.msra.mxu0 0.0
          %1936 = vmatprep.subr.mxu0 0.0
          %1937 = vmatpush1.msra.mxu0 0.0
          %1938 = vmatprep.subr.mxu0 0.0
          %1939 = vmatpush1.msra.mxu0 0.0
          %1940 = vmatprep.subr.mxu0 0.0
          %1941 = vmatpush1.msra.mxu0 0.0
          %1942 = vmatprep.subr.mxu0 0.0
          %1943 = vmatpush1.msra.mxu0 0.0
          %1944 = vmatprep.subr.mxu0 0.0
          %1945 = vmatpush1.msra.mxu0 0.0
          %1946 = vmatprep.subr.mxu0 0.0
          %1947 = vmatpush1.msra.mxu0 0.0
          %1948 = vmatprep.subr.mxu0 0.0
          %1949 = vmatpush1.msra.mxu0 0.0
          %1950 = vmatprep.subr.mxu0 0.0
          %1951 = vmatpush1.msra.mxu0 0.0
          %1952 = vmatprep.subr.mxu0 0.0
          %1953 = vmatpush1.msra.mxu0 0.0
          %1954 = vmatprep.subr.mxu0 0.0
          %1955 = vmatpush1.msra.mxu0 0.0
          %1956 = vmatprep.subr.mxu0 0.0
          %1957 = vmatpush1.msra.mxu0 0.0
          %1958 = vmatprep.mubr.f32.mxu0 0.0
          %v1959 = vand.u32 %v1888, 4294901760
          %v1960 = vsub.f32 %v1888, %v1959
          %v1961 = vand.u32 %v1960, 4294901760
          %v1962 = vsub.f32 %v1960, %v1961
          %v1963 = vand.u32 %v1962, 4294901760
          %1964 = vmatmul.mubr.f32.gmra.mrb[0].mxu0 %v1963
          %v1965 = vpop.f32.mrb[0].mxu0
          %v1966 = vadd.f32 0.0, %v1965
          %v1967 = vpop.f32.mrb[0].mxu0
          %1968 = vdwg.mxu0
          %1969 = vmatprep.subr.mxu0 0.0
          %v1970 = vand.u32 %v291, 4294901760
          %v1971 = vsub.f32 %v291, %v1970
          %v1972 = vand.u32 %v1971, 4294901760
          %v1973 = vsub.f32 %v1971, %v1972
          %v1974 = vand.u32 %v1973, 4294901760
          %1975 = vmatpush1.msra.mxu0 %v1974
          %1976 = vmatprep.subr.mxu0 0.0
          %v1977 = vand.u32 %v292, 4294901760
          %v1978 = vsub.f32 %v292, %v1977
          %v1979 = vand.u32 %v1978, 4294901760
          %v1980 = vsub.f32 %v1978, %v1979
          %v1981 = vand.u32 %v1980, 4294901760
          %1982 = vmatpush1.msra.mxu0 %v1981
          %1983 = vmatprep.subr.mxu0 0.0
          %v1984 = vand.u32 %v293, 4294901760
          %v1985 = vsub.f32 %v293, %v1984
          %v1986 = vand.u32 %v1985, 4294901760
          %v1987 = vsub.f32 %v1985, %v1986
          %v1988 = vand.u32 %v1987, 4294901760
          %1989 = vmatpush1.msra.mxu0 %v1988
          %1990 = vmatprep.subr.mxu0 0.0
          %v1991 = vand.u32 %v294, 4294901760
          %v1992 = vsub.f32 %v294, %v1991
          %v1993 = vand.u32 %v1992, 4294901760
          %v1994 = vsub.f32 %v1992, %v1993
          %v1995 = vand.u32 %v1994, 4294901760
          %1996 = vmatpush1.msra.mxu0 %v1995
          %1997 = vmatprep.subr.mxu0 0.0
          %1998 = vmatpush1.msra.mxu0 0.0
          %1999 = vmatprep.subr.mxu0 0.0
          %2000 = vmatpush1.msra.mxu0 0.0
          %2001 = vmatprep.subr.mxu0 0.0
          %2002 = vmatpush1.msra.mxu0 0.0
          %2003 = vmatprep.subr.mxu0 0.0
          %2004 = vmatpush1.msra.mxu0 0.0
          %2005 = vmatprep.subr.mxu0 0.0
          %2006 = vmatpush1.msra.mxu0 0.0
          %2007 = vmatprep.subr.mxu0 0.0
          %2008 = vmatpush1.msra.mxu0 0.0
          %2009 = vmatprep.subr.mxu0 0.0
          %2010 = vmatpush1.msra.mxu0 0.0
          %2011 = vmatprep.subr.mxu0 0.0
          %2012 = vmatpush1.msra.mxu0 0.0
          %2013 = vmatprep.subr.mxu0 0.0
          %2014 = vmatpush1.msra.mxu0 0.0
          %2015 = vmatprep.subr.mxu0 0.0
          %2016 = vmatpush1.msra.mxu0 0.0
          %2017 = vmatprep.subr.mxu0 0.0
          %2018 = vmatpush1.msra.mxu0 0.0
          %2019 = vmatprep.subr.mxu0 0.0
          %2020 = vmatpush1.msra.mxu0 0.0
          %2021 = vmatprep.subr.mxu0 0.0
          %2022 = vmatpush1.msra.mxu0 0.0
          %2023 = vmatprep.subr.mxu0 0.0
          %2024 = vmatpush1.msra.mxu0 0.0
          %2025 = vmatprep.subr.mxu0 0.0
          %2026 = vmatpush1.msra.mxu0 0.0
          %2027 = vmatprep.subr.mxu0 0.0
          %2028 = vmatpush1.msra.mxu0 0.0
          %2029 = vmatprep.subr.mxu0 0.0
          %2030 = vmatpush1.msra.mxu0 0.0
          %2031 = vmatprep.subr.mxu0 0.0
          %2032 = vmatpush1.msra.mxu0 0.0
          %2033 = vmatprep.subr.mxu0 0.0
          %2034 = vmatpush1.msra.mxu0 0.0
          %2035 = vmatprep.subr.mxu0 0.0
          %2036 = vmatpush1.msra.mxu0 0.0
          %2037 = vmatprep.subr.mxu0 0.0
          %2038 = vmatpush1.msra.mxu0 0.0
          %2039 = vmatprep.subr.mxu0 0.0
          %2040 = vmatpush1.msra.mxu0 0.0
          %2041 = vmatprep.subr.mxu0 0.0
          %2042 = vmatpush1.msra.mxu0 0.0
          %2043 = vmatprep.subr.mxu0 0.0
          %2044 = vmatpush1.msra.mxu0 0.0
          %2045 = vmatprep.subr.mxu0 0.0
          %2046 = vmatpush1.msra.mxu0 0.0
          %2047 = vmatprep.subr.mxu0 0.0
          %2048 = vmatpush1.msra.mxu0 0.0
          %2049 = vmatprep.subr.mxu0 0.0
          %2050 = vmatpush1.msra.mxu0 0.0
          %2051 = vmatprep.subr.mxu0 0.0
          %2052 = vmatpush1.msra.mxu0 0.0
          %2053 = vmatprep.mubr.f32.mxu0 0.0
          %v2054 = vand.u32 %v1888, 4294901760
          %2055 = vmatmul.mubr.f32.gmra.mrb[0].mxu0 %v2054
          %v2056 = vpop.f32.mrb[0].mxu0
          %v2057 = vadd.f32 %v1966, %v2056
          %v2058 = vpop.f32.mrb[0].mxu0
          %2059 = vdwg.mxu0
          %2060 = vmatprep.subr.mxu0 0.0
          %v2061 = vand.u32 %v291, 4294901760
          %v2062 = vsub.f32 %v291, %v2061
          %2063 = vmatpush1.msra.mxu0 %v2062
          %2064 = vmatprep.subr.mxu0 0.0
          %v2065 = vand.u32 %v292, 4294901760
          %v2066 = vsub.f32 %v292, %v2065
          %2067 = vmatpush1.msra.mxu0 %v2066
          %2068 = vmatprep.subr.mxu0 0.0
          %v2069 = vand.u32 %v293, 4294901760
          %v2070 = vsub.f32 %v293, %v2069
          %2071 = vmatpush1.msra.mxu0 %v2070
          %2072 = vmatprep.subr.mxu0 0.0
          %v2073 = vand.u32 %v294, 4294901760
          %v2074 = vsub.f32 %v294, %v2073
          %2075 = vmatpush1.msra.mxu0 %v2074
          %2076 = vmatprep.subr.mxu0 0.0
          %2077 = vmatpush1.msra.mxu0 0.0
          %2078 = vmatprep.subr.mxu0 0.0
          %2079 = vmatpush1.msra.mxu0 0.0
          %2080 = vmatprep.subr.mxu0 0.0
          %2081 = vmatpush1.msra.mxu0 0.0
          %2082 = vmatprep.subr.mxu0 0.0
          %2083 = vmatpush1.msra.mxu0 0.0
          %2084 = vmatprep.subr.mxu0 0.0
          %2085 = vmatpush1.msra.mxu0 0.0
          %2086 = vmatprep.subr.mxu0 0.0
          %2087 = vmatpush1.msra.mxu0 0.0
          %2088 = vmatprep.subr.mxu0 0.0
          %2089 = vmatpush1.msra.mxu0 0.0
          %2090 = vmatprep.subr.mxu0 0.0
          %2091 = vmatpush1.msra.mxu0 0.0
          %2092 = vmatprep.subr.mxu0 0.0
          %2093 = vmatpush1.msra.mxu0 0.0
          %2094 = vmatprep.subr.mxu0 0.0
          %2095 = vmatpush1.msra.mxu0 0.0
          %2096 = vmatprep.subr.mxu0 0.0
          %2097 = vmatpush1.msra.mxu0 0.0
          %2098 = vmatprep.subr.mxu0 0.0
          %2099 = vmatpush1.msra.mxu0 0.0
          %2100 = vmatprep.subr.mxu0 0.0
          %2101 = vmatpush1.msra.mxu0 0.0
          %2102 = vmatprep.subr.mxu0 0.0
          %2103 = vmatpush1.msra.mxu0 0.0
          %2104 = vmatprep.subr.mxu0 0.0
          %2105 = vmatpush1.msra.mxu0 0.0
          %2106 = vmatprep.subr.mxu0 0.0
          %2107 = vmatpush1.msra.mxu0 0.0
          %2108 = vmatprep.subr.mxu0 0.0
          %2109 = vmatpush1.msra.mxu0 0.0
          %2110 = vmatprep.subr.mxu0 0.0
          %2111 = vmatpush1.msra.mxu0 0.0
          %2112 = vmatprep.subr.mxu0 0.0
          %2113 = vmatpush1.msra.mxu0 0.0
          %2114 = vmatprep.subr.mxu0 0.0
          %2115 = vmatpush1.msra.mxu0 0.0
          %2116 = vmatprep.subr.mxu0 0.0
          %2117 = vmatpush1.msra.mxu0 0.0
          %2118 = vmatprep.subr.mxu0 0.0
          %2119 = vmatpush1.msra.mxu0 0.0
          %2120 = vmatprep.subr.mxu0 0.0
          %2121 = vmatpush1.msra.mxu0 0.0
          %2122 = vmatprep.subr.mxu0 0.0
          %2123 = vmatpush1.msra.mxu0 0.0
          %2124 = vmatprep.subr.mxu0 0.0
          %2125 = vmatpush1.msra.mxu0 0.0
          %2126 = vmatprep.subr.mxu0 0.0
          %2127 = vmatpush1.msra.mxu0 0.0
          %2128 = vmatprep.subr.mxu0 0.0
          %2129 = vmatpush1.msra.mxu0 0.0
          %2130 = vmatprep.subr.mxu0 0.0
          %2131 = vmatpush1.msra.mxu0 0.0
          %2132 = vmatprep.mubr.f32.mxu0 0.0
          %v2133 = vand.u32 %v1888, 4294901760
          %v2134 = vsub.f32 %v1888, %v2133
          %2135 = vmatmul.mubr.f32.gmra.mrb[0].mxu0 %v2134
          %v2136 = vpop.f32.mrb[0].mxu0
          %v2137 = vadd.f32 %v2057, %v2136
          %v2138 = vpop.f32.mrb[0].mxu0
          %2139 = vdwg.mxu0
          %2140 = vmatprep.subr.mxu0 0.0
          %v2141 = vand.u32 %v291, 4294901760
          %2142 = vmatpush1.msra.mxu0 %v2141
          %2143 = vmatprep.subr.mxu0 0.0
          %v2144 = vand.u32 %v292, 4294901760
          %2145 = vmatpush1.msra.mxu0 %v2144
          %2146 = vmatprep.subr.mxu0 0.0
          %v2147 = vand.u32 %v293, 4294901760
          %2148 = vmatpush1.msra.mxu0 %v2147
          %2149 = vmatprep.subr.mxu0 0.0
          %v2150 = vand.u32 %v294, 4294901760
          %2151 = vmatpush1.msra.mxu0 %v2150
          %2152 = vmatprep.subr.mxu0 0.0
          %2153 = vmatpush1.msra.mxu0 0.0
          %2154 = vmatprep.subr.mxu0 0.0
          %2155 = vmatpush1.msra.mxu0 0.0
          %2156 = vmatprep.subr.mxu0 0.0
          %2157 = vmatpush1.msra.mxu0 0.0
          %2158 = vmatprep.subr.mxu0 0.0
          %2159 = vmatpush1.msra.mxu0 0.0
          %2160 = vmatprep.subr.mxu0 0.0
          %2161 = vmatpush1.msra.mxu0 0.0
          %2162 = vmatprep.subr.mxu0 0.0
          %2163 = vmatpush1.msra.mxu0 0.0
          %2164 = vmatprep.subr.mxu0 0.0
          %2165 = vmatpush1.msra.mxu0 0.0
          %2166 = vmatprep.subr.mxu0 0.0
          %2167 = vmatpush1.msra.mxu0 0.0
          %2168 = vmatprep.subr.mxu0 0.0
          %2169 = vmatpush1.msra.mxu0 0.0
          %2170 = vmatprep.subr.mxu0 0.0
          %2171 = vmatpush1.msra.mxu0 0.0
          %2172 = vmatprep.subr.mxu0 0.0
          %2173 = vmatpush1.msra.mxu0 0.0
          %2174 = vmatprep.subr.mxu0 0.0
          %2175 = vmatpush1.msra.mxu0 0.0
          %2176 = vmatprep.subr.mxu0 0.0
          %2177 = vmatpush1.msra.mxu0 0.0
          %2178 = vmatprep.subr.mxu0 0.0
          %2179 = vmatpush1.msra.mxu0 0.0
          %2180 = vmatprep.subr.mxu0 0.0
          %2181 = vmatpush1.msra.mxu0 0.0
          %2182 = vmatprep.subr.mxu0 0.0
          %2183 = vmatpush1.msra.mxu0 0.0
          %2184 = vmatprep.subr.mxu0 0.0
          %2185 = vmatpush1.msra.mxu0 0.0
          %2186 = vmatprep.subr.mxu0 0.0
          %2187 = vmatpush1.msra.mxu0 0.0
          %2188 = vmatprep.subr.mxu0 0.0
          %2189 = vmatpush1.msra.mxu0 0.0
          %2190 = vmatprep.subr.mxu0 0.0
          %2191 = vmatpush1.msra.mxu0 0.0
          %2192 = vmatprep.subr.mxu0 0.0
          %2193 = vmatpush1.msra.mxu0 0.0
          %2194 = vmatprep.subr.mxu0 0.0
          %2195 = vmatpush1.msra.mxu0 0.0
          %2196 = vmatprep.subr.mxu0 0.0
          %2197 = vmatpush1.msra.mxu0 0.0
          %2198 = vmatprep.subr.mxu0 0.0
          %2199 = vmatpush1.msra.mxu0 0.0
          %2200 = vmatprep.subr.mxu0 0.0
          %2201 = vmatpush1.msra.mxu0 0.0
          %2202 = vmatprep.subr.mxu0 0.0
          %2203 = vmatpush1.msra.mxu0 0.0
          %2204 = vmatprep.subr.mxu0 0.0
          %2205 = vmatpush1.msra.mxu0 0.0
          %2206 = vmatprep.subr.mxu0 0.0
          %2207 = vmatpush1.msra.mxu0 0.0
          %2208 = vmatprep.mubr.f32.mxu0 0.0
          %v2209 = vand.u32 %v1888, 4294901760
          %v2210 = vsub.f32 %v1888, %v2209
          %v2211 = vand.u32 %v2210, 4294901760
          %2212 = vmatmul.mubr.f32.gmra.mrb[0].mxu0 %v2211
          %v2213 = vpop.f32.mrb[0].mxu0
          %v2214 = vadd.f32 %v2137, %v2213
          %v2215 = vpop.f32.mrb[0].mxu0
          %2216 = vdwg.mxu0
          %2217 = vmatprep.subr.mxu0 0.0
          %v2218 = vand.u32 %v291, 4294901760
          %v2219 = vsub.f32 %v291, %v2218
          %v2220 = vand.u32 %v2219, 4294901760
          %2221 = vmatpush1.msra.mxu0 %v2220
          %2222 = vmatprep.subr.mxu0 0.0
          %v2223 = vand.u32 %v292, 4294901760
          %v2224 = vsub.f32 %v292, %v2223
          %v2225 = vand.u32 %v2224, 4294901760
          %2226 = vmatpush1.msra.mxu0 %v2225
          %2227 = vmatprep.subr.mxu0 0.0
          %v2228 = vand.u32 %v293, 4294901760
          %v2229 = vsub.f32 %v293, %v2228
          %v2230 = vand.u32 %v2229, 4294901760
          %2231 = vmatpush1.msra.mxu0 %v2230
          %2232 = vmatprep.subr.mxu0 0.0
          %v2233 = vand.u32 %v294, 4294901760
          %v2234 = vsub.f32 %v294, %v2233
          %v2235 = vand.u32 %v2234, 4294901760
          %2236 = vmatpush1.msra.mxu0 %v2235
          %2237 = vmatprep.subr.mxu0 0.0
          %2238 = vmatpush1.msra.mxu0 0.0
          %2239 = vmatprep.subr.mxu0 0.0
          %2240 = vmatpush1.msra.mxu0 0.0
          %2241 = vmatprep.subr.mxu0 0.0
          %2242 = vmatpush1.msra.mxu0 0.0
          %2243 = vmatprep.subr.mxu0 0.0
          %2244 = vmatpush1.msra.mxu0 0.0
          %2245 = vmatprep.subr.mxu0 0.0
          %2246 = vmatpush1.msra.mxu0 0.0
          %2247 = vmatprep.subr.mxu0 0.0
          %2248 = vmatpush1.msra.mxu0 0.0
          %2249 = vmatprep.subr.mxu0 0.0
          %2250 = vmatpush1.msra.mxu0 0.0
          %2251 = vmatprep.subr.mxu0 0.0
          %2252 = vmatpush1.msra.mxu0 0.0
          %2253 = vmatprep.subr.mxu0 0.0
          %2254 = vmatpush1.msra.mxu0 0.0
          %2255 = vmatprep.subr.mxu0 0.0
          %2256 = vmatpush1.msra.mxu0 0.0
          %2257 = vmatprep.subr.mxu0 0.0
          %2258 = vmatpush1.msra.mxu0 0.0
          %2259 = vmatprep.subr.mxu0 0.0
          %2260 = vmatpush1.msra.mxu0 0.0
          %2261 = vmatprep.subr.mxu0 0.0
          %2262 = vmatpush1.msra.mxu0 0.0
          %2263 = vmatprep.subr.mxu0 0.0
          %2264 = vmatpush1.msra.mxu0 0.0
          %2265 = vmatprep.subr.mxu0 0.0
          %2266 = vmatpush1.msra.mxu0 0.0
          %2267 = vmatprep.subr.mxu0 0.0
          %2268 = vmatpush1.msra.mxu0 0.0
          %2269 = vmatprep.subr.mxu0 0.0
          %2270 = vmatpush1.msra.mxu0 0.0
          %2271 = vmatprep.subr.mxu0 0.0
          %2272 = vmatpush1.msra.mxu0 0.0
          %2273 = vmatprep.subr.mxu0 0.0
          %2274 = vmatpush1.msra.mxu0 0.0
          %2275 = vmatprep.subr.mxu0 0.0
          %2276 = vmatpush1.msra.mxu0 0.0
          %2277 = vmatprep.subr.mxu0 0.0
          %2278 = vmatpush1.msra.mxu0 0.0
          %2279 = vmatprep.subr.mxu0 0.0
          %2280 = vmatpush1.msra.mxu0 0.0
          %2281 = vmatprep.subr.mxu0 0.0
          %2282 = vmatpush1.msra.mxu0 0.0
          %2283 = vmatprep.subr.mxu0 0.0
          %2284 = vmatpush1.msra.mxu0 0.0
          %2285 = vmatprep.subr.mxu0 0.0
          %2286 = vmatpush1.msra.mxu0 0.0
          %2287 = vmatprep.subr.mxu0 0.0
          %2288 = vmatpush1.msra.mxu0 0.0
          %2289 = vmatprep.subr.mxu0 0.0
          %2290 = vmatpush1.msra.mxu0 0.0
          %2291 = vmatprep.subr.mxu0 0.0
          %2292 = vmatpush1.msra.mxu0 0.0
          %2293 = vmatprep.mubr.f32.mxu0 0.0
          %v2294 = vand.u32 %v1888, 4294901760
          %2295 = vmatmul.mubr.f32.gmra.mrb[0].mxu0 %v2294
          %v2296 = vpop.f32.mrb[0].mxu0
          %v2297 = vadd.f32 %v2214, %v2296
          %v2298 = vpop.f32.mrb[0].mxu0
          %2299 = vdwg.mxu0
          %2300 = vmatprep.subr.mxu0 0.0
          %v2301 = vand.u32 %v291, 4294901760
          %2302 = vmatpush1.msra.mxu0 %v2301
          %2303 = vmatprep.subr.mxu0 0.0
          %v2304 = vand.u32 %v292, 4294901760
          %2305 = vmatpush1.msra.mxu0 %v2304
          %2306 = vmatprep.subr.mxu0 0.0
          %v2307 = vand.u32 %v293, 4294901760
          %2308 = vmatpush1.msra.mxu0 %v2307
          %2309 = vmatprep.subr.mxu0 0.0
          %v2310 = vand.u32 %v294, 4294901760
          %2311 = vmatpush1.msra.mxu0 %v2310
          %2312 = vmatprep.subr.mxu0 0.0
          %2313 = vmatpush1.msra.mxu0 0.0
          %2314 = vmatprep.subr.mxu0 0.0
          %2315 = vmatpush1.msra.mxu0 0.0
          %2316 = vmatprep.subr.mxu0 0.0
          %2317 = vmatpush1.msra.mxu0 0.0
          %2318 = vmatprep.subr.mxu0 0.0
          %2319 = vmatpush1.msra.mxu0 0.0
          %2320 = vmatprep.subr.mxu0 0.0
          %2321 = vmatpush1.msra.mxu0 0.0
          %2322 = vmatprep.subr.mxu0 0.0
          %2323 = vmatpush1.msra.mxu0 0.0
          %2324 = vmatprep.subr.mxu0 0.0
          %2325 = vmatpush1.msra.mxu0 0.0
          %2326 = vmatprep.subr.mxu0 0.0
          %2327 = vmatpush1.msra.mxu0 0.0
          %2328 = vmatprep.subr.mxu0 0.0
          %2329 = vmatpush1.msra.mxu0 0.0
          %2330 = vmatprep.subr.mxu0 0.0
          %2331 = vmatpush1.msra.mxu0 0.0
          %2332 = vmatprep.subr.mxu0 0.0
          %2333 = vmatpush1.msra.mxu0 0.0
          %2334 = vmatprep.subr.mxu0 0.0
          %2335 = vmatpush1.msra.mxu0 0.0
          %2336 = vmatprep.subr.mxu0 0.0
          %2337 = vmatpush1.msra.mxu0 0.0
          %2338 = vmatprep.subr.mxu0 0.0
          %2339 = vmatpush1.msra.mxu0 0.0
          %2340 = vmatprep.subr.mxu0 0.0
          %2341 = vmatpush1.msra.mxu0 0.0
          %2342 = vmatprep.subr.mxu0 0.0
          %2343 = vmatpush1.msra.mxu0 0.0
          %2344 = vmatprep.subr.mxu0 0.0
          %2345 = vmatpush1.msra.mxu0 0.0
          %2346 = vmatprep.subr.mxu0 0.0
          %2347 = vmatpush1.msra.mxu0 0.0
          %2348 = vmatprep.subr.mxu0 0.0
          %2349 = vmatpush1.msra.mxu0 0.0
          %2350 = vmatprep.subr.mxu0 0.0
          %2351 = vmatpush1.msra.mxu0 0.0
          %2352 = vmatprep.subr.mxu0 0.0
          %2353 = vmatpush1.msra.mxu0 0.0
          %2354 = vmatprep.subr.mxu0 0.0
          %2355 = vmatpush1.msra.mxu0 0.0
          %2356 = vmatprep.subr.mxu0 0.0
          %2357 = vmatpush1.msra.mxu0 0.0
          %2358 = vmatprep.subr.mxu0 0.0
          %2359 = vmatpush1.msra.mxu0 0.0
          %2360 = vmatprep.subr.mxu0 0.0
          %2361 = vmatpush1.msra.mxu0 0.0
          %2362 = vmatprep.subr.mxu0 0.0
          %2363 = vmatpush1.msra.mxu0 0.0
          %2364 = vmatprep.subr.mxu0 0.0
          %2365 = vmatpush1.msra.mxu0 0.0
          %2366 = vmatprep.subr.mxu0 0.0
          %2367 = vmatpush1.msra.mxu0 0.0
          %2368 = vmatprep.mubr.f32.mxu0 0.0
          %v2369 = vand.u32 %v1888, 4294901760
          %2370 = vmatmul.mubr.f32.gmra.mrb[0].mxu0 %v2369
          %v2371 = vpop.f32.mrb[0].mxu0
          %v2372 = vadd.f32 %v2297, %v2371
          %v2373 = vpop.f32.mrb[0].mxu0
          %2374 = vdwg.mxu0
          %v2376 = vsel %vm819, %v1885, 0
          %2378 = vmatprep.subr.mxu0 0.0
          %v2379 = vand.u32 %v291, 4294901760
          %2380 = vmatpush1.msra.mxu0 %v2379
          %2381 = vmatprep.subr.mxu0 0.0
          %v2382 = vand.u32 %v292, 4294901760
          %2383 = vmatpush1.msra.mxu0 %v2382
          %2384 = vmatprep.subr.mxu0 0.0
          %v2385 = vand.u32 %v293, 4294901760
          %2386 = vmatpush1.msra.mxu0 %v2385
          %2387 = vmatprep.subr.mxu0 0.0
          %v2388 = vand.u32 %v294, 4294901760
          %2389 = vmatpush1.msra.mxu0 %v2388
          %2390 = vmatprep.subr.mxu0 0.0
          %2391 = vmatpush1.msra.mxu0 0.0
          %2392 = vmatprep.subr.mxu0 0.0
          %2393 = vmatpush1.msra.mxu0 0.0
          %2394 = vmatprep.subr.mxu0 0.0
          %2395 = vmatpush1.msra.mxu0 0.0
          %2396 = vmatprep.subr.mxu0 0.0
          %2397 = vmatpush1.msra.mxu0 0.0
          %2398 = vmatprep.subr.mxu0 0.0
          %2399 = vmatpush1.msra.mxu0 0.0
          %2400 = vmatprep.subr.mxu0 0.0
          %2401 = vmatpush1.msra.mxu0 0.0
          %2402 = vmatprep.subr.mxu0 0.0
          %2403 = vmatpush1.msra.mxu0 0.0
          %2404 = vmatprep.subr.mxu0 0.0
          %2405 = vmatpush1.msra.mxu0 0.0
          %2406 = vmatprep.subr.mxu0 0.0
          %2407 = vmatpush1.msra.mxu0 0.0
          %2408 = vmatprep.subr.mxu0 0.0
          %2409 = vmatpush1.msra.mxu0 0.0
          %2410 = vmatprep.subr.mxu0 0.0
          %2411 = vmatpush1.msra.mxu0 0.0
          %2412 = vmatprep.subr.mxu0 0.0
          %2413 = vmatpush1.msra.mxu0 0.0
          %2414 = vmatprep.subr.mxu0 0.0
          %2415 = vmatpush1.msra.mxu0 0.0
          %2416 = vmatprep.subr.mxu0 0.0
          %2417 = vmatpush1.msra.mxu0 0.0
          %2418 = vmatprep.subr.mxu0 0.0
          %2419 = vmatpush1.msra.mxu0 0.0
          %2420 = vmatprep.subr.mxu0 0.0
          %2421 = vmatpush1.msra.mxu0 0.0
          %2422 = vmatprep.subr.mxu0 0.0
          %2423 = vmatpush1.msra.mxu0 0.0
          %2424 = vmatprep.subr.mxu0 0.0
          %2425 = vmatpush1.msra.mxu0 0.0
          %2426 = vmatprep.subr.mxu0 0.0
          %2427 = vmatpush1.msra.mxu0 0.0
          %2428 = vmatprep.subr.mxu0 0.0
          %2429 = vmatpush1.msra.mxu0 0.0
          %2430 = vmatprep.subr.mxu0 0.0
          %2431 = vmatpush1.msra.mxu0 0.0
          %2432 = vmatprep.subr.mxu0 0.0
          %2433 = vmatpush1.msra.mxu0 0.0
          %2434 = vmatprep.subr.mxu0 0.0
          %2435 = vmatpush1.msra.mxu0 0.0
          %2436 = vmatprep.subr.mxu0 0.0
          %2437 = vmatpush1.msra.mxu0 0.0
          %2438 = vmatprep.subr.mxu0 0.0
          %2439 = vmatpush1.msra.mxu0 0.0
          %2440 = vmatprep.subr.mxu0 0.0
          %2441 = vmatpush1.msra.mxu0 0.0
          %2442 = vmatprep.subr.mxu0 0.0
          %2443 = vmatpush1.msra.mxu0 0.0
          %2444 = vmatprep.subr.mxu0 0.0
          %2445 = vmatpush1.msra.mxu0 0.0
          %2446 = vmatprep.mubr.f32.mxu0 0.0
          %v2447 = vand.u32 %v2376, 4294901760
          %v2448 = vsub.f32 %v2376, %v2447
          %v2449 = vand.u32 %v2448, 4294901760
          %v2450 = vsub.f32 %v2448, %v2449
          %v2451 = vand.u32 %v2450, 4294901760
          %2452 = vmatmul.mubr.f32.gmra.mrb[0].mxu0 %v2451
          %v2453 = vpop.f32.mrb[0].mxu0
          %v2454 = vadd.f32 0.0, %v2453
          %v2455 = vpop.f32.mrb[0].mxu0
          %2456 = vdwg.mxu0
          %2457 = vmatprep.subr.mxu0 0.0
          %v2458 = vand.u32 %v291, 4294901760
          %v2459 = vsub.f32 %v291, %v2458
          %v2460 = vand.u32 %v2459, 4294901760
          %v2461 = vsub.f32 %v2459, %v2460
          %v2462 = vand.u32 %v2461, 4294901760
          %2463 = vmatpush1.msra.mxu0 %v2462
          %2464 = vmatprep.subr.mxu0 0.0
          %v2465 = vand.u32 %v292, 4294901760
          %v2466 = vsub.f32 %v292, %v2465
          %v2467 = vand.u32 %v2466, 4294901760
          %v2468 = vsub.f32 %v2466, %v2467
          %v2469 = vand.u32 %v2468, 4294901760
          %2470 = vmatpush1.msra.mxu0 %v2469
          %2471 = vmatprep.subr.mxu0 0.0
          %v2472 = vand.u32 %v293, 4294901760
          %v2473 = vsub.f32 %v293, %v2472
          %v2474 = vand.u32 %v2473, 4294901760
          %v2475 = vsub.f32 %v2473, %v2474
          %v2476 = vand.u32 %v2475, 4294901760
          %2477 = vmatpush1.msra.mxu0 %v2476
          %2478 = vmatprep.subr.mxu0 0.0
          %v2479 = vand.u32 %v294, 4294901760
          %v2480 = vsub.f32 %v294, %v2479
          %v2481 = vand.u32 %v2480, 4294901760
          %v2482 = vsub.f32 %v2480, %v2481
          %v2483 = vand.u32 %v2482, 4294901760
          %2484 = vmatpush1.msra.mxu0 %v2483
          %2485 = vmatprep.subr.mxu0 0.0
          %2486 = vmatpush1.msra.mxu0 0.0
          %2487 = vmatprep.subr.mxu0 0.0
          %2488 = vmatpush1.msra.mxu0 0.0
          %2489 = vmatprep.subr.mxu0 0.0
          %2490 = vmatpush1.msra.mxu0 0.0
          %2491 = vmatprep.subr.mxu0 0.0
          %2492 = vmatpush1.msra.mxu0 0.0
          %2493 = vmatprep.subr.mxu0 0.0
          %2494 = vmatpush1.msra.mxu0 0.0
          %2495 = vmatprep.subr.mxu0 0.0
          %2496 = vmatpush1.msra.mxu0 0.0
          %2497 = vmatprep.subr.mxu0 0.0
          %2498 = vmatpush1.msra.mxu0 0.0
          %2499 = vmatprep.subr.mxu0 0.0
          %2500 = vmatpush1.msra.mxu0 0.0
          %2501 = vmatprep.subr.mxu0 0.0
          %2502 = vmatpush1.msra.mxu0 0.0
          %2503 = vmatprep.subr.mxu0 0.0
          %2504 = vmatpush1.msra.mxu0 0.0
          %2505 = vmatprep.subr.mxu0 0.0
          %2506 = vmatpush1.msra.mxu0 0.0
          %2507 = vmatprep.subr.mxu0 0.0
          %2508 = vmatpush1.msra.mxu0 0.0
          %2509 = vmatprep.subr.mxu0 0.0
          %2510 = vmatpush1.msra.mxu0 0.0
          %2511 = vmatprep.subr.mxu0 0.0
          %2512 = vmatpush1.msra.mxu0 0.0
          %2513 = vmatprep.subr.mxu0 0.0
          %2514 = vmatpush1.msra.mxu0 0.0
          %2515 = vmatprep.subr.mxu0 0.0
          %2516 = vmatpush1.msra.mxu0 0.0
          %2517 = vmatprep.subr.mxu0 0.0
          %2518 = vmatpush1.msra.mxu0 0.0
          %2519 = vmatprep.subr.mxu0 0.0
          %2520 = vmatpush1.msra.mxu0 0.0
          %2521 = vmatprep.subr.mxu0 0.0
          %2522 = vmatpush1.msra.mxu0 0.0
          %2523 = vmatprep.subr.mxu0 0.0
          %2524 = vmatpush1.msra.mxu0 0.0
          %2525 = vmatprep.subr.mxu0 0.0
          %2526 = vmatpush1.msra.mxu0 0.0
          %2527 = vmatprep.subr.mxu0 0.0
          %2528 = vmatpush1.msra.mxu0 0.0
          %2529 = vmatprep.subr.mxu0 0.0
          %2530 = vmatpush1.msra.mxu0 0.0
          %2531 = vmatprep.subr.mxu0 0.0
          %2532 = vmatpush1.msra.mxu0 0.0
          %2533 = vmatprep.subr.mxu0 0.0
          %2534 = vmatpush1.msra.mxu0 0.0
          %2535 = vmatprep.subr.mxu0 0.0
          %2536 = vmatpush1.msra.mxu0 0.0
          %2537 = vmatprep.subr.mxu0 0.0
          %2538 = vmatpush1.msra.mxu0 0.0
          %2539 = vmatprep.subr.mxu0 0.0
          %2540 = vmatpush1.msra.mxu0 0.0
          %2541 = vmatprep.mubr.f32.mxu0 0.0
          %v2542 = vand.u32 %v2376, 4294901760
          %2543 = vmatmul.mubr.f32.gmra.mrb[0].mxu0 %v2542
          %v2544 = vpop.f32.mrb[0].mxu0
          %v2545 = vadd.f32 %v2454, %v2544
          %v2546 = vpop.f32.mrb[0].mxu0
          %2547 = vdwg.mxu0
          %2548 = vmatprep.subr.mxu0 0.0
          %v2549 = vand.u32 %v291, 4294901760
          %v2550 = vsub.f32 %v291, %v2549
          %2551 = vmatpush1.msra.mxu0 %v2550
          %2552 = vmatprep.subr.mxu0 0.0
          %v2553 = vand.u32 %v292, 4294901760
          %v2554 = vsub.f32 %v292, %v2553
          %2555 = vmatpush1.msra.mxu0 %v2554
          %2556 = vmatprep.subr.mxu0 0.0
          %v2557 = vand.u32 %v293, 4294901760
          %v2558 = vsub.f32 %v293, %v2557
          %2559 = vmatpush1.msra.mxu0 %v2558
          %2560 = vmatprep.subr.mxu0 0.0
          %v2561 = vand.u32 %v294, 4294901760
          %v2562 = vsub.f32 %v294, %v2561
          %2563 = vmatpush1.msra.mxu0 %v2562
          %2564 = vmatprep.subr.mxu0 0.0
          %2565 = vmatpush1.msra.mxu0 0.0
          %2566 = vmatprep.subr.mxu0 0.0
          %2567 = vmatpush1.msra.mxu0 0.0
          %2568 = vmatprep.subr.mxu0 0.0
          %2569 = vmatpush1.msra.mxu0 0.0
          %2570 = vmatprep.subr.mxu0 0.0
          %2571 = vmatpush1.msra.mxu0 0.0
          %2572 = vmatprep.subr.mxu0 0.0
          %2573 = vmatpush1.msra.mxu0 0.0
          %2574 = vmatprep.subr.mxu0 0.0
          %2575 = vmatpush1.msra.mxu0 0.0
          %2576 = vmatprep.subr.mxu0 0.0
          %2577 = vmatpush1.msra.mxu0 0.0
          %2578 = vmatprep.subr.mxu0 0.0
          %2579 = vmatpush1.msra.mxu0 0.0
          %2580 = vmatprep.subr.mxu0 0.0
          %2581 = vmatpush1.msra.mxu0 0.0
          %2582 = vmatprep.subr.mxu0 0.0
          %2583 = vmatpush1.msra.mxu0 0.0
          %2584 = vmatprep.subr.mxu0 0.0
          %2585 = vmatpush1.msra.mxu0 0.0
          %2586 = vmatprep.subr.mxu0 0.0
          %2587 = vmatpush1.msra.mxu0 0.0
          %2588 = vmatprep.subr.mxu0 0.0
          %2589 = vmatpush1.msra.mxu0 0.0
          %2590 = vmatprep.subr.mxu0 0.0
          %2591 = vmatpush1.msra.mxu0 0.0
          %2592 = vmatprep.subr.mxu0 0.0
          %2593 = vmatpush1.msra.mxu0 0.0
          %2594 = vmatprep.subr.mxu0 0.0
          %2595 = vmatpush1.msra.mxu0 0.0
          %2596 = vmatprep.subr.mxu0 0.0
          %2597 = vmatpush1.msra.mxu0 0.0
          %2598 = vmatprep.subr.mxu0 0.0
          %2599 = vmatpush1.msra.mxu0 0.0
          %2600 = vmatprep.subr.mxu0 0.0
          %2601 = vmatpush1.msra.mxu0 0.0
          %2602 = vmatprep.subr.mxu0 0.0
          %2603 = vmatpush1.msra.mxu0 0.0
          %2604 = vmatprep.subr.mxu0 0.0
          %2605 = vmatpush1.msra.mxu0 0.0
          %2606 = vmatprep.subr.mxu0 0.0
          %2607 = vmatpush1.msra.mxu0 0.0
          %2608 = vmatprep.subr.mxu0 0.0
          %2609 = vmatpush1.msra.mxu0 0.0
          %2610 = vmatprep.subr.mxu0 0.0
          %2611 = vmatpush1.msra.mxu0 0.0
          %2612 = vmatprep.subr.mxu0 0.0
          %2613 = vmatpush1.msra.mxu0 0.0
          %2614 = vmatprep.subr.mxu0 0.0
          %2615 = vmatpush1.msra.mxu0 0.0
          %2616 = vmatprep.subr.mxu0 0.0
          %2617 = vmatpush1.msra.mxu0 0.0
          %2618 = vmatprep.subr.mxu0 0.0
          %2619 = vmatpush1.msra.mxu0 0.0
          %2620 = vmatprep.mubr.f32.mxu0 0.0
          %v2621 = vand.u32 %v2376, 4294901760
          %v2622 = vsub.f32 %v2376, %v2621
          %2623 = vmatmul.mubr.f32.gmra.mrb[0].mxu0 %v2622
          %v2624 = vpop.f32.mrb[0].mxu0
          %v2625 = vadd.f32 %v2545, %v2624
          %v2626 = vpop.f32.mrb[0].mxu0
          %2627 = vdwg.mxu0
          %2628 = vmatprep.subr.mxu0 0.0
          %v2629 = vand.u32 %v291, 4294901760
          %2630 = vmatpush1.msra.mxu0 %v2629
          %2631 = vmatprep.subr.mxu0 0.0
          %v2632 = vand.u32 %v292, 4294901760
          %2633 = vmatpush1.msra.mxu0 %v2632
          %2634 = vmatprep.subr.mxu0 0.0
          %v2635 = vand.u32 %v293, 4294901760
          %2636 = vmatpush1.msra.mxu0 %v2635
          %2637 = vmatprep.subr.mxu0 0.0
          %v2638 = vand.u32 %v294, 4294901760
          %2639 = vmatpush1.msra.mxu0 %v2638
          %2640 = vmatprep.subr.mxu0 0.0
          %2641 = vmatpush1.msra.mxu0 0.0
          %2642 = vmatprep.subr.mxu0 0.0
          %2643 = vmatpush1.msra.mxu0 0.0
          %2644 = vmatprep.subr.mxu0 0.0
          %2645 = vmatpush1.msra.mxu0 0.0
          %2646 = vmatprep.subr.mxu0 0.0
          %2647 = vmatpush1.msra.mxu0 0.0
          %2648 = vmatprep.subr.mxu0 0.0
          %2649 = vmatpush1.msra.mxu0 0.0
          %2650 = vmatprep.subr.mxu0 0.0
          %2651 = vmatpush1.msra.mxu0 0.0
          %2652 = vmatprep.subr.mxu0 0.0
          %2653 = vmatpush1.msra.mxu0 0.0
          %2654 = vmatprep.subr.mxu0 0.0
          %2655 = vmatpush1.msra.mxu0 0.0
          %2656 = vmatprep.subr.mxu0 0.0
          %2657 = vmatpush1.msra.mxu0 0.0
          %2658 = vmatprep.subr.mxu0 0.0
          %2659 = vmatpush1.msra.mxu0 0.0
          %2660 = vmatprep.subr.mxu0 0.0
          %2661 = vmatpush1.msra.mxu0 0.0
          %2662 = vmatprep.subr.mxu0 0.0
          %2663 = vmatpush1.msra.mxu0 0.0
          %2664 = vmatprep.subr.mxu0 0.0
          %2665 = vmatpush1.msra.mxu0 0.0
          %2666 = vmatprep.subr.mxu0 0.0
          %2667 = vmatpush1.msra.mxu0 0.0
          %2668 = vmatprep.subr.mxu0 0.0
          %2669 = vmatpush1.msra.mxu0 0.0
          %2670 = vmatprep.subr.mxu0 0.0
          %2671 = vmatpush1.msra.mxu0 0.0
          %2672 = vmatprep.subr.mxu0 0.0
          %2673 = vmatpush1.msra.mxu0 0.0
          %2674 = vmatprep.subr.mxu0 0.0
          %2675 = vmatpush1.msra.mxu0 0.0
          %2676 = vmatprep.subr.mxu0 0.0
          %2677 = vmatpush1.msra.mxu0 0.0
          %2678 = vmatprep.subr.mxu0 0.0
          %2679 = vmatpush1.msra.mxu0 0.0
          %2680 = vmatprep.subr.mxu0 0.0
          %2681 = vmatpush1.msra.mxu0 0.0
          %2682 = vmatprep.subr.mxu0 0.0
          %2683 = vmatpush1.msra.mxu0 0.0
          %2684 = vmatprep.subr.mxu0 0.0
          %2685 = vmatpush1.msra.mxu0 0.0
          %2686 = vmatprep.subr.mxu0 0.0
          %2687 = vmatpush1.msra.mxu0 0.0
          %2688 = vmatprep.subr.mxu0 0.0
          %2689 = vmatpush1.msra.mxu0 0.0
          %2690 = vmatprep.subr.mxu0 0.0
          %2691 = vmatpush1.msra.mxu0 0.0
          %2692 = vmatprep.subr.mxu0 0.0
          %2693 = vmatpush1.msra.mxu0 0.0
          %2694 = vmatprep.subr.mxu0 0.0
          %2695 = vmatpush1.msra.mxu0 0.0
          %2696 = vmatprep.mubr.f32.mxu0 0.0
          %v2697 = vand.u32 %v2376, 4294901760
          %v2698 = vsub.f32 %v2376, %v2697
          %v2699 = vand.u32 %v2698, 4294901760
          %2700 = vmatmul.mubr.f32.gmra.mrb[0].mxu0 %v2699
          %v2701 = vpop.f32.mrb[0].mxu0
          %v2702 = vadd.f32 %v2625, %v2701
          %v2703 = vpop.f32.mrb[0].mxu0
          %2704 = vdwg.mxu0
          %2705 = vmatprep.subr.mxu0 0.0
          %v2706 = vand.u32 %v291, 4294901760
          %v2707 = vsub.f32 %v291, %v2706
          %v2708 = vand.u32 %v2707, 4294901760
          %2709 = vmatpush1.msra.mxu0 %v2708
          %2710 = vmatprep.subr.mxu0 0.0
          %v2711 = vand.u32 %v292, 4294901760
          %v2712 = vsub.f32 %v292, %v2711
          %v2713 = vand.u32 %v2712, 4294901760
          %2714 = vmatpush1.msra.mxu0 %v2713
          %2715 = vmatprep.subr.mxu0 0.0
          %v2716 = vand.u32 %v293, 4294901760
          %v2717 = vsub.f32 %v293, %v2716
          %v2718 = vand.u32 %v2717, 4294901760
          %2719 = vmatpush1.msra.mxu0 %v2718
          %2720 = vmatprep.subr.mxu0 0.0
          %v2721 = vand.u32 %v294, 4294901760
          %v2722 = vsub.f32 %v294, %v2721
          %v2723 = vand.u32 %v2722, 4294901760
          %2724 = vmatpush1.msra.mxu0 %v2723
          %2725 = vmatprep.subr.mxu0 0.0
          %2726 = vmatpush1.msra.mxu0 0.0
          %2727 = vmatprep.subr.mxu0 0.0
          %2728 = vmatpush1.msra.mxu0 0.0
          %2729 = vmatprep.subr.mxu0 0.0
          %2730 = vmatpush1.msra.mxu0 0.0
          %2731 = vmatprep.subr.mxu0 0.0
          %2732 = vmatpush1.msra.mxu0 0.0
          %2733 = vmatprep.subr.mxu0 0.0
          %2734 = vmatpush1.msra.mxu0 0.0
          %2735 = vmatprep.subr.mxu0 0.0
          %2736 = vmatpush1.msra.mxu0 0.0
          %2737 = vmatprep.subr.mxu0 0.0
          %2738 = vmatpush1.msra.mxu0 0.0
          %2739 = vmatprep.subr.mxu0 0.0
          %2740 = vmatpush1.msra.mxu0 0.0
          %2741 = vmatprep.subr.mxu0 0.0
          %2742 = vmatpush1.msra.mxu0 0.0
          %2743 = vmatprep.subr.mxu0 0.0
          %2744 = vmatpush1.msra.mxu0 0.0
          %2745 = vmatprep.subr.mxu0 0.0
          %2746 = vmatpush1.msra.mxu0 0.0
          %2747 = vmatprep.subr.mxu0 0.0
          %2748 = vmatpush1.msra.mxu0 0.0
          %2749 = vmatprep.subr.mxu0 0.0
          %2750 = vmatpush1.msra.mxu0 0.0
          %2751 = vmatprep.subr.mxu0 0.0
          %2752 = vmatpush1.msra.mxu0 0.0
          %2753 = vmatprep.subr.mxu0 0.0
          %2754 = vmatpush1.msra.mxu0 0.0
          %2755 = vmatprep.subr.mxu0 0.0
          %2756 = vmatpush1.msra.mxu0 0.0
          %2757 = vmatprep.subr.mxu0 0.0
          %2758 = vmatpush1.msra.mxu0 0.0
          %2759 = vmatprep.subr.mxu0 0.0
          %2760 = vmatpush1.msra.mxu0 0.0
          %2761 = vmatprep.subr.mxu0 0.0
          %2762 = vmatpush1.msra.mxu0 0.0
          %2763 = vmatprep.subr.mxu0 0.0
          %2764 = vmatpush1.msra.mxu0 0.0
          %2765 = vmatprep.subr.mxu0 0.0
          %2766 = vmatpush1.msra.mxu0 0.0
          %2767 = vmatprep.subr.mxu0 0.0
          %2768 = vmatpush1.msra.mxu0 0.0
          %2769 = vmatprep.subr.mxu0 0.0
          %2770 = vmatpush1.msra.mxu0 0.0
          %2771 = vmatprep.subr.mxu0 0.0
          %2772 = vmatpush1.msra.mxu0 0.0
          %2773 = vmatprep.subr.mxu0 0.0
          %2774 = vmatpush1.msra.mxu0 0.0
          %2775 = vmatprep.subr.mxu0 0.0
          %2776 = vmatpush1.msra.mxu0 0.0
          %2777 = vmatprep.subr.mxu0 0.0
          %2778 = vmatpush1.msra.mxu0 0.0
          %2779 = vmatprep.subr.mxu0 0.0
          %2780 = vmatpush1.msra.mxu0 0.0
          %2781 = vmatprep.mubr.f32.mxu0 0.0
          %v2782 = vand.u32 %v2376, 4294901760
          %2783 = vmatmul.mubr.f32.gmra.mrb[0].mxu0 %v2782
          %v2784 = vpop.f32.mrb[0].mxu0
          %v2785 = vadd.f32 %v2702, %v2784
          %v2786 = vpop.f32.mrb[0].mxu0
          %2787 = vdwg.mxu0
          %2788 = vmatprep.subr.mxu0 0.0
          %v2789 = vand.u32 %v291, 4294901760
          %2790 = vmatpush1.msra.mxu0 %v2789
          %2791 = vmatprep.subr.mxu0 0.0
          %v2792 = vand.u32 %v292, 4294901760
          %2793 = vmatpush1.msra.mxu0 %v2792
          %2794 = vmatprep.subr.mxu0 0.0
          %v2795 = vand.u32 %v293, 4294901760
          %2796 = vmatpush1.msra.mxu0 %v2795
          %2797 = vmatprep.subr.mxu0 0.0
          %v2798 = vand.u32 %v294, 4294901760
          %2799 = vmatpush1.msra.mxu0 %v2798
          %2800 = vmatprep.subr.mxu0 0.0
          %2801 = vmatpush1.msra.mxu0 0.0
          %2802 = vmatprep.subr.mxu0 0.0
          %2803 = vmatpush1.msra.mxu0 0.0
          %2804 = vmatprep.subr.mxu0 0.0
          %2805 = vmatpush1.msra.mxu0 0.0
          %2806 = vmatprep.subr.mxu0 0.0
          %2807 = vmatpush1.msra.mxu0 0.0
          %2808 = vmatprep.subr.mxu0 0.0
          %2809 = vmatpush1.msra.mxu0 0.0
          %2810 = vmatprep.subr.mxu0 0.0
          %2811 = vmatpush1.msra.mxu0 0.0
          %2812 = vmatprep.subr.mxu0 0.0
          %2813 = vmatpush1.msra.mxu0 0.0
          %2814 = vmatprep.subr.mxu0 0.0
          %2815 = vmatpush1.msra.mxu0 0.0
          %2816 = vmatprep.subr.mxu0 0.0
          %2817 = vmatpush1.msra.mxu0 0.0
          %2818 = vmatprep.subr.mxu0 0.0
          %2819 = vmatpush1.msra.mxu0 0.0
          %2820 = vmatprep.subr.mxu0 0.0
          %2821 = vmatpush1.msra.mxu0 0.0
          %2822 = vmatprep.subr.mxu0 0.0
          %2823 = vmatpush1.msra.mxu0 0.0
          %2824 = vmatprep.subr.mxu0 0.0
          %2825 = vmatpush1.msra.mxu0 0.0
          %2826 = vmatprep.subr.mxu0 0.0
          %2827 = vmatpush1.msra.mxu0 0.0
          %2828 = vmatprep.subr.mxu0 0.0
          %2829 = vmatpush1.msra.mxu0 0.0
          %2830 = vmatprep.subr.mxu0 0.0
          %2831 = vmatpush1.msra.mxu0 0.0
          %2832 = vmatprep.subr.mxu0 0.0
          %2833 = vmatpush1.msra.mxu0 0.0
          %2834 = vmatprep.subr.mxu0 0.0
          %2835 = vmatpush1.msra.mxu0 0.0
          %2836 = vmatprep.subr.mxu0 0.0
          %2837 = vmatpush1.msra.mxu0 0.0
          %2838 = vmatprep.subr.mxu0 0.0
          %2839 = vmatpush1.msra.mxu0 0.0
          %2840 = vmatprep.subr.mxu0 0.0
          %2841 = vmatpush1.msra.mxu0 0.0
          %2842 = vmatprep.subr.mxu0 0.0
          %2843 = vmatpush1.msra.mxu0 0.0
          %2844 = vmatprep.subr.mxu0 0.0
          %2845 = vmatpush1.msra.mxu0 0.0
          %2846 = vmatprep.subr.mxu0 0.0
          %2847 = vmatpush1.msra.mxu0 0.0
          %2848 = vmatprep.subr.mxu0 0.0
          %2849 = vmatpush1.msra.mxu0 0.0
          %2850 = vmatprep.subr.mxu0 0.0
          %2851 = vmatpush1.msra.mxu0 0.0
          %2852 = vmatprep.subr.mxu0 0.0
          %2853 = vmatpush1.msra.mxu0 0.0
          %2854 = vmatprep.subr.mxu0 0.0
          %2855 = vmatpush1.msra.mxu0 0.0
          %2856 = vmatprep.mubr.f32.mxu0 0.0
          %v2857 = vand.u32 %v2376, 4294901760
          %2858 = vmatmul.mubr.f32.gmra.mrb[0].mxu0 %v2857
          %v2859 = vpop.f32.mrb[0].mxu0
          %v2860 = vadd.f32 %v2785, %v2859
          %v2861 = vpop.f32.mrb[0].mxu0
          %2862 = vdwg.mxu0
          %v2863 = vld [vmem:[%s2] sm:$0x1]
          %v2864 = vmul.f32 %v2860, %v2863
          %2865 = vst [vmem:[%s276] sm:$0x1] %v2864
          %v2866 = vld [vmem:[%s3] sm:$0x1]
          %v2867 = vmul.f32 %v2372, %v2864
          %v2868 = vsub.f32 %v2866, %v2867
          %2869 = vst [vmem:[%s282] sm:$0x1] %v2868
        $region52: #{tpu_custom_call.1} parent=35 // pred_fallthru
          _
        %s2870 = sand.u32 %s138, 1
        %s2871 = scalar_lea.sflag [#allocation6], %s2870
        %s2872 = sand.u32 %s138, 1
        %s2873 = scalar_lea.vmem [#allocation9], %s2872
        %s2874 = sand.u32 %s164, 1
        %s2875 = scalar_lea.sflag [#allocation11], %s2874
        %s2876 = sand.u32 %s164, 1
        %s2877 = scalar_lea.vmem [#allocation10], %s2876
        // Predicated region
        $region53: #{tpu_custom_call.1} parent=35 // pred_check
          %p2878 = pneg %p148
        $region54: #{tpu_custom_call.1} parent=35 // pred_check_branch
          %2880 = sbr.rel (%p2878) target = $region56
        $region55: #{tpu_custom_call.1} parent=35 // pred_region
          %s2882 = ssub.s32 16, 16
          %2883 = vsyncadd %s2871, %s2882
          %s2884 = smul.addr %s31, 16
          %s2885 = scalar_lea.hbm %s4, %s2884
          %s2887 = sshll.u32 %s2873, 4
          %s2888 = int_to_ptr.vmem [resolvable:$true] %s2887
          %2890 = dma.vmem_to_hbm [thread:$0]  %s2888, 16, %s2885, %s2871
        $region56: #{tpu_custom_call.1} parent=35 // pred_fallthru
          _
        // Predicated region
        $region57: #{tpu_custom_call.1} parent=35 // pred_check
          %p2891 = pneg %p174
        $region58: #{tpu_custom_call.1} parent=35 // pred_check_branch
          %2893 = sbr.rel (%p2891) target = $region60
        $region59: #{tpu_custom_call.1} parent=35 // pred_region
          %s2895 = ssub.s32 16, 16
          %2896 = vsyncadd %s2875, %s2895
          %s2897 = smul.addr %s31, 16
          %s2898 = scalar_lea.hbm %s5, %s2897
          %s2900 = sshll.u32 %s2877, 4
          %s2901 = int_to_ptr.vmem [resolvable:$true] %s2900
          %2903 = dma.vmem_to_hbm [thread:$0]  %s2901, 16, %s2898, %s2875
        $region60: #{tpu_custom_call.1} parent=35 // pred_fallthru
          _
      $region36: #{tpu_custom_call.1} parent=5 // pred_fallthru
        _
      %p2904 = scmp.le.s32.totalorder 2, %s22
      // Predicated region
      $region61: #{tpu_custom_call.1} parent=5 // pred_check
        %p2905 = pneg %p2904
      $region62: #{tpu_custom_call.1} parent=5 // pred_check_branch
        %2907 = sbr.rel (%p2905) target = $region64
      $region63: #{tpu_custom_call.1} parent=5 // pred_region
        %s2908 = ssub.s32 %s22, 2
        // Predicated region
        $region65: #{tpu_custom_call.1} parent=63 // pred_check
          %p2909 = pneg %p154
        $region66: #{tpu_custom_call.1} parent=63 // pred_check_branch
          %2911 = sbr.rel (%p2909) target = $region68
        $region67: #{tpu_custom_call.1} parent=63 // pred_region
          %s2912 = sand.u32 %s139, 1
          %s2913 = scalar_lea.sflag [#allocation6], %s2912
          %s2914 = sand.u32 %s139, 1
          %s2915 = scalar_lea.vmem [#allocation9], %s2914
          %2916 = dma.done %s2913, 16
        $region68: #{tpu_custom_call.1} parent=63 // pred_fallthru
          _
        // Predicated region
        $region69: #{tpu_custom_call.1} parent=63 // pred_check
          %p2917 = pneg %p180
        $region70: #{tpu_custom_call.1} parent=63 // pred_check_branch
          %2919 = sbr.rel (%p2917) target = $region72
        $region71: #{tpu_custom_call.1} parent=63 // pred_region
          %s2920 = sand.u32 %s165, 1
          %s2921 = scalar_lea.sflag [#allocation11], %s2920
          %s2922 = sand.u32 %s165, 1
          %s2923 = scalar_lea.vmem [#allocation10], %s2922
          %2924 = dma.done %s2921, 16
        $region72: #{tpu_custom_call.1} parent=63 // pred_fallthru
          _
      $region64: #{tpu_custom_call.1} parent=5 // pred_fallthru
        _
    $region6: #{tpu_custom_call.1} parent=1 // loop_footer
      %s26 = sadd.s32 1, %s22
    $region7: #{tpu_custom_call.1} parent=1 // loop_footer_branch
      %21 = sbr.rel target = $region3
    $region8: #{tpu_custom_call.1} parent=1 // loop_exit
      _
    %2925 = vsyncpa [#allocation5], 1
    %s2926 = scalar_lea.sflag [#allocation5], 1
    %2927 = vsyncpa %s2926, 1
    %2928 = vsyncpa [#allocation8], 1
    %2929 = vsyncpa [#allocation6], 1
    %s2930 = scalar_lea.sflag [#allocation6], 1
    %2931 = vsyncpa %s2930, 1
    %2932 = vsyncpa [#allocation11], 1
    %s2933 = scalar_lea.sflag [#allocation11], 1
    %2934 = vsyncpa %s2933, 1

// kernel: tpu_custom_call.1
$region0: #{tpu_custom_call.1}
  #allocation0 [shape = 'u32[]', space=smem, size = 0x4, offset = 0x4, fixed_abs, tag = 'smem constant byte address 0x4 - core index']
  #allocation1 [shape = 'u32[144,128]{1,0:T(1,128)}', space=vmem, size = 0x12000, scoped, tag = 'internal scratch']
  #allocation2 [shape = 'f32[1,32]{1,0:T(1,128)}', space=vmem, size = 0x200, scoped, tag = 'scratch operand']
  #allocation3 [shape = 'f32[1,32]{1,0:T(1,128)}', space=vmem, size = 0x200, scoped, tag = 'scratch operand']
  %s0 = inlined_call_operand.hbm [shape: f32[2,256,128], index: 0, kind: input, shape index: {}]
  %s1 = inlined_call_operand.hbm [shape: f32[32,128], index: 1, kind: input, shape index: {}]
  %s2 = inlined_call_operand.vmem [shape: f32[1,128], index: 2, kind: input, shape index: {}]
  %s3 = inlined_call_operand.vmem [shape: f32[1,128], index: 3, kind: input, shape index: {}]
  %s4 = inlined_call_operand.hbm [shape: f32[2,1,128], index: 4, kind: output, shape index: {0}]
  %s5 = inlined_call_operand.hbm [shape: f32[2,1,128], index: 5, kind: output, shape index: {1}]
  %6 = xla_tuple %s4, %s5
  %s7 = sld [smem:[#allocation0]]
  $region73: #{tpu_custom_call.1} parent=0
    _
  %s9 = ssub.s32 1, %s7
  %s10 = scalar_select 0, %s9, %s7
  $region1: #{tpu_custom_call.1} parent=0
    #allocation4 [shape = 'u8[131072]{0}', space=vmem, size = 0x20000, scoped, tag = 'input window, operand 0']
    #allocation5 [shape = 's32[2]{0}', space=sflag, size = 0x8, scoped, tag = 'scoped memory for tpu_custom_call.1']
    #allocation6 [shape = 's32[2]{0}', space=sflag, size = 0x8, scoped, tag = 'scoped memory for tpu_custom_call.1']
    #allocation7 [shape = 'u8[16384]{0}', space=vmem, size = 0x4000, scoped, tag = 'input window, operand 1, single buffered']
    #allocation8 [shape = 's32[1]{0}', space=sflag, size = 0x4, scoped, tag = 'scoped memory for tpu_custom_call.1']
    #allocation9 [shape = 'u8[1024]{0}', space=vmem, size = 0x400, scoped, tag = 'output window, operand 0']
    #allocation10 [shape = 'u8[1024]{0}', space=vmem, size = 0x400, scoped, tag = 'output window, operand 1']
    #allocation11 [shape = 's32[2]{0}', space=sflag, size = 0x8, scoped, tag = 'scoped memory for tpu_custom_call.1']
    %11 = vsyncpa [#allocation5], 0
    %s12 = scalar_lea.sflag [#allocation5], 1
    %13 = vsyncpa %s12, 0
    %14 = vsyncpa [#allocation8], 0
    %15 = vsyncpa [#allocation6], 0
    %s16 = scalar_lea.sflag [#allocation6], 1
    %17 = vsyncpa %s16, 0
    %18 = vsyncpa [#allocation11], 0
    %s19 = scalar_lea.sflag [#allocation11], 1
    %20 = vsyncpa %s19, 0
    loop: start=0, step=1, limit=6
    $region2: #{tpu_custom_call.1} parent=1 // loop_pre_header
      _
    $region3: #{tpu_custom_call.1} parent=1 // loop_header
      %s22 = sphi 0, %s26
      %p23 = scmp.ge.s32.totalorder %s22, 6
      %s29 = sphi 0, %s41
      %s30 = sphi 0, %s37
      %s31 = sphi 0, %s29
      %s32 = sphi 0, %s30
      %s33 = sphi 0, %s31
      %s34 = sphi 0, %s32
      %s46 = sphi 0, %s48
      %s49 = sphi 0, %s46
      %s50 = sphi 0, %s49
      %s66 = sphi 0, %s50
      %s70 = sphi 0, %s70
      %s72 = sphi 0, %s70
      %s73 = sphi 0, %s72
      %s87 = sphi 0, %s73
      %s91 = sphi 0, %s91
      %s93 = sphi 0, %s91
      %s94 = sphi 0, %s93
      %s108 = sphi 0, %s94
      %s112 = sphi 0, %s112
      %s114 = sphi 0, %s112
      %s115 = sphi 0, %s114
      %s129 = sphi 0, %s115
      %s135 = sphi 0, %s137
      %s138 = sphi 0, %s135
      %s139 = sphi 0, %s138
      %s155 = sphi 0, %s139
      %s161 = sphi 0, %s163
      %s164 = sphi 0, %s161
      %s165 = sphi 0, %s164
      %s181 = sphi 0, %s165
    $region4: #{tpu_custom_call.1} parent=1 // loop_header_branch
      %25 = sbr.rel (%p23) target = $region8
    $region5: #{tpu_custom_call.1} parent=1 // loop_body
      %s27 = ssub.s32 %s22, 1
      %s28 = ssub.s32 %s22, 2
      %s35 = sadd.s32 1, %s30
      %p36 = scmp.ge.s32.totalorder %s35, 2
      %s37 = scalar_select %p36, 0, %s35
      %s38 = sadd.s32 1, %s29
      %s39 = scalar_select %p36, %s38, %s29
      %p40 = scmp.ge.s32.totalorder %s39, 2
      %s41 = scalar_select %p40, 0, %s39
      %s42 = ssub.s32 %s29, %s41
      %s43 = ssub.s32 %s30, %s37
      %s44 = sor.u32 %s42, %s43
      %p45 = scmp.eq.s32.totalorder %s44, 0
      %s47 = sadd.s32 %s46, 1
      %s48 = scalar_select %p45, %s46, %s47
      %p51 = pneg %p45
      %p52 = scmp.eq.s32.totalorder %s22, 3
      %p53 = por %p51, %p52
      %p54 = scmp.ne.s32.totalorder %s46, %s49
      %p55 = scmp.eq.s32.totalorder %s22, 0
      %p56 = por %p54, %p55
      %p57 = scmp.ne.s32.totalorder %s46, %s49
      %p58 = scmp.eq.s32.totalorder %s27, 3
      %p59 = por %p57, %p58
      %p60 = scmp.ne.s32.totalorder %s49, %s50
      %p61 = scmp.eq.s32.totalorder %s27, 0
      %p62 = por %p60, %p61
      %p63 = scmp.ne.s32.totalorder %s49, %s50
      %p64 = scmp.eq.s32.totalorder %s28, 3
      %p65 = por %p63, %p64
      %p67 = scmp.ne.s32.totalorder %s50, %s66
      %p68 = scmp.eq.s32.totalorder %s28, 0
      %p69 = por %p67, %p68
      %s71 = sadd.s32 %s70, 1
      %p74 = scmp.eq.s32.totalorder %s22, 3
      %p75 = scmp.ne.s32.totalorder %s70, %s72
      %p76 = scmp.eq.s32.totalorder %s22, 0
      %p77 = por %p75, %p76
      %p78 = scmp.ne.s32.totalorder %s70, %s72
      %p79 = scmp.eq.s32.totalorder %s27, 3
      %p80 = por %p78, %p79
      %p81 = scmp.ne.s32.totalorder %s72, %s73
      %p82 = scmp.eq.s32.totalorder %s27, 0
      %p83 = por %p81, %p82
      %p84 = scmp.ne.s32.totalorder %s72, %s73
      %p85 = scmp.eq.s32.totalorder %s28, 3
      %p86 = por %p84, %p85
      %p88 = scmp.ne.s32.totalorder %s73, %s87
      %p89 = scmp.eq.s32.totalorder %s28, 0
      %p90 = por %p88, %p89
      %s92 = sadd.s32 %s91, 1
      %p95 = scmp.eq.s32.totalorder %s22, 3
      %p96 = scmp.ne.s32.totalorder %s91, %s93
      %p97 = scmp.eq.s32.totalorder %s22, 0
      %p98 = por %p96, %p97
      %p99 = scmp.ne.s32.totalorder %s91, %s93
      %p100 = scmp.eq.s32.totalorder %s27, 3
      %p101 = por %p99, %p100
      %p102 = scmp.ne.s32.totalorder %s93, %s94
      %p103 = scmp.eq.s32.totalorder %s27, 0
      %p104 = por %p102, %p103
      %p105 = scmp.ne.s32.totalorder %s93, %s94
      %p106 = scmp.eq.s32.totalorder %s28, 3
      %p107 = por %p105, %p106
      %p109 = scmp.ne.s32.totalorder %s94, %s108
      %p110 = scmp.eq.s32.totalorder %s28, 0
      %p111 = por %p109, %p110
      %s113 = sadd.s32 %s112, 1
      %p116 = scmp.eq.s32.totalorder %s22, 3
      %p117 = scmp.ne.s32.totalorder %s112, %s114
      %p118 = scmp.eq.s32.totalorder %s22, 0
      %p119 = por %p117, %p118
      %p120 = scmp.ne.s32.totalorder %s112, %s114
      %p121 = scmp.eq.s32.totalorder %s27, 3
      %p122 = por %p120, %p121
      %p123 = scmp.ne.s32.totalorder %s114, %s115
      %p124 = scmp.eq.s32.totalorder %s27, 0
      %p125 = por %p123, %p124
      %p126 = scmp.ne.s32.totalorder %s114, %s115
      %p127 = scmp.eq.s32.totalorder %s28, 3
      %p128 = por %p126, %p127
      %p130 = scmp.ne.s32.totalorder %s115, %s129
      %p131 = scmp.eq.s32.totalorder %s28, 0
      %p132 = por %p130, %p131
      %s133 = ssub.s32 %s29, %s41
      %p134 = scmp.eq.s32.totalorder %s133, 0
      %s136 = sadd.s32 %s135, 1
      %s137 = scalar_select %p134, %s135, %s136
      %p140 = pneg %p134
      %p141 = scmp.eq.s32.totalorder %s22, 3
      %p142 = por %p140, %p141
      %p143 = scmp.ne.s32.totalorder %s135, %s138
      %p144 = scmp.eq.s32.totalorder %s22, 0
      %p145 = por %p143, %p144
      %p146 = scmp.ne.s32.totalorder %s135, %s138
      %p147 = scmp.eq.s32.totalorder %s27, 3
      %p148 = por %p146, %p147
      %p149 = scmp.ne.s32.totalorder %s138, %s139
      %p150 = scmp.eq.s32.totalorder %s27, 0
      %p151 = por %p149, %p150
      %p152 = scmp.ne.s32.totalorder %s138, %s139
      %p153 = scmp.eq.s32.totalorder %s28, 3
      %p154 = por %p152, %p153
      %p156 = scmp.ne.s32.totalorder %s139, %s155
      %p157 = scmp.eq.s32.totalorder %s28, 0
      %p158 = por %p156, %p157
      %s159 = ssub.s32 %s29, %s41
      %p160 = scmp.eq.s32.totalorder %s159, 0
      %s162 = sadd.s32 %s161, 1
      %s163 = scalar_select %p160, %s161, %s162
      %p166 = pneg %p160
      %p167 = scmp.eq.s32.totalorder %s22, 3
      %p168 = por %p166, %p167
      %p169 = scmp.ne.s32.totalorder %s161, %s164
      %p170 = scmp.eq.s32.totalorder %s22, 0
      %p171 = por %p169, %p170
      %p172 = scmp.ne.s32.totalorder %s161, %s164
      %p173 = scmp.eq.s32.totalorder %s27, 3
      %p174 = por %p172, %p173
      %p175 = scmp.ne.s32.totalorder %s164, %s165
      %p176 = scmp.eq.s32.totalorder %s27, 0
      %p177 = por %p175, %p176
      %p178 = scmp.ne.s32.totalorder %s164, %s165
      %p179 = scmp.eq.s32.totalorder %s28, 3
      %p180 = por %p178, %p179
      %p182 = scmp.ne.s32.totalorder %s165, %s181
      %p183 = scmp.eq.s32.totalorder %s28, 0
      %p184 = por %p182, %p183
      %p185 = scmp.le.s32.totalorder 1, %s22
      %p186 = scmp.lt.s32.totalorder %s22, 5
      %p187 = pnand %p185, %p186
      %p188 = pneg %p187
      // Predicated region
      $region9: #{tpu_custom_call.1} parent=5 // pred_check
        _
      $region10: #{tpu_custom_call.1} parent=5 // pred_check_branch
        %190 = sbr.rel (%p187) target = $region12
      $region11: #{tpu_custom_call.1} parent=5 // pred_region
        %s191 = ssub.s32 %s22, 1
        // Predicated region
        $region13: #{tpu_custom_call.1} parent=11 // pred_check
          %p192 = pneg %p83
        $region14: #{tpu_custom_call.1} parent=11 // pred_check_branch
          %194 = sbr.rel (%p192) target = $region16
        $region15: #{tpu_custom_call.1} parent=11 // pred_region
          %s196 = ssub.s32 512, 512
          %197 = vsyncadd [#allocation8], %s196
          %s198 = sshll.u32 [#allocation7], 4
          %s199 = int_to_ptr.vmem [resolvable:$true] %s198
          %204 = dma.hbm_to_vmem [thread:$0]  %s1, 512, %s199, [#allocation8], 128, 128, 8
        $region16: #{tpu_custom_call.1} parent=11 // pred_fallthru
          _
        // Predicated region
        $region17: #{tpu_custom_call.1} parent=11 // pred_check
          %p205 = pneg %p104
        $region18: #{tpu_custom_call.1} parent=11 // pred_check_branch
          %207 = sbr.rel (%p205) target = $region20
        $region19: #{tpu_custom_call.1} parent=11 // pred_region
          _
        $region20: #{tpu_custom_call.1} parent=11 // pred_fallthru
          _
        // Predicated region
        $region21: #{tpu_custom_call.1} parent=11 // pred_check
          %p208 = pneg %p125
        $region22: #{tpu_custom_call.1} parent=11 // pred_check_branch
          %210 = sbr.rel (%p208) target = $region24
        $region23: #{tpu_custom_call.1} parent=11 // pred_region
          _
        $region24: #{tpu_custom_call.1} parent=11 // pred_fallthru
          _
      $region12: #{tpu_custom_call.1} parent=5 // pred_fallthru
        _
      %p211 = scmp.lt.s32.totalorder %s22, 4
      // Predicated region
      $region25: #{tpu_custom_call.1} parent=5 // pred_check
        %p212 = pneg %p211
      $region26: #{tpu_custom_call.1} parent=5 // pred_check_branch
        %214 = sbr.rel (%p212) target = $region28
      $region27: #{tpu_custom_call.1} parent=5 // pred_region
        // Predicated region
        $region29: #{tpu_custom_call.1} parent=27 // pred_check
          %p215 = pneg %p56
        $region30: #{tpu_custom_call.1} parent=27 // pred_check_branch
          %217 = sbr.rel (%p215) target = $region32
        $region31: #{tpu_custom_call.1} parent=27 // pred_region
          %s218 = sand.u32 %s46, 1
          %s219 = scalar_lea.sflag [#allocation5], %s218
          %s220 = sand.u32 %s46, 1
          %s221 = smul.addr %s220, 128
          %s222 = scalar_lea.vmem [#allocation4], %s221
          %s223 = smul.u32 16, %s30
          %s225 = ssub.s32 2048, 2048
          %226 = vsyncadd %s219, %s225
          %s227 = smul.addr %s29, 32
          %s228 = sadd.s32 %s223, %s227
          %s229 = smul.addr %s228, 128
          %s230 = scalar_lea.hbm %s0, %s229
          %s231 = sshll.u32 %s222, 4
          %s232 = int_to_ptr.vmem [resolvable:$true] %s231
          %237 = dma.hbm_to_vmem [thread:$0]  %s230, 2048, %s232, %s219, 128, 128, 8
        $region32: #{tpu_custom_call.1} parent=27 // pred_fallthru
          _
      $region28: #{tpu_custom_call.1} parent=5 // pred_fallthru
        _
      %p238 = scmp.le.s32.totalorder 1, %s22
      %p239 = scmp.lt.s32.totalorder %s22, 5
      %p240 = pnand %p238, %p239
      %p241 = pneg %p240
      // Predicated region
      $region33: #{tpu_custom_call.1} parent=5 // pred_check
        _
      $region34: #{tpu_custom_call.1} parent=5 // pred_check_branch
        %243 = sbr.rel (%p240) target = $region36
      $region35: #{tpu_custom_call.1} parent=5 // pred_region
        %s244 = ssub.s32 %s22, 1
        %s245 = sand.u32 %s49, 1
        %s246 = scalar_lea.sflag [#allocation5], %s245
        %s247 = sand.u32 %s49, 1
        %s248 = smul.addr %s247, 128
        %s249 = scalar_lea.vmem [#allocation4], %s248
        // Predicated region
        $region37: #{tpu_custom_call.1} parent=35 // pred_check
          %p250 = pneg %p62
        $region38: #{tpu_custom_call.1} parent=35 // pred_check_branch
          %252 = sbr.rel (%p250) target = $region40
        $region39: #{tpu_custom_call.1} parent=35 // pred_region
          %253 = dma.done %s246, 2048
        $region40: #{tpu_custom_call.1} parent=35 // pred_fallthru
          _
        // Predicated region
        $region41: #{tpu_custom_call.1} parent=35 // pred_check
          %p254 = pneg %p83
        $region42: #{tpu_custom_call.1} parent=35 // pred_check_branch
          %256 = sbr.rel (%p254) target = $region44
        $region43: #{tpu_custom_call.1} parent=35 // pred_region
          %257 = dma.done [#allocation8], 512
        $region44: #{tpu_custom_call.1} parent=35 // pred_fallthru
          _
        %s258 = sand.u32 %s49, 1
        %s259 = scalar_lea.sflag [#allocation5], %s258
        %s260 = sand.u32 %s49, 1
        %s261 = smul.addr %s260, 128
        %s262 = scalar_lea.vmem [#allocation4], %s261
        %p263 = pneg %p62
        %p264 = pneg %p59
        %p265 = pneg %p83
        %p266 = pneg %p80
        %p267 = pneg %p104
        %p268 = pneg %p101
        %p269 = pneg %p125
        %p270 = pneg %p122
        %p271 = pneg %p151
        %p272 = pneg %p148
        %s273 = sand.u32 %s138, 1
        %s274 = scalar_lea.sflag [#allocation6], %s273
        %s275 = sand.u32 %s138, 1
        %s276 = scalar_lea.vmem [#allocation9], %s275
        %p277 = pneg %p177
        %p278 = pneg %p174
        %s279 = sand.u32 %s164, 1
        %s280 = scalar_lea.sflag [#allocation11], %s279
        %s281 = sand.u32 %s164, 1
        %s282 = scalar_lea.vmem [#allocation10], %s281
        %s283 = smul.u32 16, %s32
        %p284 = scmp.eq.s32.totalorder %s32, 0
        // Predicated region
        $region45: #{tpu_custom_call.1} parent=35 // pred_check
          %p285 = pneg %p284
        $region46: #{tpu_custom_call.1} parent=35 // pred_check_branch
          %287 = sbr.rel (%p285) target = $region48
        $region47: #{tpu_custom_call.1} parent=35 // pred_region
          %vm288 = vcmask 253952
          %289 = vst.msk [vmem:[#allocation2] sm:$0x1] %vm288, 0.0
          %290 = vst.msk [vmem:[#allocation3] sm:$0x1] %vm288, 0.0
        $region48: #{tpu_custom_call.1} parent=35 // pred_fallthru
          _
        %v291 = vld [vmem:[#allocation7] sm:$0xff]
        %v292 = vld [vmem:[#allocation7 + $0x8] sm:$0xff]
        %v293 = vld [vmem:[#allocation7 + $0x10] sm:$0xff]
        %v294 = vld [vmem:[#allocation7 + $0x18] sm:$0xff]
        %v295 = vld [vmem:[%s249] sm:$0xff]
        %v296 = vld [vmem:[%s249 + $0x8] sm:$0xff]
        %v297 = vld [vmem:[%s249 + $0x10] sm:$0xff]
        %v298 = vld [vmem:[%s249 + $0x18] sm:$0xff]
        %v299 = vld [vmem:[%s249 + $0x20] sm:$0xff]
        %v300 = vld [vmem:[%s249 + $0x28] sm:$0xff]
        %v301 = vld [vmem:[%s249 + $0x30] sm:$0xff]
        %v302 = vld [vmem:[%s249 + $0x38] sm:$0xff]
        %v303 = vld [vmem:[%s249 + $0x40] sm:$0xff]
        %v304 = vld [vmem:[%s249 + $0x48] sm:$0xff]
        %v305 = vld [vmem:[%s249 + $0x50] sm:$0xff]
        %v306 = vld [vmem:[%s249 + $0x58] sm:$0xff]
        %v307 = vld [vmem:[%s249 + $0x60] sm:$0xff]
        %v308 = vld [vmem:[%s249 + $0x68] sm:$0xff]
        %v309 = vld [vmem:[%s249 + $0x70] sm:$0xff]
        %v310 = vld [vmem:[%s249 + $0x78] sm:$0xff]
        %v311 = vadd.f32 %v295, %v296
        %v312 = vadd.f32 %v311, %v297
        %v313 = vadd.f32 %v312, %v298
        %v314 = vadd.f32 %v313, %v299
        %v315 = vadd.f32 %v314, %v300
        %v316 = vadd.f32 %v315, %v301
        %v317 = vadd.f32 %v316, %v302
        %v318 = vadd.f32 %v317, %v303
        %v319 = vadd.f32 %v318, %v304
        %v320 = vadd.f32 %v319, %v305
        %v321 = vadd.f32 %v320, %v306
        %v322 = vadd.f32 %v321, %v307
        %v323 = vadd.f32 %v322, %v308
        %v324 = vadd.f32 %v323, %v309
        %v325 = vadd.f32 %v324, %v310
        %v326 = vrot.slane %v325, 4
        %v327 = vadd.f32 %v325, %v326
        %v328 = vrot.slane %v327, 2
        %v329 = vadd.f32 %v327, %v328
        %v330 = vrot.slane %v329, 1
        %v331 = vadd.f32 %v329, %v330
        %332 = vmatprep.subr.mxu0 0.0
        %v333 = vand.u32 %v291, 4294901760
        %334 = vmatpush1.xpose.msra.mxu0 %v333
        %335 = vmatprep.subr.mxu0 0.0
        %v336 = vand.u32 %v292, 4294901760
        %337 = vmatpush1.xpose.msra.mxu0 %v336
        %338 = vmatprep.subr.mxu0 0.0
        %v339 = vand.u32 %v293, 4294901760
        %340 = vmatpush1.xpose.msra.mxu0 %v339
        %341 = vmatprep.subr.mxu0 0.0
        %v342 = vand.u32 %v294, 4294901760
        %343 = vmatpush1.xpose.msra.mxu0 %v342
        %344 = vmatprep.subr.mxu0 0.0
        %345 = vmatpush1.xpose.msra.mxu0 0.0
        %346 = vmatprep.subr.mxu0 0.0
        %347 = vmatpush1.xpose.msra.mxu0 0.0
        %348 = vmatprep.subr.mxu0 0.0
        %349 = vmatpush1.xpose.msra.mxu0 0.0
        %350 = vmatprep.subr.mxu0 0.0
        %351 = vmatpush1.xpose.msra.mxu0 0.0
        %352 = vmatprep.subr.mxu0 0.0
        %353 = vmatpush1.xpose.msra.mxu0 0.0
        %354 = vmatprep.subr.mxu0 0.0
        %355 = vmatpush1.xpose.msra.mxu0 0.0
        %356 = vmatprep.subr.mxu0 0.0
        %357 = vmatpush1.xpose.msra.mxu0 0.0
        %358 = vmatprep.subr.mxu0 0.0
        %359 = vmatpush1.xpose.msra.mxu0 0.0
        %360 = vmatprep.subr.mxu0 0.0
        %361 = vmatpush1.xpose.msra.mxu0 0.0
        %362 = vmatprep.subr.mxu0 0.0
        %363 = vmatpush1.xpose.msra.mxu0 0.0
        %364 = vmatprep.subr.mxu0 0.0
        %365 = vmatpush1.xpose.msra.mxu0 0.0
        %366 = vmatprep.subr.mxu0 0.0
        %367 = vmatpush1.xpose.msra.mxu0 0.0
        %368 = vmatprep.subr.mxu0 0.0
        %369 = vmatpush1.xpose.msra.mxu0 0.0
        %370 = vmatprep.subr.mxu0 0.0
        %371 = vmatpush1.xpose.msra.mxu0 0.0
        %372 = vmatprep.subr.mxu0 0.0
        %373 = vmatpush1.xpose.msra.mxu0 0.0
        %374 = vmatprep.subr.mxu0 0.0
        %375 = vmatpush1.xpose.msra.mxu0 0.0
        %376 = vmatprep.subr.mxu0 0.0
        %377 = vmatpush1.xpose.msra.mxu0 0.0
        %378 = vmatprep.subr.mxu0 0.0
        %379 = vmatpush1.xpose.msra.mxu0 0.0
        %380 = vmatprep.subr.mxu0 0.0
        %381 = vmatpush1.xpose.msra.mxu0 0.0
        %382 = vmatprep.subr.mxu0 0.0
        %383 = vmatpush1.xpose.msra.mxu0 0.0
        %384 = vmatprep.subr.mxu0 0.0
        %385 = vmatpush1.xpose.msra.mxu0 0.0
        %386 = vmatprep.subr.mxu0 0.0
        %387 = vmatpush1.xpose.msra.mxu0 0.0
        %388 = vmatprep.subr.mxu0 0.0
        %389 = vmatpush1.xpose.msra.mxu0 0.0
        %390 = vmatprep.subr.mxu0 0.0
        %391 = vmatpush1.xpose.msra.mxu0 0.0
        %392 = vmatprep.subr.mxu0 0.0
        %393 = vmatpush1.xpose.msra.mxu0 0.0
        %394 = vmatprep.subr.mxu0 0.0
        %395 = vmatpush1.xpose.msra.mxu0 0.0
        %396 = vmatprep.subr.mxu0 0.0
        %397 = vmatpush1.xpose.msra.mxu0 0.0
        %398 = vmatprep.subr.mxu0 0.0
        %399 = vmatpush1.xpose.msra.mxu0 0.0
        %400 = vmatprep.mubr.f32.mxu0 0.0
        %v401 = vand.u32 %v331, 4294901760
        %v402 = vsub.f32 %v331, %v401
        %v403 = vand.u32 %v402, 4294901760
        %v404 = vsub.f32 %v402, %v403
        %v405 = vand.u32 %v404, 4294901760
        %406 = vmatmul.mubr.f32.gmra.mrb[0].mxu0 %v405
        %v407 = vpop.f32.mrb[0].mxu0
        %v408 = vadd.f32 0.0, %v407
        %v409 = vpop.f32.mrb[0].mxu0
        %410 = vdwg.mxu0
        %411 = vmatprep.subr.mxu0 0.0
        %v412 = vand.u32 %v291, 4294901760
        %v413 = vsub.f32 %v291, %v412
        %v414 = vand.u32 %v413, 4294901760
        %v415 = vsub.f32 %v413, %v414
        %v416 = vand.u32 %v415, 4294901760
        %417 = vmatpush1.xpose.msra.mxu0 %v416
        %418 = vmatprep.subr.mxu0 0.0
        %v419 = vand.u32 %v292, 4294901760
        %v420 = vsub.f32 %v292, %v419
        %v421 = vand.u32 %v420, 4294901760
        %v422 = vsub.f32 %v420, %v421
        %v423 = vand.u32 %v422, 4294901760
        %424 = vmatpush1.xpose.msra.mxu0 %v423
        %425 = vmatprep.subr.mxu0 0.0
        %v426 = vand.u32 %v293, 4294901760
        %v427 = vsub.f32 %v293, %v426
        %v428 = vand.u32 %v427, 4294901760
        %v429 = vsub.f32 %v427, %v428
        %v430 = vand.u32 %v429, 4294901760
        %431 = vmatpush1.xpose.msra.mxu0 %v430
        %432 = vmatprep.subr.mxu0 0.0
        %v433 = vand.u32 %v294, 4294901760
        %v434 = vsub.f32 %v294, %v433
        %v435 = vand.u32 %v434, 4294901760
        %v436 = vsub.f32 %v434, %v435
        %v437 = vand.u32 %v436, 4294901760
        %438 = vmatpush1.xpose.msra.mxu0 %v437
        %439 = vmatprep.subr.mxu0 0.0
        %440 = vmatpush1.xpose.msra.mxu0 0.0
        %441 = vmatprep.subr.mxu0 0.0
        %442 = vmatpush1.xpose.msra.mxu0 0.0
        %443 = vmatprep.subr.mxu0 0.0
        %444 = vmatpush1.xpose.msra.mxu0 0.0
        %445 = vmatprep.subr.mxu0 0.0
        %446 = vmatpush1.xpose.msra.mxu0 0.0
        %447 = vmatprep.subr.mxu0 0.0
        %448 = vmatpush1.xpose.msra.mxu0 0.0
        %449 = vmatprep.subr.mxu0 0.0
        %450 = vmatpush1.xpose.msra.mxu0 0.0
        %451 = vmatprep.subr.mxu0 0.0
        %452 = vmatpush1.xpose.msra.mxu0 0.0
        %453 = vmatprep.subr.mxu0 0.0
        %454 = vmatpush1.xpose.msra.mxu0 0.0
        %455 = vmatprep.subr.mxu0 0.0
        %456 = vmatpush1.xpose.msra.mxu0 0.0
        %457 = vmatprep.subr.mxu0 0.0
        %458 = vmatpush1.xpose.msra.mxu0 0.0
        %459 = vmatprep.subr.mxu0 0.0
        %460 = vmatpush1.xpose.msra.mxu0 0.0
        %461 = vmatprep.subr.mxu0 0.0
        %462 = vmatpush1.xpose.msra.mxu0 0.0
        %463 = vmatprep.subr.mxu0 0.0
        %464 = vmatpush1.xpose.msra.mxu0 0.0
        %465 = vmatprep.subr.mxu0 0.0
        %466 = vmatpush1.xpose.msra.mxu0 0.0
        %467 = vmatprep.subr.mxu0 0.0
        %468 = vmatpush1.xpose.msra.mxu0 0.0
        %469 = vmatprep.subr.mxu0 0.0
        %470 = vmatpush1.xpose.msra.mxu0 0.0
        %471 = vmatprep.subr.mxu0 0.0
        %472 = vmatpush1.xpose.msra.mxu0 0.0
        %473 = vmatprep.subr.mxu0 0.0
        %474 = vmatpush1.xpose.msra.mxu0 0.0
        %475 = vmatprep.subr.mxu0 0.0
        %476 = vmatpush1.xpose.msra.mxu0 0.0
        %477 = vmatprep.subr.mxu0 0.0
        %478 = vmatpush1.xpose.msra.mxu0 0.0
        %479 = vmatprep.subr.mxu0 0.0
        %480 = vmatpush1.xpose.msra.mxu0 0.0
        %481 = vmatprep.subr.mxu0 0.0
        %482 = vmatpush1.xpose.msra.mxu0 0.0
        %483 = vmatprep.subr.mxu0 0.0
        %484 = vmatpush1.xpose.msra.mxu0 0.0
        %485 = vmatprep.subr.mxu0 0.0
        %486 = vmatpush1.xpose.msra.mxu0 0.0
        %487 = vmatprep.subr.mxu0 0.0
        %488 = vmatpush1.xpose.msra.mxu0 0.0
        %489 = vmatprep.subr.mxu0 0.0
        %490 = vmatpush1.xpose.msra.mxu0 0.0
        %491 = vmatprep.subr.mxu0 0.0
        %492 = vmatpush1.xpose.msra.mxu0 0.0
        %493 = vmatprep.subr.mxu0 0.0
        %494 = vmatpush1.xpose.msra.mxu0 0.0
        %495 = vmatprep.mubr.f32.mxu0 0.0
        %v496 = vand.u32 %v331, 4294901760
        %497 = vmatmul.mubr.f32.gmra.mrb[0].mxu0 %v496
        %v498 = vpop.f32.mrb[0].mxu0
        %v499 = vadd.f32 %v408, %v498
        %v500 = vpop.f32.mrb[0].mxu0
        %501 = vdwg.mxu0
        %502 = vmatprep.subr.mxu0 0.0
        %v503 = vand.u32 %v291, 4294901760
        %v504 = vsub.f32 %v291, %v503
        %505 = vmatpush1.xpose.msra.mxu0 %v504
        %506 = vmatprep.subr.mxu0 0.0
        %v507 = vand.u32 %v292, 4294901760
        %v508 = vsub.f32 %v292, %v507
        %509 = vmatpush1.xpose.msra.mxu0 %v508
        %510 = vmatprep.subr.mxu0 0.0
        %v511 = vand.u32 %v293, 4294901760
        %v512 = vsub.f32 %v293, %v511
        %513 = vmatpush1.xpose.msra.mxu0 %v512
        %514 = vmatprep.subr.mxu0 0.0
        %v515 = vand.u32 %v294, 4294901760
        %v516 = vsub.f32 %v294, %v515
        %517 = vmatpush1.xpose.msra.mxu0 %v516
        %518 = vmatprep.subr.mxu0 0.0
        %519 = vmatpush1.xpose.msra.mxu0 0.0
        %520 = vmatprep.subr.mxu0 0.0
        %521 = vmatpush1.xpose.msra.mxu0 0.0
        %522 = vmatprep.subr.mxu0 0.0
        %523 = vmatpush1.xpose.msra.mxu0 0.0
        %524 = vmatprep.subr.mxu0 0.0
        %525 = vmatpush1.xpose.msra.mxu0 0.0
        %526 = vmatprep.subr.mxu0 0.0
        %527 = vmatpush1.xpose.msra.mxu0 0.0
        %528 = vmatprep.subr.mxu0 0.0
        %529 = vmatpush1.xpose.msra.mxu0 0.0
        %530 = vmatprep.subr.mxu0 0.0
        %531 = vmatpush1.xpose.msra.mxu0 0.0
        %532 = vmatprep.subr.mxu0 0.0
        %533 = vmatpush1.xpose.msra.mxu0 0.0
        %534 = vmatprep.subr.mxu0 0.0
        %535 = vmatpush1.xpose.msra.mxu0 0.0
        %536 = vmatprep.subr.mxu0 0.0
        %537 = vmatpush1.xpose.msra.mxu0 0.0
        %538 = vmatprep.subr.mxu0 0.0
        %539 = vmatpush1.xpose.msra.mxu0 0.0
        %540 = vmatprep.subr.mxu0 0.0
        %541 = vmatpush1.xpose.msra.mxu0 0.0
        %542 = vmatprep.subr.mxu0 0.0
        %543 = vmatpush1.xpose.msra.mxu0 0.0
        %544 = vmatprep.subr.mxu0 0.0
        %545 = vmatpush1.xpose.msra.mxu0 0.0
        %546 = vmatprep.subr.mxu0 0.0
        %547 = vmatpush1.xpose.msra.mxu0 0.0
        %548 = vmatprep.subr.mxu0 0.0
        %549 = vmatpush1.xpose.msra.mxu0 0.0
        %550 = vmatprep.subr.mxu0 0.0
        %551 = vmatpush1.xpose.msra.mxu0 0.0
        %552 = vmatprep.subr.mxu0 0.0
        %553 = vmatpush1.xpose.msra.mxu0 0.0
        %554 = vmatprep.subr.mxu0 0.0
        %555 = vmatpush1.xpose.msra.mxu0 0.0
        %556 = vmatprep.subr.mxu0 0.0
        %557 = vmatpush1.xpose.msra.mxu0 0.0
        %558 = vmatprep.subr.mxu0 0.0
        %559 = vmatpush1.xpose.msra.mxu0 0.0
        %560 = vmatprep.subr.mxu0 0.0
        %561 = vmatpush1.xpose.msra.mxu0 0.0
        %562 = vmatprep.subr.mxu0 0.0
        %563 = vmatpush1.xpose.msra.mxu0 0.0
        %564 = vmatprep.subr.mxu0 0.0
        %565 = vmatpush1.xpose.msra.mxu0 0.0
        %566 = vmatprep.subr.mxu0 0.0
        %567 = vmatpush1.xpose.msra.mxu0 0.0
        %568 = vmatprep.subr.mxu0 0.0
        %569 = vmatpush1.xpose.msra.mxu0 0.0
        %570 = vmatprep.subr.mxu0 0.0
        %571 = vmatpush1.xpose.msra.mxu0 0.0
        %572 = vmatprep.subr.mxu0 0.0
        %573 = vmatpush1.xpose.msra.mxu0 0.0
        %574 = vmatprep.mubr.f32.mxu0 0.0
        %v575 = vand.u32 %v331, 4294901760
        %v576 = vsub.f32 %v331, %v575
        %577 = vmatmul.mubr.f32.gmra.mrb[0].mxu0 %v576
        %v578 = vpop.f32.mrb[0].mxu0
        %v579 = vadd.f32 %v499, %v578
        %v580 = vpop.f32.mrb[0].mxu0
        %581 = vdwg.mxu0
        %582 = vmatprep.subr.mxu0 0.0
        %v583 = vand.u32 %v291, 4294901760
        %584 = vmatpush1.xpose.msra.mxu0 %v583
        %585 = vmatprep.subr.mxu0 0.0
        %v586 = vand.u32 %v292, 4294901760
        %587 = vmatpush1.xpose.msra.mxu0 %v586
        %588 = vmatprep.subr.mxu0 0.0
        %v589 = vand.u32 %v293, 4294901760
        %590 = vmatpush1.xpose.msra.mxu0 %v589
        %591 = vmatprep.subr.mxu0 0.0
        %v592 = vand.u32 %v294, 4294901760
        %593 = vmatpush1.xpose.msra.mxu0 %v592
        %594 = vmatprep.subr.mxu0 0.0
        %595 = vmatpush1.xpose.msra.mxu0 0.0
        %596 = vmatprep.subr.mxu0 0.0
        %597 = vmatpush1.xpose.msra.mxu0 0.0
        %598 = vmatprep.subr.mxu0 0.0
        %599 = vmatpush1.xpose.msra.mxu0 0.0
        %600 = vmatprep.subr.mxu0 0.0
        %601 = vmatpush1.xpose.msra.mxu0 0.0
        %602 = vmatprep.subr.mxu0 0.0
        %603 = vmatpush1.xpose.msra.mxu0 0.0
        %604 = vmatprep.subr.mxu0 0.0
        %605 = vmatpush1.xpose.msra.mxu0 0.0
        %606 = vmatprep.subr.mxu0 0.0
        %607 = vmatpush1.xpose.msra.mxu0 0.0
        %608 = vmatprep.subr.mxu0 0.0
        %609 = vmatpush1.xpose.msra.mxu0 0.0
        %610 = vmatprep.subr.mxu0 0.0
        %611 = vmatpush1.xpose.msra.mxu0 0.0
        %612 = vmatprep.subr.mxu0 0.0
        %613 = vmatpush1.xpose.msra.mxu0 0.0
        %614 = vmatprep.subr.mxu0 0.0
        %615 = vmatpush1.xpose.msra.mxu0 0.0
        %616 = vmatprep.subr.mxu0 0.0
        %617 = vmatpush1.xpose.msra.mxu0 0.0
        %618 = vmatprep.subr.mxu0 0.0
        %619 = vmatpush1.xpose.msra.mxu0 0.0
        %620 = vmatprep.subr.mxu0 0.0
        %621 = vmatpush1.xpose.msra.mxu0 0.0
        %622 = vmatprep.subr.mxu0 0.0
        %623 = vmatpush1.xpose.msra.mxu0 0.0
        %624 = vmatprep.subr.mxu0 0.0
        %625 = vmatpush1.xpose.msra.mxu0 0.0
        %626 = vmatprep.subr.mxu0 0.0
        %627 = vmatpush1.xpose.msra.mxu0 0.0
        %628 = vmatprep.subr.mxu0 0.0
        %629 = vmatpush1.xpose.msra.mxu0 0.0
        %630 = vmatprep.subr.mxu0 0.0
        %631 = vmatpush1.xpose.msra.mxu0 0.0
        %632 = vmatprep.subr.mxu0 0.0
        %633 = vmatpush1.xpose.msra.mxu0 0.0
        %634 = vmatprep.subr.mxu0 0.0
        %635 = vmatpush1.xpose.msra.mxu0 0.0
        %636 = vmatprep.subr.mxu0 0.0
        %637 = vmatpush1.xpose.msra.mxu0 0.0
        %638 = vmatprep.subr.mxu0 0.0
        %639 = vmatpush1.xpose.msra.mxu0 0.0
        %640 = vmatprep.subr.mxu0 0.0
        %641 = vmatpush1.xpose.msra.mxu0 0.0
        %642 = vmatprep.subr.mxu0 0.0
        %643 = vmatpush1.xpose.msra.mxu0 0.0
        %644 = vmatprep.subr.mxu0 0.0
        %645 = vmatpush1.xpose.msra.mxu0 0.0
        %646 = vmatprep.subr.mxu0 0.0
        %647 = vmatpush1.xpose.msra.mxu0 0.0
        %648 = vmatprep.subr.mxu0 0.0
        %649 = vmatpush1.xpose.msra.mxu0 0.0
        %650 = vmatprep.mubr.f32.mxu0 0.0
        %v651 = vand.u32 %v331, 4294901760
        %v652 = vsub.f32 %v331, %v651
        %v653 = vand.u32 %v652, 4294901760
        %654 = vmatmul.mubr.f32.gmra.mrb[0].mxu0 %v653
        %v655 = vpop.f32.mrb[0].mxu0
        %v656 = vadd.f32 %v579, %v655
        %v657 = vpop.f32.mrb[0].mxu0
        %658 = vdwg.mxu0
        %659 = vmatprep.subr.mxu0 0.0
        %v660 = vand.u32 %v291, 4294901760
        %v661 = vsub.f32 %v291, %v660
        %v662 = vand.u32 %v661, 4294901760
        %663 = vmatpush1.xpose.msra.mxu0 %v662
        %664 = vmatprep.subr.mxu0 0.0
        %v665 = vand.u32 %v292, 4294901760
        %v666 = vsub.f32 %v292, %v665
        %v667 = vand.u32 %v666, 4294901760
        %668 = vmatpush1.xpose.msra.mxu0 %v667
        %669 = vmatprep.subr.mxu0 0.0
        %v670 = vand.u32 %v293, 4294901760
        %v671 = vsub.f32 %v293, %v670
        %v672 = vand.u32 %v671, 4294901760
        %673 = vmatpush1.xpose.msra.mxu0 %v672
        %674 = vmatprep.subr.mxu0 0.0
        %v675 = vand.u32 %v294, 4294901760
        %v676 = vsub.f32 %v294, %v675
        %v677 = vand.u32 %v676, 4294901760
        %678 = vmatpush1.xpose.msra.mxu0 %v677
        %679 = vmatprep.subr.mxu0 0.0
        %680 = vmatpush1.xpose.msra.mxu0 0.0
        %681 = vmatprep.subr.mxu0 0.0
        %682 = vmatpush1.xpose.msra.mxu0 0.0
        %683 = vmatprep.subr.mxu0 0.0
        %684 = vmatpush1.xpose.msra.mxu0 0.0
        %685 = vmatprep.subr.mxu0 0.0
        %686 = vmatpush1.xpose.msra.mxu0 0.0
        %687 = vmatprep.subr.mxu0 0.0
        %688 = vmatpush1.xpose.msra.mxu0 0.0
        %689 = vmatprep.subr.mxu0 0.0
        %690 = vmatpush1.xpose.msra.mxu0 0.0
        %691 = vmatprep.subr.mxu0 0.0
        %692 = vmatpush1.xpose.msra.mxu0 0.0
        %693 = vmatprep.subr.mxu0 0.0
        %694 = vmatpush1.xpose.msra.mxu0 0.0
        %695 = vmatprep.subr.mxu0 0.0
        %696 = vmatpush1.xpose.msra.mxu0 0.0
        %697 = vmatprep.subr.mxu0 0.0
        %698 = vmatpush1.xpose.msra.mxu0 0.0
        %699 = vmatprep.subr.mxu0 0.0
        %700 = vmatpush1.xpose.msra.mxu0 0.0
        %701 = vmatprep.subr.mxu0 0.0
        %702 = vmatpush1.xpose.msra.mxu0 0.0
        %703 = vmatprep.subr.mxu0 0.0
        %704 = vmatpush1.xpose.msra.mxu0 0.0
        %705 = vmatprep.subr.mxu0 0.0
        %706 = vmatpush1.xpose.msra.mxu0 0.0
        %707 = vmatprep.subr.mxu0 0.0
        %708 = vmatpush1.xpose.msra.mxu0 0.0
        %709 = vmatprep.subr.mxu0 0.0
        %710 = vmatpush1.xpose.msra.mxu0 0.0
        %711 = vmatprep.subr.mxu0 0.0
        %712 = vmatpush1.xpose.msra.mxu0 0.0
        %713 = vmatprep.subr.mxu0 0.0
        %714 = vmatpush1.xpose.msra.mxu0 0.0
        %715 = vmatprep.subr.mxu0 0.0
        %716 = vmatpush1.xpose.msra.mxu0 0.0
        %717 = vmatprep.subr.mxu0 0.0
        %718 = vmatpush1.xpose.msra.mxu0 0.0
        %719 = vmatprep.subr.mxu0 0.0
        %720 = vmatpush1.xpose.msra.mxu0 0.0
        %721 = vmatprep.subr.mxu0 0.0
        %722 = vmatpush1.xpose.msra.mxu0 0.0
        %723 = vmatprep.subr.mxu0 0.0
        %724 = vmatpush1.xpose.msra.mxu0 0.0
        %725 = vmatprep.subr.mxu0 0.0
        %726 = vmatpush1.xpose.msra.mxu0 0.0
        %727 = vmatprep.subr.mxu0 0.0
        %728 = vmatpush1.xpose.msra.mxu0 0.0
        %729 = vmatprep.subr.mxu0 0.0
        %730 = vmatpush1.xpose.msra.mxu0 0.0
        %731 = vmatprep.subr.mxu0 0.0
        %732 = vmatpush1.xpose.msra.mxu0 0.0
        %733 = vmatprep.subr.mxu0 0.0
        %734 = vmatpush1.xpose.msra.mxu0 0.0
        %735 = vmatprep.mubr.f32.mxu0 0.0
        %v736 = vand.u32 %v331, 4294901760
        %737 = vmatmul.mubr.f32.gmra.mrb[0].mxu0 %v736
        %v738 = vpop.f32.mrb[0].mxu0
        %v739 = vadd.f32 %v656, %v738
        %v740 = vpop.f32.mrb[0].mxu0
        %741 = vdwg.mxu0
        %742 = vmatprep.subr.mxu0 0.0
        %v743 = vand.u32 %v291, 4294901760
        %744 = vmatpush1.xpose.msra.mxu0 %v743
        %745 = vmatprep.subr.mxu0 0.0
        %v746 = vand.u32 %v292, 4294901760
        %747 = vmatpush1.xpose.msra.mxu0 %v746
        %748 = vmatprep.subr.mxu0 0.0
        %v749 = vand.u32 %v293, 4294901760
        %750 = vmatpush1.xpose.msra.mxu0 %v749
        %751 = vmatprep.subr.mxu0 0.0
        %v752 = vand.u32 %v294, 4294901760
        %753 = vmatpush1.xpose.msra.mxu0 %v752
        %754 = vmatprep.subr.mxu0 0.0
        %755 = vmatpush1.xpose.msra.mxu0 0.0
        %756 = vmatprep.subr.mxu0 0.0
        %757 = vmatpush1.xpose.msra.mxu0 0.0
        %758 = vmatprep.subr.mxu0 0.0
        %759 = vmatpush1.xpose.msra.mxu0 0.0
        %760 = vmatprep.subr.mxu0 0.0
        %761 = vmatpush1.xpose.msra.mxu0 0.0
        %762 = vmatprep.subr.mxu0 0.0
        %763 = vmatpush1.xpose.msra.mxu0 0.0
        %764 = vmatprep.subr.mxu0 0.0
        %765 = vmatpush1.xpose.msra.mxu0 0.0
        %766 = vmatprep.subr.mxu0 0.0
        %767 = vmatpush1.xpose.msra.mxu0 0.0
        %768 = vmatprep.subr.mxu0 0.0
        %769 = vmatpush1.xpose.msra.mxu0 0.0
        %770 = vmatprep.subr.mxu0 0.0
        %771 = vmatpush1.xpose.msra.mxu0 0.0
        %772 = vmatprep.subr.mxu0 0.0
        %773 = vmatpush1.xpose.msra.mxu0 0.0
        %774 = vmatprep.subr.mxu0 0.0
        %775 = vmatpush1.xpose.msra.mxu0 0.0
        %776 = vmatprep.subr.mxu0 0.0
        %777 = vmatpush1.xpose.msra.mxu0 0.0
        %778 = vmatprep.subr.mxu0 0.0
        %779 = vmatpush1.xpose.msra.mxu0 0.0
        %780 = vmatprep.subr.mxu0 0.0
        %781 = vmatpush1.xpose.msra.mxu0 0.0
        %782 = vmatprep.subr.mxu0 0.0
        %783 = vmatpush1.xpose.msra.mxu0 0.0
        %784 = vmatprep.subr.mxu0 0.0
        %785 = vmatpush1.xpose.msra.mxu0 0.0
        %786 = vmatprep.subr.mxu0 0.0
        %787 = vmatpush1.xpose.msra.mxu0 0.0
        %788 = vmatprep.subr.mxu0 0.0
        %789 = vmatpush1.xpose.msra.mxu0 0.0
        %790 = vmatprep.subr.mxu0 0.0
        %791 = vmatpush1.xpose.msra.mxu0 0.0
        %792 = vmatprep.subr.mxu0 0.0
        %793 = vmatpush1.xpose.msra.mxu0 0.0
        %794 = vmatprep.subr.mxu0 0.0
        %795 = vmatpush1.xpose.msra.mxu0 0.0
        %796 = vmatprep.subr.mxu0 0.0
        %797 = vmatpush1.xpose.msra.mxu0 0.0
        %798 = vmatprep.subr.mxu0 0.0
        %799 = vmatpush1.xpose.msra.mxu0 0.0
        %800 = vmatprep.subr.mxu0 0.0
        %801 = vmatpush1.xpose.msra.mxu0 0.0
        %802 = vmatprep.subr.mxu0 0.0
        %803 = vmatpush1.xpose.msra.mxu0 0.0
        %804 = vmatprep.subr.mxu0 0.0
        %805 = vmatpush1.xpose.msra.mxu0 0.0
        %806 = vmatprep.subr.mxu0 0.0
        %807 = vmatpush1.xpose.msra.mxu0 0.0
        %808 = vmatprep.subr.mxu0 0.0
        %809 = vmatpush1.xpose.msra.mxu0 0.0
        %810 = vmatprep.mubr.f32.mxu0 0.0
        %v811 = vand.u32 %v331, 4294901760
        %812 = vmatmul.mubr.f32.gmra.mrb[0].mxu0 %v811
        %v813 = vpop.f32.mrb[0].mxu0
        %v814 = vadd.f32 %v739, %v813
        %v815 = vpop.f32.mrb[0].mxu0
        %816 = vdwg.mxu0
        %v817 = vrcp.pop 512.0
        %v818 = vmul.f32 %v814, %v817
        %vm819 = vcmask 261120
        %v821 = vsel %vm819, %v818, 0
        %823 = vmatprep.subr.mxu0 0.0
        %v824 = vand.u32 %v291, 4294901760
        %825 = vmatpush1.msra.mxu0 %v824
        %826 = vmatprep.subr.mxu0 0.0
        %v827 = vand.u32 %v292, 4294901760
        %828 = vmatpush1.msra.mxu0 %v827
        %829 = vmatprep.subr.mxu0 0.0
        %v830 = vand.u32 %v293, 4294901760
        %831 = vmatpush1.msra.mxu0 %v830
        %832 = vmatprep.subr.mxu0 0.0
        %v833 = vand.u32 %v294, 4294901760
        %834 = vmatpush1.msra.mxu0 %v833
        %835 = vmatprep.subr.mxu0 0.0
        %836 = vmatpush1.msra.mxu0 0.0
        %837 = vmatprep.subr.mxu0 0.0
        %838 = vmatpush1.msra.mxu0 0.0
        %839 = vmatprep.subr.mxu0 0.0
        %840 = vmatpush1.msra.mxu0 0.0
        %841 = vmatprep.subr.mxu0 0.0
        %842 = vmatpush1.msra.mxu0 0.0
        %843 = vmatprep.subr.mxu0 0.0
        %844 = vmatpush1.msra.mxu0 0.0
        %845 = vmatprep.subr.mxu0 0.0
        %846 = vmatpush1.msra.mxu0 0.0
        %847 = vmatprep.subr.mxu0 0.0
        %848 = vmatpush1.msra.mxu0 0.0
        %849 = vmatprep.subr.mxu0 0.0
        %850 = vmatpush1.msra.mxu0 0.0
        %851 = vmatprep.subr.mxu0 0.0
        %852 = vmatpush1.msra.mxu0 0.0
        %853 = vmatprep.subr.mxu0 0.0
        %854 = vmatpush1.msra.mxu0 0.0
        %855 = vmatprep.subr.mxu0 0.0
        %856 = vmatpush1.msra.mxu0 0.0
        %857 = vmatprep.subr.mxu0 0.0
        %858 = vmatpush1.msra.mxu0 0.0
        %859 = vmatprep.subr.mxu0 0.0
        %860 = vmatpush1.msra.mxu0 0.0
        %861 = vmatprep.subr.mxu0 0.0
        %862 = vmatpush1.msra.mxu0 0.0
        %863 = vmatprep.subr.mxu0 0.0
        %864 = vmatpush1.msra.mxu0 0.0
        %865 = vmatprep.subr.mxu0 0.0
        %866 = vmatpush1.msra.mxu0 0.0
        %867 = vmatprep.subr.mxu0 0.0
        %868 = vmatpush1.msra.mxu0 0.0
        %869 = vmatprep.subr.mxu0 0.0
        %870 = vmatpush1.msra.mxu0 0.0
        %871 = vmatprep.subr.mxu0 0.0
        %872 = vmatpush1.msra.mxu0 0.0
        %873 = vmatprep.subr.mxu0 0.0
        %874 = vmatpush1.msra.mxu0 0.0
        %875 = vmatprep.subr.mxu0 0.0
        %876 = vmatpush1.msra.mxu0 0.0
        %877 = vmatprep.subr.mxu0 0.0
        %878 = vmatpush1.msra.mxu0 0.0
        %879 = vmatprep.subr.mxu0 0.0
        %880 = vmatpush1.msra.mxu0 0.0
        %881 = vmatprep.subr.mxu0 0.0
        %882 = vmatpush1.msra.mxu0 0.0
        %883 = vmatprep.subr.mxu0 0.0
        %884 = vmatpush1.msra.mxu0 0.0
        %885 = vmatprep.subr.mxu0 0.0
        %886 = vmatpush1.msra.mxu0 0.0
        %887 = vmatprep.subr.mxu0 0.0
        %888 = vmatpush1.msra.mxu0 0.0
        %889 = vmatprep.subr.mxu0 0.0
        %890 = vmatpush1.msra.mxu0 0.0
        %891 = vmatprep.mubr.f32.mxu0 0.0
        %v892 = vand.u32 %v821, 4294901760
        %v893 = vsub.f32 %v821, %v892
        %v894 = vand.u32 %v893, 4294901760
        %v895 = vsub.f32 %v893, %v894
        %v896 = vand.u32 %v895, 4294901760
        %897 = vmatmul.mubr.f32.gmra.mrb[0].mxu0 %v896
        %v898 = vpop.f32.mrb[0].mxu0
        %v899 = vadd.f32 0.0, %v898
        %v900 = vpop.f32.mrb[0].mxu0
        %901 = vdwg.mxu0
        %902 = vmatprep.subr.mxu0 0.0
        %v903 = vand.u32 %v291, 4294901760
        %v904 = vsub.f32 %v291, %v903
        %v905 = vand.u32 %v904, 4294901760
        %v906 = vsub.f32 %v904, %v905
        %v907 = vand.u32 %v906, 4294901760
        %908 = vmatpush1.msra.mxu0 %v907
        %909 = vmatprep.subr.mxu0 0.0
        %v910 = vand.u32 %v292, 4294901760
        %v911 = vsub.f32 %v292, %v910
        %v912 = vand.u32 %v911, 4294901760
        %v913 = vsub.f32 %v911, %v912
        %v914 = vand.u32 %v913, 4294901760
        %915 = vmatpush1.msra.mxu0 %v914
        %916 = vmatprep.subr.mxu0 0.0
        %v917 = vand.u32 %v293, 4294901760
        %v918 = vsub.f32 %v293, %v917
        %v919 = vand.u32 %v918, 4294901760
        %v920 = vsub.f32 %v918, %v919
        %v921 = vand.u32 %v920, 4294901760
        %922 = vmatpush1.msra.mxu0 %v921
        %923 = vmatprep.subr.mxu0 0.0
        %v924 = vand.u32 %v294, 4294901760
        %v925 = vsub.f32 %v294, %v924
        %v926 = vand.u32 %v925, 4294901760
        %v927 = vsub.f32 %v925, %v926
        %v928 = vand.u32 %v927, 4294901760
        %929 = vmatpush1.msra.mxu0 %v928
        %930 = vmatprep.subr.mxu0 0.0
        %931 = vmatpush1.msra.mxu0 0.0
        %932 = vmatprep.subr.mxu0 0.0
        %933 = vmatpush1.msra.mxu0 0.0
        %934 = vmatprep.subr.mxu0 0.0
        %935 = vmatpush1.msra.mxu0 0.0
        %936 = vmatprep.subr.mxu0 0.0
        %937 = vmatpush1.msra.mxu0 0.0
        %938 = vmatprep.subr.mxu0 0.0
        %939 = vmatpush1.msra.mxu0 0.0
        %940 = vmatprep.subr.mxu0 0.0
        %941 = vmatpush1.msra.mxu0 0.0
        %942 = vmatprep.subr.mxu0 0.0
        %943 = vmatpush1.msra.mxu0 0.0
        %944 = vmatprep.subr.mxu0 0.0
        %945 = vmatpush1.msra.mxu0 0.0
        %946 = vmatprep.subr.mxu0 0.0
        %947 = vmatpush1.msra.mxu0 0.0
        %948 = vmatprep.subr.mxu0 0.0
        %949 = vmatpush1.msra.mxu0 0.0
        %950 = vmatprep.subr.mxu0 0.0
        %951 = vmatpush1.msra.mxu0 0.0
        %952 = vmatprep.subr.mxu0 0.0
        %953 = vmatpush1.msra.mxu0 0.0
        %954 = vmatprep.subr.mxu0 0.0
        %955 = vmatpush1.msra.mxu0 0.0
        %956 = vmatprep.subr.mxu0 0.0
        %957 = vmatpush1.msra.mxu0 0.0
        %958 = vmatprep.subr.mxu0 0.0
        %959 = vmatpush1.msra.mxu0 0.0
        %960 = vmatprep.subr.mxu0 0.0
        %961 = vmatpush1.msra.mxu0 0.0
        %962 = vmatprep.subr.mxu0 0.0
        %963 = vmatpush1.msra.mxu0 0.0
        %964 = vmatprep.subr.mxu0 0.0
        %965 = vmatpush1.msra.mxu0 0.0
        %966 = vmatprep.subr.mxu0 0.0
        %967 = vmatpush1.msra.mxu0 0.0
        %968 = vmatprep.subr.mxu0 0.0
        %969 = vmatpush1.msra.mxu0 0.0
        %970 = vmatprep.subr.mxu0 0.0
        %971 = vmatpush1.msra.mxu0 0.0
        %972 = vmatprep.subr.mxu0 0.0
        %973 = vmatpush1.msra.mxu0 0.0
        %974 = vmatprep.subr.mxu0 0.0
        %975 = vmatpush1.msra.mxu0 0.0
        %976 = vmatprep.subr.mxu0 0.0
        %977 = vmatpush1.msra.mxu0 0.0
        %978 = vmatprep.subr.mxu0 0.0
        %979 = vmatpush1.msra.mxu0 0.0
        %980 = vmatprep.subr.mxu0 0.0
        %981 = vmatpush1.msra.mxu0 0.0
        %982 = vmatprep.subr.mxu0 0.0
        %983 = vmatpush1.msra.mxu0 0.0
        %984 = vmatprep.subr.mxu0 0.0
        %985 = vmatpush1.msra.mxu0 0.0
        %986 = vmatprep.mubr.f32.mxu0 0.0
        %v987 = vand.u32 %v821, 4294901760
        %988 = vmatmul.mubr.f32.gmra.mrb[0].mxu0 %v987
        %v989 = vpop.f32.mrb[0].mxu0
        %v990 = vadd.f32 %v899, %v989
        %v991 = vpop.f32.mrb[0].mxu0
        %992 = vdwg.mxu0
        %993 = vmatprep.subr.mxu0 0.0
        %v994 = vand.u32 %v291, 4294901760
        %v995 = vsub.f32 %v291, %v994
        %996 = vmatpush1.msra.mxu0 %v995
        %997 = vmatprep.subr.mxu0 0.0
        %v998 = vand.u32 %v292, 4294901760
        %v999 = vsub.f32 %v292, %v998
        %1000 = vmatpush1.msra.mxu0 %v999
        %1001 = vmatprep.subr.mxu0 0.0
        %v1002 = vand.u32 %v293, 4294901760
        %v1003 = vsub.f32 %v293, %v1002
        %1004 = vmatpush1.msra.mxu0 %v1003
        %1005 = vmatprep.subr.mxu0 0.0
        %v1006 = vand.u32 %v294, 4294901760
        %v1007 = vsub.f32 %v294, %v1006
        %1008 = vmatpush1.msra.mxu0 %v1007
        %1009 = vmatprep.subr.mxu0 0.0
        %1010 = vmatpush1.msra.mxu0 0.0
        %1011 = vmatprep.subr.mxu0 0.0
        %1012 = vmatpush1.msra.mxu0 0.0
        %1013 = vmatprep.subr.mxu0 0.0
        %1014 = vmatpush1.msra.mxu0 0.0
        %1015 = vmatprep.subr.mxu0 0.0
        %1016 = vmatpush1.msra.mxu0 0.0
        %1017 = vmatprep.subr.mxu0 0.0
        %1018 = vmatpush1.msra.mxu0 0.0
        %1019 = vmatprep.subr.mxu0 0.0
        %1020 = vmatpush1.msra.mxu0 0.0
        %1021 = vmatprep.subr.mxu0 0.0
        %1022 = vmatpush1.msra.mxu0 0.0
        %1023 = vmatprep.subr.mxu0 0.0
        %1024 = vmatpush1.msra.mxu0 0.0
        %1025 = vmatprep.subr.mxu0 0.0
        %1026 = vmatpush1.msra.mxu0 0.0
        %1027 = vmatprep.subr.mxu0 0.0
        %1028 = vmatpush1.msra.mxu0 0.0
        %1029 = vmatprep.subr.mxu0 0.0
        %1030 = vmatpush1.msra.mxu0 0.0
        %1031 = vmatprep.subr.mxu0 0.0
        %1032 = vmatpush1.msra.mxu0 0.0
        %1033 = vmatprep.subr.mxu0 0.0
        %1034 = vmatpush1.msra.mxu0 0.0
        %1035 = vmatprep.subr.mxu0 0.0
        %1036 = vmatpush1.msra.mxu0 0.0
        %1037 = vmatprep.subr.mxu0 0.0
        %1038 = vmatpush1.msra.mxu0 0.0
        %1039 = vmatprep.subr.mxu0 0.0
        %1040 = vmatpush1.msra.mxu0 0.0
        %1041 = vmatprep.subr.mxu0 0.0
        %1042 = vmatpush1.msra.mxu0 0.0
        %1043 = vmatprep.subr.mxu0 0.0
        %1044 = vmatpush1.msra.mxu0 0.0
        %1045 = vmatprep.subr.mxu0 0.0
        %1046 = vmatpush1.msra.mxu0 0.0
        %1047 = vmatprep.subr.mxu0 0.0
        %1048 = vmatpush1.msra.mxu0 0.0
        %1049 = vmatprep.subr.mxu0 0.0
        %1050 = vmatpush1.msra.mxu0 0.0
        %1051 = vmatprep.subr.mxu0 0.0
        %1052 = vmatpush1.msra.mxu0 0.0
        %1053 = vmatprep.subr.mxu0 0.0
        %1054 = vmatpush1.msra.mxu0 0.0
        %1055 = vmatprep.subr.mxu0 0.0
        %1056 = vmatpush1.msra.mxu0 0.0
        %1057 = vmatprep.subr.mxu0 0.0
        %1058 = vmatpush1.msra.mxu0 0.0
        %1059 = vmatprep.subr.mxu0 0.0
        %1060 = vmatpush1.msra.mxu0 0.0
        %1061 = vmatprep.subr.mxu0 0.0
        %1062 = vmatpush1.msra.mxu0 0.0
        %1063 = vmatprep.subr.mxu0 0.0
        %1064 = vmatpush1.msra.mxu0 0.0
        %1065 = vmatprep.mubr.f32.mxu0 0.0
        %v1066 = vand.u32 %v821, 4294901760
        %v1067 = vsub.f32 %v821, %v1066
        %1068 = vmatmul.mubr.f32.gmra.mrb[0].mxu0 %v1067
        %v1069 = vpop.f32.mrb[0].mxu0
        %v1070 = vadd.f32 %v990, %v1069
        %v1071 = vpop.f32.mrb[0].mxu0
        %1072 = vdwg.mxu0
        %1073 = vmatprep.subr.mxu0 0.0
        %v1074 = vand.u32 %v291, 4294901760
        %1075 = vmatpush1.msra.mxu0 %v1074
        %1076 = vmatprep.subr.mxu0 0.0
        %v1077 = vand.u32 %v292, 4294901760
        %1078 = vmatpush1.msra.mxu0 %v1077
        %1079 = vmatprep.subr.mxu0 0.0
        %v1080 = vand.u32 %v293, 4294901760
        %1081 = vmatpush1.msra.mxu0 %v1080
        %1082 = vmatprep.subr.mxu0 0.0
        %v1083 = vand.u32 %v294, 4294901760
        %1084 = vmatpush1.msra.mxu0 %v1083
        %1085 = vmatprep.subr.mxu0 0.0
        %1086 = vmatpush1.msra.mxu0 0.0
        %1087 = vmatprep.subr.mxu0 0.0
        %1088 = vmatpush1.msra.mxu0 0.0
        %1089 = vmatprep.subr.mxu0 0.0
        %1090 = vmatpush1.msra.mxu0 0.0
        %1091 = vmatprep.subr.mxu0 0.0
        %1092 = vmatpush1.msra.mxu0 0.0
        %1093 = vmatprep.subr.mxu0 0.0
        %1094 = vmatpush1.msra.mxu0 0.0
        %1095 = vmatprep.subr.mxu0 0.0
        %1096 = vmatpush1.msra.mxu0 0.0
        %1097 = vmatprep.subr.mxu0 0.0
        %1098 = vmatpush1.msra.mxu0 0.0
        %1099 = vmatprep.subr.mxu0 0.0
        %1100 = vmatpush1.msra.mxu0 0.0
        %1101 = vmatprep.subr.mxu0 0.0
        %1102 = vmatpush1.msra.mxu0 0.0
        %1103 = vmatprep.subr.mxu0 0.0
        %1104 = vmatpush1.msra.mxu0 0.0
        %1105 = vmatprep.subr.mxu0 0.0
        %1106 = vmatpush1.msra.mxu0 0.0
        %1107 = vmatprep.subr.mxu0 0.0
        %1108 = vmatpush1.msra.mxu0 0.0
        %1109 = vmatprep.subr.mxu0 0.0
        %1110 = vmatpush1.msra.mxu0 0.0
        %1111 = vmatprep.subr.mxu0 0.0
        %1112 = vmatpush1.msra.mxu0 0.0
        %1113 = vmatprep.subr.mxu0 0.0
        %1114 = vmatpush1.msra.mxu0 0.0
        %1115 = vmatprep.subr.mxu0 0.0
        %1116 = vmatpush1.msra.mxu0 0.0
        %1117 = vmatprep.subr.mxu0 0.0
        %1118 = vmatpush1.msra.mxu0 0.0
        %1119 = vmatprep.subr.mxu0 0.0
        %1120 = vmatpush1.msra.mxu0 0.0
        %1121 = vmatprep.subr.mxu0 0.0
        %1122 = vmatpush1.msra.mxu0 0.0
        %1123 = vmatprep.subr.mxu0 0.0
        %1124 = vmatpush1.msra.mxu0 0.0
        %1125 = vmatprep.subr.mxu0 0.0
        %1126 = vmatpush1.msra.mxu0 0.0
        %1127 = vmatprep.subr.mxu0 0.0
        %1128 = vmatpush1.msra.mxu0 0.0
        %1129 = vmatprep.subr.mxu0 0.0
        %1130 = vmatpush1.msra.mxu0 0.0
        %1131 = vmatprep.subr.mxu0 0.0
        %1132 = vmatpush1.msra.mxu0 0.0
        %1133 = vmatprep.subr.mxu0 0.0
        %1134 = vmatpush1.msra.mxu0 0.0
        %1135 = vmatprep.subr.mxu0 0.0
        %1136 = vmatpush1.msra.mxu0 0.0
        %1137 = vmatprep.subr.mxu0 0.0
        %1138 = vmatpush1.msra.mxu0 0.0
        %1139 = vmatprep.subr.mxu0 0.0
        %1140 = vmatpush1.msra.mxu0 0.0
        %1141 = vmatprep.mubr.f32.mxu0 0.0
        %v1142 = vand.u32 %v821, 4294901760
        %v1143 = vsub.f32 %v821, %v1142
        %v1144 = vand.u32 %v1143, 4294901760
        %1145 = vmatmul.mubr.f32.gmra.mrb[0].mxu0 %v1144
        %v1146 = vpop.f32.mrb[0].mxu0
        %v1147 = vadd.f32 %v1070, %v1146
        %v1148 = vpop.f32.mrb[0].mxu0
        %1149 = vdwg.mxu0
        %1150 = vmatprep.subr.mxu0 0.0
        %v1151 = vand.u32 %v291, 4294901760
        %v1152 = vsub.f32 %v291, %v1151
        %v1153 = vand.u32 %v1152, 4294901760
        %1154 = vmatpush1.msra.mxu0 %v1153
        %1155 = vmatprep.subr.mxu0 0.0
        %v1156 = vand.u32 %v292, 4294901760
        %v1157 = vsub.f32 %v292, %v1156
        %v1158 = vand.u32 %v1157, 4294901760
        %1159 = vmatpush1.msra.mxu0 %v1158
        %1160 = vmatprep.subr.mxu0 0.0
        %v1161 = vand.u32 %v293, 4294901760
        %v1162 = vsub.f32 %v293, %v1161
        %v1163 = vand.u32 %v1162, 4294901760
        %1164 = vmatpush1.msra.mxu0 %v1163
        %1165 = vmatprep.subr.mxu0 0.0
        %v1166 = vand.u32 %v294, 4294901760
        %v1167 = vsub.f32 %v294, %v1166
        %v1168 = vand.u32 %v1167, 4294901760
        %1169 = vmatpush1.msra.mxu0 %v1168
        %1170 = vmatprep.subr.mxu0 0.0
        %1171 = vmatpush1.msra.mxu0 0.0
        %1172 = vmatprep.subr.mxu0 0.0
        %1173 = vmatpush1.msra.mxu0 0.0
        %1174 = vmatprep.subr.mxu0 0.0
        %1175 = vmatpush1.msra.mxu0 0.0
        %1176 = vmatprep.subr.mxu0 0.0
        %1177 = vmatpush1.msra.mxu0 0.0
        %1178 = vmatprep.subr.mxu0 0.0
        %1179 = vmatpush1.msra.mxu0 0.0
        %1180 = vmatprep.subr.mxu0 0.0
        %1181 = vmatpush1.msra.mxu0 0.0
        %1182 = vmatprep.subr.mxu0 0.0
        %1183 = vmatpush1.msra.mxu0 0.0
        %1184 = vmatprep.subr.mxu0 0.0
        %1185 = vmatpush1.msra.mxu0 0.0
        %1186 = vmatprep.subr.mxu0 0.0
        %1187 = vmatpush1.msra.mxu0 0.0
        %1188 = vmatprep.subr.mxu0 0.0
        %1189 = vmatpush1.msra.mxu0 0.0
        %1190 = vmatprep.subr.mxu0 0.0
        %1191 = vmatpush1.msra.mxu0 0.0
        %1192 = vmatprep.subr.mxu0 0.0
        %1193 = vmatpush1.msra.mxu0 0.0
        %1194 = vmatprep.subr.mxu0 0.0
        %1195 = vmatpush1.msra.mxu0 0.0
        %1196 = vmatprep.subr.mxu0 0.0
        %1197 = vmatpush1.msra.mxu0 0.0
        %1198 = vmatprep.subr.mxu0 0.0
        %1199 = vmatpush1.msra.mxu0 0.0
        %1200 = vmatprep.subr.mxu0 0.0
        %1201 = vmatpush1.msra.mxu0 0.0
        %1202 = vmatprep.subr.mxu0 0.0
        %1203 = vmatpush1.msra.mxu0 0.0
        %1204 = vmatprep.subr.mxu0 0.0
        %1205 = vmatpush1.msra.mxu0 0.0
        %1206 = vmatprep.subr.mxu0 0.0
        %1207 = vmatpush1.msra.mxu0 0.0
        %1208 = vmatprep.subr.mxu0 0.0
        %1209 = vmatpush1.msra.mxu0 0.0
        %1210 = vmatprep.subr.mxu0 0.0
        %1211 = vmatpush1.msra.mxu0 0.0
        %1212 = vmatprep.subr.mxu0 0.0
        %1213 = vmatpush1.msra.mxu0 0.0
        %1214 = vmatprep.subr.mxu0 0.0
        %1215 = vmatpush1.msra.mxu0 0.0
        %1216 = vmatprep.subr.mxu0 0.0
        %1217 = vmatpush1.msra.mxu0 0.0
        %1218 = vmatprep.subr.mxu0 0.0
        %1219 = vmatpush1.msra.mxu0 0.0
        %1220 = vmatprep.subr.mxu0 0.0
        %1221 = vmatpush1.msra.mxu0 0.0
        %1222 = vmatprep.subr.mxu0 0.0
        %1223 = vmatpush1.msra.mxu0 0.0
        %1224 = vmatprep.subr.mxu0 0.0
        %1225 = vmatpush1.msra.mxu0 0.0
        %1226 = vmatprep.mubr.f32.mxu0 0.0
        %v1227 = vand.u32 %v821, 4294901760
        %1228 = vmatmul.mubr.f32.gmra.mrb[0].mxu0 %v1227
        %v1229 = vpop.f32.mrb[0].mxu0
        %v1230 = vadd.f32 %v1147, %v1229
        %v1231 = vpop.f32.mrb[0].mxu0
        %1232 = vdwg.mxu0
        %1233 = vmatprep.subr.mxu0 0.0
        %v1234 = vand.u32 %v291, 4294901760
        %1235 = vmatpush1.msra.mxu0 %v1234
        %1236 = vmatprep.subr.mxu0 0.0
        %v1237 = vand.u32 %v292, 4294901760
        %1238 = vmatpush1.msra.mxu0 %v1237
        %1239 = vmatprep.subr.mxu0 0.0
        %v1240 = vand.u32 %v293, 4294901760
        %1241 = vmatpush1.msra.mxu0 %v1240
        %1242 = vmatprep.subr.mxu0 0.0
        %v1243 = vand.u32 %v294, 4294901760
        %1244 = vmatpush1.msra.mxu0 %v1243
        %1245 = vmatprep.subr.mxu0 0.0
        %1246 = vmatpush1.msra.mxu0 0.0
        %1247 = vmatprep.subr.mxu0 0.0
        %1248 = vmatpush1.msra.mxu0 0.0
        %1249 = vmatprep.subr.mxu0 0.0
        %1250 = vmatpush1.msra.mxu0 0.0
        %1251 = vmatprep.subr.mxu0 0.0
        %1252 = vmatpush1.msra.mxu0 0.0
        %1253 = vmatprep.subr.mxu0 0.0
        %1254 = vmatpush1.msra.mxu0 0.0
        %1255 = vmatprep.subr.mxu0 0.0
        %1256 = vmatpush1.msra.mxu0 0.0
        %1257 = vmatprep.subr.mxu0 0.0
        %1258 = vmatpush1.msra.mxu0 0.0
        %1259 = vmatprep.subr.mxu0 0.0
        %1260 = vmatpush1.msra.mxu0 0.0
        %1261 = vmatprep.subr.mxu0 0.0
        %1262 = vmatpush1.msra.mxu0 0.0
        %1263 = vmatprep.subr.mxu0 0.0
        %1264 = vmatpush1.msra.mxu0 0.0
        %1265 = vmatprep.subr.mxu0 0.0
        %1266 = vmatpush1.msra.mxu0 0.0
        %1267 = vmatprep.subr.mxu0 0.0
        %1268 = vmatpush1.msra.mxu0 0.0
        %1269 = vmatprep.subr.mxu0 0.0
        %1270 = vmatpush1.msra.mxu0 0.0
        %1271 = vmatprep.subr.mxu0 0.0
        %1272 = vmatpush1.msra.mxu0 0.0
        %1273 = vmatprep.subr.mxu0 0.0
        %1274 = vmatpush1.msra.mxu0 0.0
        %1275 = vmatprep.subr.mxu0 0.0
        %1276 = vmatpush1.msra.mxu0 0.0
        %1277 = vmatprep.subr.mxu0 0.0
        %1278 = vmatpush1.msra.mxu0 0.0
        %1279 = vmatprep.subr.mxu0 0.0
        %1280 = vmatpush1.msra.mxu0 0.0
        %1281 = vmatprep.subr.mxu0 0.0
        %1282 = vmatpush1.msra.mxu0 0.0
        %1283 = vmatprep.subr.mxu0 0.0
        %1284 = vmatpush1.msra.mxu0 0.0
        %1285 = vmatprep.subr.mxu0 0.0
        %1286 = vmatpush1.msra.mxu0 0.0
        %1287 = vmatprep.subr.mxu0 0.0
        %1288 = vmatpush1.msra.mxu0 0.0
        %1289 = vmatprep.subr.mxu0 0.0
        %1290 = vmatpush1.msra.mxu0 0.0
        %1291 = vmatprep.subr.mxu0 0.0
        %1292 = vmatpush1.msra.mxu0 0.0
        %1293 = vmatprep.subr.mxu0 0.0
        %1294 = vmatpush1.msra.mxu0 0.0
        %1295 = vmatprep.subr.mxu0 0.0
        %1296 = vmatpush1.msra.mxu0 0.0
        %1297 = vmatprep.subr.mxu0 0.0
        %1298 = vmatpush1.msra.mxu0 0.0
        %1299 = vmatprep.subr.mxu0 0.0
        %1300 = vmatpush1.msra.mxu0 0.0
        %1301 = vmatprep.mubr.f32.mxu0 0.0
        %v1302 = vand.u32 %v821, 4294901760
        %1303 = vmatmul.mubr.f32.gmra.mrb[0].mxu0 %v1302
        %v1304 = vpop.f32.mrb[0].mxu0
        %v1305 = vadd.f32 %v1230, %v1304
        %v1306 = vpop.f32.mrb[0].mxu0
        %1307 = vdwg.mxu0
        %v1308 = vlaneseq
        %v1309 = vshrl.u32 %v1308, 7
        %v1310 = vsub.s32 0, %v1309
        %v1311 = vrot.slane %v1305, %v1310
        %v1312 = vsub.f32 %v295, %v1311
        %v1313 = vsub.f32 %v296, %v1311
        %v1314 = vsub.f32 %v297, %v1311
        %v1315 = vsub.f32 %v298, %v1311
        %v1316 = vsub.f32 %v299, %v1311
        %v1317 = vsub.f32 %v300, %v1311
        %v1318 = vsub.f32 %v301, %v1311
        %v1319 = vsub.f32 %v302, %v1311
        %v1320 = vsub.f32 %v303, %v1311
        %v1321 = vsub.f32 %v304, %v1311
        %v1322 = vsub.f32 %v305, %v1311
        %v1323 = vsub.f32 %v306, %v1311
        %v1324 = vsub.f32 %v307, %v1311
        %v1325 = vsub.f32 %v308, %v1311
        %v1326 = vsub.f32 %v309, %v1311
        %v1327 = vsub.f32 %v310, %v1311
        %v1328 = vmul.f32 %v1312, %v1312
        %v1329 = vmul.f32 %v1313, %v1313
        %v1330 = vmul.f32 %v1314, %v1314
        %v1331 = vmul.f32 %v1315, %v1315
        %v1332 = vmul.f32 %v1316, %v1316
        %v1333 = vmul.f32 %v1317, %v1317
        %v1334 = vmul.f32 %v1318, %v1318
        %v1335 = vmul.f32 %v1319, %v1319
        %v1336 = vmul.f32 %v1320, %v1320
        %v1337 = vmul.f32 %v1321, %v1321
        %v1338 = vmul.f32 %v1322, %v1322
        %v1339 = vmul.f32 %v1323, %v1323
        %v1340 = vmul.f32 %v1324, %v1324
        %v1341 = vmul.f32 %v1325, %v1325
        %v1342 = vmul.f32 %v1326, %v1326
        %v1343 = vmul.f32 %v1327, %v1327
        %v1344 = vadd.f32 %v1328, %v1329
        %v1345 = vadd.f32 %v1344, %v1330
        %v1346 = vadd.f32 %v1345, %v1331
        %v1347 = vadd.f32 %v1346, %v1332
        %v1348 = vadd.f32 %v1347, %v1333
        %v1349 = vadd.f32 %v1348, %v1334
        %v1350 = vadd.f32 %v1349, %v1335
        %v1351 = vadd.f32 %v1350, %v1336
        %v1352 = vadd.f32 %v1351, %v1337
        %v1353 = vadd.f32 %v1352, %v1338
        %v1354 = vadd.f32 %v1353, %v1339
        %v1355 = vadd.f32 %v1354, %v1340
        %v1356 = vadd.f32 %v1355, %v1341
        %v1357 = vadd.f32 %v1356, %v1342
        %v1358 = vadd.f32 %v1357, %v1343
        %v1359 = vrot.slane %v1358, 4
        %v1360 = vadd.f32 %v1358, %v1359
        %v1361 = vrot.slane %v1360, 2
        %v1362 = vadd.f32 %v1360, %v1361
        %v1363 = vrot.slane %v1362, 1
        %v1364 = vadd.f32 %v1362, %v1363
        %1365 = vmatprep.subr.mxu0 0.0
        %v1366 = vand.u32 %v291, 4294901760
        %1367 = vmatpush1.xpose.msra.mxu0 %v1366
        %1368 = vmatprep.subr.mxu0 0.0
        %v1369 = vand.u32 %v292, 4294901760
        %1370 = vmatpush1.xpose.msra.mxu0 %v1369
        %1371 = vmatprep.subr.mxu0 0.0
        %v1372 = vand.u32 %v293, 4294901760
        %1373 = vmatpush1.xpose.msra.mxu0 %v1372
        %1374 = vmatprep.subr.mxu0 0.0
        %v1375 = vand.u32 %v294, 4294901760
        %1376 = vmatpush1.xpose.msra.mxu0 %v1375
        %1377 = vmatprep.subr.mxu0 0.0
        %1378 = vmatpush1.xpose.msra.mxu0 0.0
        %1379 = vmatprep.subr.mxu0 0.0
        %1380 = vmatpush1.xpose.msra.mxu0 0.0
        %1381 = vmatprep.subr.mxu0 0.0
        %1382 = vmatpush1.xpose.msra.mxu0 0.0
        %1383 = vmatprep.subr.mxu0 0.0
        %1384 = vmatpush1.xpose.msra.mxu0 0.0
        %1385 = vmatprep.subr.mxu0 0.0
        %1386 = vmatpush1.xpose.msra.mxu0 0.0
        %1387 = vmatprep.subr.mxu0 0.0
        %1388 = vmatpush1.xpose.msra.mxu0 0.0
        %1389 = vmatprep.subr.mxu0 0.0
        %1390 = vmatpush1.xpose.msra.mxu0 0.0
        %1391 = vmatprep.subr.mxu0 0.0
        %1392 = vmatpush1.xpose.msra.mxu0 0.0
        %1393 = vmatprep.subr.mxu0 0.0
        %1394 = vmatpush1.xpose.msra.mxu0 0.0
        %1395 = vmatprep.subr.mxu0 0.0
        %1396 = vmatpush1.xpose.msra.mxu0 0.0
        %1397 = vmatprep.subr.mxu0 0.0
        %1398 = vmatpush1.xpose.msra.mxu0 0.0
        %1399 = vmatprep.subr.mxu0 0.0
        %1400 = vmatpush1.xpose.msra.mxu0 0.0
        %1401 = vmatprep.subr.mxu0 0.0
        %1402 = vmatpush1.xpose.msra.mxu0 0.0
        %1403 = vmatprep.subr.mxu0 0.0
        %1404 = vmatpush1.xpose.msra.mxu0 0.0
        %1405 = vmatprep.subr.mxu0 0.0
        %1406 = vmatpush1.xpose.msra.mxu0 0.0
        %1407 = vmatprep.subr.mxu0 0.0
        %1408 = vmatpush1.xpose.msra.mxu0 0.0
        %1409 = vmatprep.subr.mxu0 0.0
        %1410 = vmatpush1.xpose.msra.mxu0 0.0
        %1411 = vmatprep.subr.mxu0 0.0
        %1412 = vmatpush1.xpose.msra.mxu0 0.0
        %1413 = vmatprep.subr.mxu0 0.0
        %1414 = vmatpush1.xpose.msra.mxu0 0.0
        %1415 = vmatprep.subr.mxu0 0.0
        %1416 = vmatpush1.xpose.msra.mxu0 0.0
        %1417 = vmatprep.subr.mxu0 0.0
        %1418 = vmatpush1.xpose.msra.mxu0 0.0
        %1419 = vmatprep.subr.mxu0 0.0
        %1420 = vmatpush1.xpose.msra.mxu0 0.0
        %1421 = vmatprep.subr.mxu0 0.0
        %1422 = vmatpush1.xpose.msra.mxu0 0.0
        %1423 = vmatprep.subr.mxu0 0.0
        %1424 = vmatpush1.xpose.msra.mxu0 0.0
        %1425 = vmatprep.subr.mxu0 0.0
        %1426 = vmatpush1.xpose.msra.mxu0 0.0
        %1427 = vmatprep.subr.mxu0 0.0
        %1428 = vmatpush1.xpose.msra.mxu0 0.0
        %1429 = vmatprep.subr.mxu0 0.0
        %1430 = vmatpush1.xpose.msra.mxu0 0.0
        %1431 = vmatprep.subr.mxu0 0.0
        %1432 = vmatpush1.xpose.msra.mxu0 0.0
        %1433 = vmatprep.mubr.f32.mxu0 0.0
        %v1434 = vand.u32 %v1364, 4294901760
        %v1435 = vsub.f32 %v1364, %v1434
        %v1436 = vand.u32 %v1435, 4294901760
        %v1437 = vsub.f32 %v1435, %v1436
        %v1438 = vand.u32 %v1437, 4294901760
        %1439 = vmatmul.mubr.f32.gmra.mrb[0].mxu0 %v1438
        %v1440 = vpop.f32.mrb[0].mxu0
        %v1441 = vadd.f32 0.0, %v1440
        %v1442 = vpop.f32.mrb[0].mxu0
        %1443 = vdwg.mxu0
        %1444 = vmatprep.subr.mxu0 0.0
        %v1445 = vand.u32 %v291, 4294901760
        %v1446 = vsub.f32 %v291, %v1445
        %v1447 = vand.u32 %v1446, 4294901760
        %v1448 = vsub.f32 %v1446, %v1447
        %v1449 = vand.u32 %v1448, 4294901760
        %1450 = vmatpush1.xpose.msra.mxu0 %v1449
        %1451 = vmatprep.subr.mxu0 0.0
        %v1452 = vand.u32 %v292, 4294901760
        %v1453 = vsub.f32 %v292, %v1452
        %v1454 = vand.u32 %v1453, 4294901760
        %v1455 = vsub.f32 %v1453, %v1454
        %v1456 = vand.u32 %v1455, 4294901760
        %1457 = vmatpush1.xpose.msra.mxu0 %v1456
        %1458 = vmatprep.subr.mxu0 0.0
        %v1459 = vand.u32 %v293, 4294901760
        %v1460 = vsub.f32 %v293, %v1459
        %v1461 = vand.u32 %v1460, 4294901760
        %v1462 = vsub.f32 %v1460, %v1461
        %v1463 = vand.u32 %v1462, 4294901760
        %1464 = vmatpush1.xpose.msra.mxu0 %v1463
        %1465 = vmatprep.subr.mxu0 0.0
        %v1466 = vand.u32 %v294, 4294901760
        %v1467 = vsub.f32 %v294, %v1466
        %v1468 = vand.u32 %v1467, 4294901760
        %v1469 = vsub.f32 %v1467, %v1468
        %v1470 = vand.u32 %v1469, 4294901760
        %1471 = vmatpush1.xpose.msra.mxu0 %v1470
        %1472 = vmatprep.subr.mxu0 0.0
        %1473 = vmatpush1.xpose.msra.mxu0 0.0
        %1474 = vmatprep.subr.mxu0 0.0
        %1475 = vmatpush1.xpose.msra.mxu0 0.0
        %1476 = vmatprep.subr.mxu0 0.0
        %1477 = vmatpush1.xpose.msra.mxu0 0.0
        %1478 = vmatprep.subr.mxu0 0.0
        %1479 = vmatpush1.xpose.msra.mxu0 0.0
        %1480 = vmatprep.subr.mxu0 0.0
        %1481 = vmatpush1.xpose.msra.mxu0 0.0
        %1482 = vmatprep.subr.mxu0 0.0
        %1483 = vmatpush1.xpose.msra.mxu0 0.0
        %1484 = vmatprep.subr.mxu0 0.0
        %1485 = vmatpush1.xpose.msra.mxu0 0.0
        %1486 = vmatprep.subr.mxu0 0.0
        %1487 = vmatpush1.xpose.msra.mxu0 0.0
        %1488 = vmatprep.subr.mxu0 0.0
        %1489 = vmatpush1.xpose.msra.mxu0 0.0
        %1490 = vmatprep.subr.mxu0 0.0
        %1491 = vmatpush1.xpose.msra.mxu0 0.0
        %1492 = vmatprep.subr.mxu0 0.0
        %1493 = vmatpush1.xpose.msra.mxu0 0.0
        %1494 = vmatprep.subr.mxu0 0.0
        %1495 = vmatpush1.xpose.msra.mxu0 0.0
        %1496 = vmatprep.subr.mxu0 0.0
        %1497 = vmatpush1.xpose.msra.mxu0 0.0
        %1498 = vmatprep.subr.mxu0 0.0
        %1499 = vmatpush1.xpose.msra.mxu0 0.0
        %1500 = vmatprep.subr.mxu0 0.0
        %1501 = vmatpush1.xpose.msra.mxu0 0.0
        %1502 = vmatprep.subr.mxu0 0.0
        %1503 = vmatpush1.xpose.msra.mxu0 0.0
        %1504 = vmatprep.subr.mxu0 0.0
        %1505 = vmatpush1.xpose.msra.mxu0 0.0
        %1506 = vmatprep.subr.mxu0 0.0
        %1507 = vmatpush1.xpose.msra.mxu0 0.0
        %1508 = vmatprep.subr.mxu0 0.0
        %1509 = vmatpush1.xpose.msra.mxu0 0.0
        %1510 = vmatprep.subr.mxu0 0.0
        %1511 = vmatpush1.xpose.msra.mxu0 0.0
        %1512 = vmatprep.subr.mxu0 0.0
        %1513 = vmatpush1.xpose.msra.mxu0 0.0
        %1514 = vmatprep.subr.mxu0 0.0
        %1515 = vmatpush1.xpose.msra.mxu0 0.0
        %1516 = vmatprep.subr.mxu0 0.0
        %1517 = vmatpush1.xpose.msra.mxu0 0.0
        %1518 = vmatprep.subr.mxu0 0.0
        %1519 = vmatpush1.xpose.msra.mxu0 0.0
        %1520 = vmatprep.subr.mxu0 0.0
        %1521 = vmatpush1.xpose.msra.mxu0 0.0
        %1522 = vmatprep.subr.mxu0 0.0
        %1523 = vmatpush1.xpose.msra.mxu0 0.0
        %1524 = vmatprep.subr.mxu0 0.0
        %1525 = vmatpush1.xpose.msra.mxu0 0.0
        %1526 = vmatprep.subr.mxu0 0.0
        %1527 = vmatpush1.xpose.msra.mxu0 0.0
        %1528 = vmatprep.mubr.f32.mxu0 0.0
        %v1529 = vand.u32 %v1364, 4294901760
        %1530 = vmatmul.mubr.f32.gmra.mrb[0].mxu0 %v1529
        %v1531 = vpop.f32.mrb[0].mxu0
        %v1532 = vadd.f32 %v1441, %v1531
        %v1533 = vpop.f32.mrb[0].mxu0
        %1534 = vdwg.mxu0
        %1535 = vmatprep.subr.mxu0 0.0
        %v1536 = vand.u32 %v291, 4294901760
        %v1537 = vsub.f32 %v291, %v1536
        %1538 = vmatpush1.xpose.msra.mxu0 %v1537
        %1539 = vmatprep.subr.mxu0 0.0
        %v1540 = vand.u32 %v292, 4294901760
        %v1541 = vsub.f32 %v292, %v1540
        %1542 = vmatpush1.xpose.msra.mxu0 %v1541
        %1543 = vmatprep.subr.mxu0 0.0
        %v1544 = vand.u32 %v293, 4294901760
        %v1545 = vsub.f32 %v293, %v1544
        %1546 = vmatpush1.xpose.msra.mxu0 %v1545
        %1547 = vmatprep.subr.mxu0 0.0
        %v1548 = vand.u32 %v294, 4294901760
        %v1549 = vsub.f32 %v294, %v1548
        %1550 = vmatpush1.xpose.msra.mxu0 %v1549
        %1551 = vmatprep.subr.mxu0 0.0
        %1552 = vmatpush1.xpose.msra.mxu0 0.0
        %1553 = vmatprep.subr.mxu0 0.0
        %1554 = vmatpush1.xpose.msra.mxu0 0.0
        %1555 = vmatprep.subr.mxu0 0.0
        %1556 = vmatpush1.xpose.msra.mxu0 0.0
        %1557 = vmatprep.subr.mxu0 0.0
        %1558 = vmatpush1.xpose.msra.mxu0 0.0
        %1559 = vmatprep.subr.mxu0 0.0
        %1560 = vmatpush1.xpose.msra.mxu0 0.0
        %1561 = vmatprep.subr.mxu0 0.0
        %1562 = vmatpush1.xpose.msra.mxu0 0.0
        %1563 = vmatprep.subr.mxu0 0.0
        %1564 = vmatpush1.xpose.msra.mxu0 0.0
        %1565 = vmatprep.subr.mxu0 0.0
        %1566 = vmatpush1.xpose.msra.mxu0 0.0
        %1567 = vmatprep.subr.mxu0 0.0
        %1568 = vmatpush1.xpose.msra.mxu0 0.0
        %1569 = vmatprep.subr.mxu0 0.0
        %1570 = vmatpush1.xpose.msra.mxu0 0.0
        %1571 = vmatprep.subr.mxu0 0.0
        %1572 = vmatpush1.xpose.msra.mxu0 0.0
        %1573 = vmatprep.subr.mxu0 0.0
        %1574 = vmatpush1.xpose.msra.mxu0 0.0
        %1575 = vmatprep.subr.mxu0 0.0
        %1576 = vmatpush1.xpose.msra.mxu0 0.0
        %1577 = vmatprep.subr.mxu0 0.0
        %1578 = vmatpush1.xpose.msra.mxu0 0.0
        %1579 = vmatprep.subr.mxu0 0.0
        %1580 = vmatpush1.xpose.msra.mxu0 0.0
        %1581 = vmatprep.subr.mxu0 0.0
        %1582 = vmatpush1.xpose.msra.mxu0 0.0
        %1583 = vmatprep.subr.mxu0 0.0
        %1584 = vmatpush1.xpose.msra.mxu0 0.0
        %1585 = vmatprep.subr.mxu0 0.0
        %1586 = vmatpush1.xpose.msra.mxu0 0.0
        %1587 = vmatprep.subr.mxu0 0.0
        %1588 = vmatpush1.xpose.msra.mxu0 0.0
        %1589 = vmatprep.subr.mxu0 0.0
        %1590 = vmatpush1.xpose.msra.mxu0 0.0
        %1591 = vmatprep.subr.mxu0 0.0
        %1592 = vmatpush1.xpose.msra.mxu0 0.0
        %1593 = vmatprep.subr.mxu0 0.0
        %1594 = vmatpush1.xpose.msra.mxu0 0.0
        %1595 = vmatprep.subr.mxu0 0.0
        %1596 = vmatpush1.xpose.msra.mxu0 0.0
        %1597 = vmatprep.subr.mxu0 0.0
        %1598 = vmatpush1.xpose.msra.mxu0 0.0
        %1599 = vmatprep.subr.mxu0 0.0
        %1600 = vmatpush1.xpose.msra.mxu0 0.0
        %1601 = vmatprep.subr.mxu0 0.0
        %1602 = vmatpush1.xpose.msra.mxu0 0.0
        %1603 = vmatprep.subr.mxu0 0.0
        %1604 = vmatpush1.xpose.msra.mxu0 0.0
        %1605 = vmatprep.subr.mxu0 0.0
        %1606 = vmatpush1.xpose.msra.mxu0 0.0
        %1607 = vmatprep.mubr.f32.mxu0 0.0
        %v1608 = vand.u32 %v1364, 4294901760
        %v1609 = vsub.f32 %v1364, %v1608
        %1610 = vmatmul.mubr.f32.gmra.mrb[0].mxu0 %v1609
        %v1611 = vpop.f32.mrb[0].mxu0
        %v1612 = vadd.f32 %v1532, %v1611
        %v1613 = vpop.f32.mrb[0].mxu0
        %1614 = vdwg.mxu0
        %1615 = vmatprep.subr.mxu0 0.0
        %v1616 = vand.u32 %v291, 4294901760
        %1617 = vmatpush1.xpose.msra.mxu0 %v1616
        %1618 = vmatprep.subr.mxu0 0.0
        %v1619 = vand.u32 %v292, 4294901760
        %1620 = vmatpush1.xpose.msra.mxu0 %v1619
        %1621 = vmatprep.subr.mxu0 0.0
        %v1622 = vand.u32 %v293, 4294901760
        %1623 = vmatpush1.xpose.msra.mxu0 %v1622
        %1624 = vmatprep.subr.mxu0 0.0
        %v1625 = vand.u32 %v294, 4294901760
        %1626 = vmatpush1.xpose.msra.mxu0 %v1625
        %1627 = vmatprep.subr.mxu0 0.0
        %1628 = vmatpush1.xpose.msra.mxu0 0.0
        %1629 = vmatprep.subr.mxu0 0.0
        %1630 = vmatpush1.xpose.msra.mxu0 0.0
        %1631 = vmatprep.subr.mxu0 0.0
        %1632 = vmatpush1.xpose.msra.mxu0 0.0
        %1633 = vmatprep.subr.mxu0 0.0
        %1634 = vmatpush1.xpose.msra.mxu0 0.0
        %1635 = vmatprep.subr.mxu0 0.0
        %1636 = vmatpush1.xpose.msra.mxu0 0.0
        %1637 = vmatprep.subr.mxu0 0.0
        %1638 = vmatpush1.xpose.msra.mxu0 0.0
        %1639 = vmatprep.subr.mxu0 0.0
        %1640 = vmatpush1.xpose.msra.mxu0 0.0
        %1641 = vmatprep.subr.mxu0 0.0
        %1642 = vmatpush1.xpose.msra.mxu0 0.0
        %1643 = vmatprep.subr.mxu0 0.0
        %1644 = vmatpush1.xpose.msra.mxu0 0.0
        %1645 = vmatprep.subr.mxu0 0.0
        %1646 = vmatpush1.xpose.msra.mxu0 0.0
        %1647 = vmatprep.subr.mxu0 0.0
        %1648 = vmatpush1.xpose.msra.mxu0 0.0
        %1649 = vmatprep.subr.mxu0 0.0
        %1650 = vmatpush1.xpose.msra.mxu0 0.0
        %1651 = vmatprep.subr.mxu0 0.0
        %1652 = vmatpush1.xpose.msra.mxu0 0.0
        %1653 = vmatprep.subr.mxu0 0.0
        %1654 = vmatpush1.xpose.msra.mxu0 0.0
        %1655 = vmatprep.subr.mxu0 0.0
        %1656 = vmatpush1.xpose.msra.mxu0 0.0
        %1657 = vmatprep.subr.mxu0 0.0
        %1658 = vmatpush1.xpose.msra.mxu0 0.0
        %1659 = vmatprep.subr.mxu0 0.0
        %1660 = vmatpush1.xpose.msra.mxu0 0.0
        %1661 = vmatprep.subr.mxu0 0.0
        %1662 = vmatpush1.xpose.msra.mxu0 0.0
        %1663 = vmatprep.subr.mxu0 0.0
        %1664 = vmatpush1.xpose.msra.mxu0 0.0
        %1665 = vmatprep.subr.mxu0 0.0
        %1666 = vmatpush1.xpose.msra.mxu0 0.0
        %1667 = vmatprep.subr.mxu0 0.0
        %1668 = vmatpush1.xpose.msra.mxu0 0.0
        %1669 = vmatprep.subr.mxu0 0.0
        %1670 = vmatpush1.xpose.msra.mxu0 0.0
        %1671 = vmatprep.subr.mxu0 0.0
        %1672 = vmatpush1.xpose.msra.mxu0 0.0
        %1673 = vmatprep.subr.mxu0 0.0
        %1674 = vmatpush1.xpose.msra.mxu0 0.0
        %1675 = vmatprep.subr.mxu0 0.0
        %1676 = vmatpush1.xpose.msra.mxu0 0.0
        %1677 = vmatprep.subr.mxu0 0.0
        %1678 = vmatpush1.xpose.msra.mxu0 0.0
        %1679 = vmatprep.subr.mxu0 0.0
        %1680 = vmatpush1.xpose.msra.mxu0 0.0
        %1681 = vmatprep.subr.mxu0 0.0
        %1682 = vmatpush1.xpose.msra.mxu0 0.0
        %1683 = vmatprep.mubr.f32.mxu0 0.0
        %v1684 = vand.u32 %v1364, 4294901760
        %v1685 = vsub.f32 %v1364, %v1684
        %v1686 = vand.u32 %v1685, 4294901760
        %1687 = vmatmul.mubr.f32.gmra.mrb[0].mxu0 %v1686
        %v1688 = vpop.f32.mrb[0].mxu0
        %v1689 = vadd.f32 %v1612, %v1688
        %v1690 = vpop.f32.mrb[0].mxu0
        %1691 = vdwg.mxu0
        %1692 = vmatprep.subr.mxu0 0.0
        %v1693 = vand.u32 %v291, 4294901760
        %v1694 = vsub.f32 %v291, %v1693
        %v1695 = vand.u32 %v1694, 4294901760
        %1696 = vmatpush1.xpose.msra.mxu0 %v1695
        %1697 = vmatprep.subr.mxu0 0.0
        %v1698 = vand.u32 %v292, 4294901760
        %v1699 = vsub.f32 %v292, %v1698
        %v1700 = vand.u32 %v1699, 4294901760
        %1701 = vmatpush1.xpose.msra.mxu0 %v1700
        %1702 = vmatprep.subr.mxu0 0.0
        %v1703 = vand.u32 %v293, 4294901760
        %v1704 = vsub.f32 %v293, %v1703
        %v1705 = vand.u32 %v1704, 4294901760
        %1706 = vmatpush1.xpose.msra.mxu0 %v1705
        %1707 = vmatprep.subr.mxu0 0.0
        %v1708 = vand.u32 %v294, 4294901760
        %v1709 = vsub.f32 %v294, %v1708
        %v1710 = vand.u32 %v1709, 4294901760
        %1711 = vmatpush1.xpose.msra.mxu0 %v1710
        %1712 = vmatprep.subr.mxu0 0.0
        %1713 = vmatpush1.xpose.msra.mxu0 0.0
        %1714 = vmatprep.subr.mxu0 0.0
        %1715 = vmatpush1.xpose.msra.mxu0 0.0
        %1716 = vmatprep.subr.mxu0 0.0
        %1717 = vmatpush1.xpose.msra.mxu0 0.0
        %1718 = vmatprep.subr.mxu0 0.0
        %1719 = vmatpush1.xpose.msra.mxu0 0.0
        %1720 = vmatprep.subr.mxu0 0.0
        %1721 = vmatpush1.xpose.msra.mxu0 0.0
        %1722 = vmatprep.subr.mxu0 0.0
        %1723 = vmatpush1.xpose.msra.mxu0 0.0
        %1724 = vmatprep.subr.mxu0 0.0
        %1725 = vmatpush1.xpose.msra.mxu0 0.0
        %1726 = vmatprep.subr.mxu0 0.0
        %1727 = vmatpush1.xpose.msra.mxu0 0.0
        %1728 = vmatprep.subr.mxu0 0.0
        %1729 = vmatpush1.xpose.msra.mxu0 0.0
        %1730 = vmatprep.subr.mxu0 0.0
        %1731 = vmatpush1.xpose.msra.mxu0 0.0
        %1732 = vmatprep.subr.mxu0 0.0
        %1733 = vmatpush1.xpose.msra.mxu0 0.0
        %1734 = vmatprep.subr.mxu0 0.0
        %1735 = vmatpush1.xpose.msra.mxu0 0.0
        %1736 = vmatprep.subr.mxu0 0.0
        %1737 = vmatpush1.xpose.msra.mxu0 0.0
        %1738 = vmatprep.subr.mxu0 0.0
        %1739 = vmatpush1.xpose.msra.mxu0 0.0
        %1740 = vmatprep.subr.mxu0 0.0
        %1741 = vmatpush1.xpose.msra.mxu0 0.0
        %1742 = vmatprep.subr.mxu0 0.0
        %1743 = vmatpush1.xpose.msra.mxu0 0.0
        %1744 = vmatprep.subr.mxu0 0.0
        %1745 = vmatpush1.xpose.msra.mxu0 0.0
        %1746 = vmatprep.subr.mxu0 0.0
        %1747 = vmatpush1.xpose.msra.mxu0 0.0
        %1748 = vmatprep.subr.mxu0 0.0
        %1749 = vmatpush1.xpose.msra.mxu0 0.0
        %1750 = vmatprep.subr.mxu0 0.0
        %1751 = vmatpush1.xpose.msra.mxu0 0.0
        %1752 = vmatprep.subr.mxu0 0.0
        %1753 = vmatpush1.xpose.msra.mxu0 0.0
        %1754 = vmatprep.subr.mxu0 0.0
        %1755 = vmatpush1.xpose.msra.mxu0 0.0
        %1756 = vmatprep.subr.mxu0 0.0
        %1757 = vmatpush1.xpose.msra.mxu0 0.0
        %1758 = vmatprep.subr.mxu0 0.0
        %1759 = vmatpush1.xpose.msra.mxu0 0.0
        %1760 = vmatprep.subr.mxu0 0.0
        %1761 = vmatpush1.xpose.msra.mxu0 0.0
        %1762 = vmatprep.subr.mxu0 0.0
        %1763 = vmatpush1.xpose.msra.mxu0 0.0
        %1764 = vmatprep.subr.mxu0 0.0
        %1765 = vmatpush1.xpose.msra.mxu0 0.0
        %1766 = vmatprep.subr.mxu0 0.0
        %1767 = vmatpush1.xpose.msra.mxu0 0.0
        %1768 = vmatprep.mubr.f32.mxu0 0.0
        %v1769 = vand.u32 %v1364, 4294901760
        %1770 = vmatmul.mubr.f32.gmra.mrb[0].mxu0 %v1769
        %v1771 = vpop.f32.mrb[0].mxu0
        %v1772 = vadd.f32 %v1689, %v1771
        %v1773 = vpop.f32.mrb[0].mxu0
        %1774 = vdwg.mxu0
        %1775 = vmatprep.subr.mxu0 0.0
        %v1776 = vand.u32 %v291, 4294901760
        %1777 = vmatpush1.xpose.msra.mxu0 %v1776
        %1778 = vmatprep.subr.mxu0 0.0
        %v1779 = vand.u32 %v292, 4294901760
        %1780 = vmatpush1.xpose.msra.mxu0 %v1779
        %1781 = vmatprep.subr.mxu0 0.0
        %v1782 = vand.u32 %v293, 4294901760
        %1783 = vmatpush1.xpose.msra.mxu0 %v1782
        %1784 = vmatprep.subr.mxu0 0.0
        %v1785 = vand.u32 %v294, 4294901760
        %1786 = vmatpush1.xpose.msra.mxu0 %v1785
        %1787 = vmatprep.subr.mxu0 0.0
        %1788 = vmatpush1.xpose.msra.mxu0 0.0
        %1789 = vmatprep.subr.mxu0 0.0
        %1790 = vmatpush1.xpose.msra.mxu0 0.0
        %1791 = vmatprep.subr.mxu0 0.0
        %1792 = vmatpush1.xpose.msra.mxu0 0.0
        %1793 = vmatprep.subr.mxu0 0.0
        %1794 = vmatpush1.xpose.msra.mxu0 0.0
        %1795 = vmatprep.subr.mxu0 0.0
        %1796 = vmatpush1.xpose.msra.mxu0 0.0
        %1797 = vmatprep.subr.mxu0 0.0
        %1798 = vmatpush1.xpose.msra.mxu0 0.0
        %1799 = vmatprep.subr.mxu0 0.0
        %1800 = vmatpush1.xpose.msra.mxu0 0.0
        %1801 = vmatprep.subr.mxu0 0.0
        %1802 = vmatpush1.xpose.msra.mxu0 0.0
        %1803 = vmatprep.subr.mxu0 0.0
        %1804 = vmatpush1.xpose.msra.mxu0 0.0
        %1805 = vmatprep.subr.mxu0 0.0
        %1806 = vmatpush1.xpose.msra.mxu0 0.0
        %1807 = vmatprep.subr.mxu0 0.0
        %1808 = vmatpush1.xpose.msra.mxu0 0.0
        %1809 = vmatprep.subr.mxu0 0.0
        %1810 = vmatpush1.xpose.msra.mxu0 0.0
        %1811 = vmatprep.subr.mxu0 0.0
        %1812 = vmatpush1.xpose.msra.mxu0 0.0
        %1813 = vmatprep.subr.mxu0 0.0
        %1814 = vmatpush1.xpose.msra.mxu0 0.0
        %1815 = vmatprep.subr.mxu0 0.0
        %1816 = vmatpush1.xpose.msra.mxu0 0.0
        %1817 = vmatprep.subr.mxu0 0.0
        %1818 = vmatpush1.xpose.msra.mxu0 0.0
        %1819 = vmatprep.subr.mxu0 0.0
        %1820 = vmatpush1.xpose.msra.mxu0 0.0
        %1821 = vmatprep.subr.mxu0 0.0
        %1822 = vmatpush1.xpose.msra.mxu0 0.0
        %1823 = vmatprep.subr.mxu0 0.0
        %1824 = vmatpush1.xpose.msra.mxu0 0.0
        %1825 = vmatprep.subr.mxu0 0.0
        %1826 = vmatpush1.xpose.msra.mxu0 0.0
        %1827 = vmatprep.subr.mxu0 0.0
        %1828 = vmatpush1.xpose.msra.mxu0 0.0
        %1829 = vmatprep.subr.mxu0 0.0
        %1830 = vmatpush1.xpose.msra.mxu0 0.0
        %1831 = vmatprep.subr.mxu0 0.0
        %1832 = vmatpush1.xpose.msra.mxu0 0.0
        %1833 = vmatprep.subr.mxu0 0.0
        %1834 = vmatpush1.xpose.msra.mxu0 0.0
        %1835 = vmatprep.subr.mxu0 0.0
        %1836 = vmatpush1.xpose.msra.mxu0 0.0
        %1837 = vmatprep.subr.mxu0 0.0
        %1838 = vmatpush1.xpose.msra.mxu0 0.0
        %1839 = vmatprep.subr.mxu0 0.0
        %1840 = vmatpush1.xpose.msra.mxu0 0.0
        %1841 = vmatprep.subr.mxu0 0.0
        %1842 = vmatpush1.xpose.msra.mxu0 0.0
        %1843 = vmatprep.mubr.f32.mxu0 0.0
        %v1844 = vand.u32 %v1364, 4294901760
        %1845 = vmatmul.mubr.f32.gmra.mrb[0].mxu0 %v1844
        %v1846 = vpop.f32.mrb[0].mxu0
        %v1847 = vadd.f32 %v1772, %v1846
        %v1848 = vpop.f32.mrb[0].mxu0
        %1849 = vdwg.mxu0
        %s1850 = scvt.s32.f32 %s32
        %s1851 = smul.f32 %s1850, 512.0
        %s1852 = sadd.f32 %s1851, 512.0
        %v1853 = vld [vmem:[#allocation2] sm:$0x1]
        %v1854 = vsub.f32 %v818, %v1853
        %v1855 = vstv %s1852
        %v1856 = vrcp.pop %v1855
        %s1857 = vtos %v1856
        %s1858 = smul.f32 512.0, %s1857
        %v1859 = vstv %s1858
        %v1860 = vmul.f32 %v1854, %v1859
        %v1861 = vadd.f32 %v1853, %v1860
        %vm1862 = vcmask 253952
        %1863 = vst.msk [vmem:[#allocation2] sm:$0x1] %vm1862, %v1861
        %v1864 = vld [vmem:[#allocation3] sm:$0x1]
        %v1865 = vadd.f32 %v1864, %v1847
        %v1866 = vmul.f32 %v1854, %v1854
        %s1867 = smul.f32 %s1851, 512.0
        %v1868 = vstv %s1852
        %v1869 = vrcp.pop %v1868
        %s1870 = vtos %v1869
        %s1871 = smul.f32 %s1867, %s1870
        %v1872 = vstv %s1871
        %v1873 = vmul.f32 %v1866, %v1872
        %v1874 = vadd.f32 %v1865, %v1873
        %1875 = vst.msk [vmem:[#allocation3] sm:$0x1] %vm1862, %v1874
        %p1876 = scmp.eq.s32.totalorder %s32, 1
        // Predicated region
        $region49: #{tpu_custom_call.1} parent=35 // pred_check
          %p1877 = pneg %p1876
        $region50: #{tpu_custom_call.1} parent=35 // pred_check_branch
          %1879 = sbr.rel (%p1877) target = $region52
        $region51: #{tpu_custom_call.1} parent=35 // pred_region
          %v1880 = vld [vmem:[#allocation3] sm:$0x1]
          %v1881 = vstv %s1852
          %v1882 = vrcp.pop %v1881
          %v1883 = vmul.f32 %v1880, %v1882
          %v1884 = vadd.f32 %v1883, 1e-05
          %v1885 = vrsqrt.pop %v1884
          %v1886 = vld [vmem:[#allocation2] sm:$0x1]
          %v1888 = vsel %vm819, %v1886, 0
          %1890 = vmatprep.subr.mxu0 0.0
          %v1891 = vand.u32 %v291, 4294901760
          %1892 = vmatpush1.msra.mxu0 %v1891
          %1893 = vmatprep.subr.mxu0 0.0
          %v1894 = vand.u32 %v292, 4294901760
          %1895 = vmatpush1.msra.mxu0 %v1894
          %1896 = vmatprep.subr.mxu0 0.0
          %v1897 = vand.u32 %v293, 4294901760
          %1898 = vmatpush1.msra.mxu0 %v1897
          %1899 = vmatprep.subr.mxu0 0.0
          %v1900 = vand.u32 %v294, 4294901760
          %1901 = vmatpush1.msra.mxu0 %v1900
          %1902 = vmatprep.subr.mxu0 0.0
          %1903 = vmatpush1.msra.mxu0 0.0
          %1904 = vmatprep.subr.mxu0 0.0
          %1905 = vmatpush1.msra.mxu0 0.0
          %1906 = vmatprep.subr.mxu0 0.0
          %1907 = vmatpush1.msra.mxu0 0.0
          %1908 = vmatprep.subr.mxu0 0.0
          %1909 = vmatpush1.msra.mxu0 0.0
          %1910 = vmatprep.subr.mxu0 0.0
          %1911 = vmatpush1.msra.mxu0 0.0
          %1912 = vmatprep.subr.mxu0 0.0
          %1913 = vmatpush1.msra.mxu0 0.0
          %1914 = vmatprep.subr.mxu0 0.0
          %1915 = vmatpush1.msra.mxu0 0.0
          %1916 = vmatprep.subr.mxu0 0.0
          %1917 = vmatpush1.msra.mxu0 0.0
          %1918 = vmatprep.subr.mxu0 0.0
          %1919 = vmatpush1.msra.mxu0 0.0
          %1920 = vmatprep.subr.mxu0 0.0
          %1921 = vmatpush1.msra.mxu0 0.0
          %1922 = vmatprep.subr.mxu0 0.0
          %1923 = vmatpush1.msra.mxu0 0.0
          %1924 = vmatprep.subr.mxu0 0.0
          %1925 = vmatpush1.msra.mxu0 0.0
          %1926 = vmatprep.subr.mxu0 0.0
          %1927 = vmatpush1.msra.mxu0 0.0
          %1928 = vmatprep.subr.mxu0 0.0
          %1929 = vmatpush1.msra.mxu0 0.0
          %1930 = vmatprep.subr.mxu0 0.0
          %1931 = vmatpush1.msra.mxu0 0.0
          %1932 = vmatprep.subr.mxu0 0.0
          %1933 = vmatpush1.msra.mxu0 0.0
          %1934 = vmatprep.subr.mxu0 0.0
          %1935 = vmatpush1.msra.mxu0 0.0
          %1936 = vmatprep.subr.mxu0 0.0
          %1937 = vmatpush1.msra.mxu0 0.0
          %1938 = vmatprep.subr.mxu0 0.0
          %1939 = vmatpush1.msra.mxu0 0.0
          %1940 = vmatprep.subr.mxu0 0.0
          %1941 = vmatpush1.msra.mxu0 0.0
          %1942 = vmatprep.subr.mxu0 0.0
          %1943 = vmatpush1.msra.mxu0 0.0
          %1944 = vmatprep.subr.mxu0 0.0
          %1945 = vmatpush1.msra.mxu0 0.0
          %1946 = vmatprep.subr.mxu0 0.0
          %1947 = vmatpush1.msra.mxu0 0.0
          %1948 = vmatprep.subr.mxu0 0.0
          %1949 = vmatpush1.msra.mxu0 0.0
          %1950 = vmatprep.subr.mxu0 0.0
          %1951 = vmatpush1.msra.mxu0 0.0
          %1952 = vmatprep.subr.mxu0 0.0
          %1953 = vmatpush1.msra.mxu0 0.0
          %1954 = vmatprep.subr.mxu0 0.0
          %1955 = vmatpush1.msra.mxu0 0.0
          %1956 = vmatprep.subr.mxu0 0.0
          %1957 = vmatpush1.msra.mxu0 0.0
          %1958 = vmatprep.mubr.f32.mxu0 0.0
          %v1959 = vand.u32 %v1888, 4294901760
          %v1960 = vsub.f32 %v1888, %v1959
          %v1961 = vand.u32 %v1960, 4294901760
          %v1962 = vsub.f32 %v1960, %v1961
          %v1963 = vand.u32 %v1962, 4294901760
          %1964 = vmatmul.mubr.f32.gmra.mrb[0].mxu0 %v1963
          %v1965 = vpop.f32.mrb[0].mxu0
          %v1966 = vadd.f32 0.0, %v1965
          %v1967 = vpop.f32.mrb[0].mxu0
          %1968 = vdwg.mxu0
          %1969 = vmatprep.subr.mxu0 0.0
          %v1970 = vand.u32 %v291, 4294901760
          %v1971 = vsub.f32 %v291, %v1970
          %v1972 = vand.u32 %v1971, 4294901760
          %v1973 = vsub.f32 %v1971, %v1972
          %v1974 = vand.u32 %v1973, 4294901760
          %1975 = vmatpush1.msra.mxu0 %v1974
          %1976 = vmatprep.subr.mxu0 0.0
          %v1977 = vand.u32 %v292, 4294901760
          %v1978 = vsub.f32 %v292, %v1977
          %v1979 = vand.u32 %v1978, 4294901760
          %v1980 = vsub.f32 %v1978, %v1979
          %v1981 = vand.u32 %v1980, 4294901760
          %1982 = vmatpush1.msra.mxu0 %v1981
          %1983 = vmatprep.subr.mxu0 0.0
          %v1984 = vand.u32 %v293, 4294901760
          %v1985 = vsub.f32 %v293, %v1984
          %v1986 = vand.u32 %v1985, 4294901760
          %v1987 = vsub.f32 %v1985, %v1986
          %v1988 = vand.u32 %v1987, 4294901760
          %1989 = vmatpush1.msra.mxu0 %v1988
          %1990 = vmatprep.subr.mxu0 0.0
          %v1991 = vand.u32 %v294, 4294901760
          %v1992 = vsub.f32 %v294, %v1991
          %v1993 = vand.u32 %v1992, 4294901760
          %v1994 = vsub.f32 %v1992, %v1993
          %v1995 = vand.u32 %v1994, 4294901760
          %1996 = vmatpush1.msra.mxu0 %v1995
          %1997 = vmatprep.subr.mxu0 0.0
          %1998 = vmatpush1.msra.mxu0 0.0
          %1999 = vmatprep.subr.mxu0 0.0
          %2000 = vmatpush1.msra.mxu0 0.0
          %2001 = vmatprep.subr.mxu0 0.0
          %2002 = vmatpush1.msra.mxu0 0.0
          %2003 = vmatprep.subr.mxu0 0.0
          %2004 = vmatpush1.msra.mxu0 0.0
          %2005 = vmatprep.subr.mxu0 0.0
          %2006 = vmatpush1.msra.mxu0 0.0
          %2007 = vmatprep.subr.mxu0 0.0
          %2008 = vmatpush1.msra.mxu0 0.0
          %2009 = vmatprep.subr.mxu0 0.0
          %2010 = vmatpush1.msra.mxu0 0.0
          %2011 = vmatprep.subr.mxu0 0.0
          %2012 = vmatpush1.msra.mxu0 0.0
          %2013 = vmatprep.subr.mxu0 0.0
          %2014 = vmatpush1.msra.mxu0 0.0
          %2015 = vmatprep.subr.mxu0 0.0
          %2016 = vmatpush1.msra.mxu0 0.0
          %2017 = vmatprep.subr.mxu0 0.0
          %2018 = vmatpush1.msra.mxu0 0.0
          %2019 = vmatprep.subr.mxu0 0.0
          %2020 = vmatpush1.msra.mxu0 0.0
          %2021 = vmatprep.subr.mxu0 0.0
          %2022 = vmatpush1.msra.mxu0 0.0
          %2023 = vmatprep.subr.mxu0 0.0
          %2024 = vmatpush1.msra.mxu0 0.0
          %2025 = vmatprep.subr.mxu0 0.0
          %2026 = vmatpush1.msra.mxu0 0.0
          %2027 = vmatprep.subr.mxu0 0.0
          %2028 = vmatpush1.msra.mxu0 0.0
          %2029 = vmatprep.subr.mxu0 0.0
          %2030 = vmatpush1.msra.mxu0 0.0
          %2031 = vmatprep.subr.mxu0 0.0
          %2032 = vmatpush1.msra.mxu0 0.0
          %2033 = vmatprep.subr.mxu0 0.0
          %2034 = vmatpush1.msra.mxu0 0.0
          %2035 = vmatprep.subr.mxu0 0.0
          %2036 = vmatpush1.msra.mxu0 0.0
          %2037 = vmatprep.subr.mxu0 0.0
          %2038 = vmatpush1.msra.mxu0 0.0
          %2039 = vmatprep.subr.mxu0 0.0
          %2040 = vmatpush1.msra.mxu0 0.0
          %2041 = vmatprep.subr.mxu0 0.0
          %2042 = vmatpush1.msra.mxu0 0.0
          %2043 = vmatprep.subr.mxu0 0.0
          %2044 = vmatpush1.msra.mxu0 0.0
          %2045 = vmatprep.subr.mxu0 0.0
          %2046 = vmatpush1.msra.mxu0 0.0
          %2047 = vmatprep.subr.mxu0 0.0
          %2048 = vmatpush1.msra.mxu0 0.0
          %2049 = vmatprep.subr.mxu0 0.0
          %2050 = vmatpush1.msra.mxu0 0.0
          %2051 = vmatprep.subr.mxu0 0.0
          %2052 = vmatpush1.msra.mxu0 0.0
          %2053 = vmatprep.mubr.f32.mxu0 0.0
          %v2054 = vand.u32 %v1888, 4294901760
          %2055 = vmatmul.mubr.f32.gmra.mrb[0].mxu0 %v2054
          %v2056 = vpop.f32.mrb[0].mxu0
          %v2057 = vadd.f32 %v1966, %v2056
          %v2058 = vpop.f32.mrb[0].mxu0
          %2059 = vdwg.mxu0
          %2060 = vmatprep.subr.mxu0 0.0
          %v2061 = vand.u32 %v291, 4294901760
          %v2062 = vsub.f32 %v291, %v2061
          %2063 = vmatpush1.msra.mxu0 %v2062
          %2064 = vmatprep.subr.mxu0 0.0
          %v2065 = vand.u32 %v292, 4294901760
          %v2066 = vsub.f32 %v292, %v2065
          %2067 = vmatpush1.msra.mxu0 %v2066
          %2068 = vmatprep.subr.mxu0 0.0
          %v2069 = vand.u32 %v293, 4294901760
          %v2070 = vsub.f32 %v293, %v2069
          %2071 = vmatpush1.msra.mxu0 %v2070
          %2072 = vmatprep.subr.mxu0 0.0
          %v2073 = vand.u32 %v294, 4294901760
          %v2074 = vsub.f32 %v294, %v2073
          %2075 = vmatpush1.msra.mxu0 %v2074
          %2076 = vmatprep.subr.mxu0 0.0
          %2077 = vmatpush1.msra.mxu0 0.0
          %2078 = vmatprep.subr.mxu0 0.0
          %2079 = vmatpush1.msra.mxu0 0.0
          %2080 = vmatprep.subr.mxu0 0.0
          %2081 = vmatpush1.msra.mxu0 0.0
          %2082 = vmatprep.subr.mxu0 0.0
          %2083 = vmatpush1.msra.mxu0 0.0
          %2084 = vmatprep.subr.mxu0 0.0
          %2085 = vmatpush1.msra.mxu0 0.0
          %2086 = vmatprep.subr.mxu0 0.0
          %2087 = vmatpush1.msra.mxu0 0.0
          %2088 = vmatprep.subr.mxu0 0.0
          %2089 = vmatpush1.msra.mxu0 0.0
          %2090 = vmatprep.subr.mxu0 0.0
          %2091 = vmatpush1.msra.mxu0 0.0
          %2092 = vmatprep.subr.mxu0 0.0
          %2093 = vmatpush1.msra.mxu0 0.0
          %2094 = vmatprep.subr.mxu0 0.0
          %2095 = vmatpush1.msra.mxu0 0.0
          %2096 = vmatprep.subr.mxu0 0.0
          %2097 = vmatpush1.msra.mxu0 0.0
          %2098 = vmatprep.subr.mxu0 0.0
          %2099 = vmatpush1.msra.mxu0 0.0
          %2100 = vmatprep.subr.mxu0 0.0
          %2101 = vmatpush1.msra.mxu0 0.0
          %2102 = vmatprep.subr.mxu0 0.0
          %2103 = vmatpush1.msra.mxu0 0.0
          %2104 = vmatprep.subr.mxu0 0.0
          %2105 = vmatpush1.msra.mxu0 0.0
          %2106 = vmatprep.subr.mxu0 0.0
          %2107 = vmatpush1.msra.mxu0 0.0
          %2108 = vmatprep.subr.mxu0 0.0
          %2109 = vmatpush1.msra.mxu0 0.0
          %2110 = vmatprep.subr.mxu0 0.0
          %2111 = vmatpush1.msra.mxu0 0.0
          %2112 = vmatprep.subr.mxu0 0.0
          %2113 = vmatpush1.msra.mxu0 0.0
          %2114 = vmatprep.subr.mxu0 0.0
          %2115 = vmatpush1.msra.mxu0 0.0
          %2116 = vmatprep.subr.mxu0 0.0
          %2117 = vmatpush1.msra.mxu0 0.0
          %2118 = vmatprep.subr.mxu0 0.0
          %2119 = vmatpush1.msra.mxu0 0.0
          %2120 = vmatprep.subr.mxu0 0.0
          %2121 = vmatpush1.msra.mxu0 0.0
          %2122 = vmatprep.subr.mxu0 0.0
          %2123 = vmatpush1.msra.mxu0 0.0
          %2124 = vmatprep.subr.mxu0 0.0
          %2125 = vmatpush1.msra.mxu0 0.0
          %2126 = vmatprep.subr.mxu0 0.0
          %2127 = vmatpush1.msra.mxu0 0.0
          %2128 = vmatprep.subr.mxu0 0.0
          %2129 = vmatpush1.msra.mxu0 0.0
          %2130 = vmatprep.subr.mxu0 0.0
          %2131 = vmatpush1.msra.mxu0 0.0
          %2132 = vmatprep.mubr.f32.mxu0 0.0
          %v2133 = vand.u32 %v1888, 4294901760
          %v2134 = vsub.f32 %v1888, %v2133
          %2135 = vmatmul.mubr.f32.gmra.mrb[0].mxu0 %v2134
          %v2136 = vpop.f32.mrb[0].mxu0
          %v2137 = vadd.f32 %v2057, %v2136
          %v2138 = vpop.f32.mrb[0].mxu0
          %2139 = vdwg.mxu0
          %2140 = vmatprep.subr.mxu0 0.0
          %v2141 = vand.u32 %v291, 4294901760
          %2142 = vmatpush1.msra.mxu0 %v2141
          %2143 = vmatprep.subr.mxu0 0.0
          %v2144 = vand.u32 %v292, 4294901760
          %2145 = vmatpush1.msra.mxu0 %v2144
          %2146 = vmatprep.subr.mxu0 0.0
          %v2147 = vand.u32 %v293, 4294901760
          %2148 = vmatpush1.msra.mxu0 %v2147
          %2149 = vmatprep.subr.mxu0 0.0
          %v2150 = vand.u32 %v294, 4294901760
          %2151 = vmatpush1.msra.mxu0 %v2150
          %2152 = vmatprep.subr.mxu0 0.0
          %2153 = vmatpush1.msra.mxu0 0.0
          %2154 = vmatprep.subr.mxu0 0.0
          %2155 = vmatpush1.msra.mxu0 0.0
          %2156 = vmatprep.subr.mxu0 0.0
          %2157 = vmatpush1.msra.mxu0 0.0
          %2158 = vmatprep.subr.mxu0 0.0
          %2159 = vmatpush1.msra.mxu0 0.0
          %2160 = vmatprep.subr.mxu0 0.0
          %2161 = vmatpush1.msra.mxu0 0.0
          %2162 = vmatprep.subr.mxu0 0.0
          %2163 = vmatpush1.msra.mxu0 0.0
          %2164 = vmatprep.subr.mxu0 0.0
          %2165 = vmatpush1.msra.mxu0 0.0
          %2166 = vmatprep.subr.mxu0 0.0
          %2167 = vmatpush1.msra.mxu0 0.0
          %2168 = vmatprep.subr.mxu0 0.0
          %2169 = vmatpush1.msra.mxu0 0.0
          %2170 = vmatprep.subr.mxu0 0.0
          %2171 = vmatpush1.msra.mxu0 0.0
          %2172 = vmatprep.subr.mxu0 0.0
          %2173 = vmatpush1.msra.mxu0 0.0
          %2174 = vmatprep.subr.mxu0 0.0
          %2175 = vmatpush1.msra.mxu0 0.0
          %2176 = vmatprep.subr.mxu0 0.0
          %2177 = vmatpush1.msra.mxu0 0.0
          %2178 = vmatprep.subr.mxu0 0.0
          %2179 = vmatpush1.msra.mxu0 0.0
          %2180 = vmatprep.subr.mxu0 0.0
          %2181 = vmatpush1.msra.mxu0 0.0
          %2182 = vmatprep.subr.mxu0 0.0
          %2183 = vmatpush1.msra.mxu0 0.0
          %2184 = vmatprep.subr.mxu0 0.0
          %2185 = vmatpush1.msra.mxu0 0.0
          %2186 = vmatprep.subr.mxu0 0.0
          %2187 = vmatpush1.msra.mxu0 0.0
          %2188 = vmatprep.subr.mxu0 0.0
          %2189 = vmatpush1.msra.mxu0 0.0
          %2190 = vmatprep.subr.mxu0 0.0
          %2191 = vmatpush1.msra.mxu0 0.0
          %2192 = vmatprep.subr.mxu0 0.0
          %2193 = vmatpush1.msra.mxu0 0.0
          %2194 = vmatprep.subr.mxu0 0.0
          %2195 = vmatpush1.msra.mxu0 0.0
          %2196 = vmatprep.subr.mxu0 0.0
          %2197 = vmatpush1.msra.mxu0 0.0
          %2198 = vmatprep.subr.mxu0 0.0
          %2199 = vmatpush1.msra.mxu0 0.0
          %2200 = vmatprep.subr.mxu0 0.0
          %2201 = vmatpush1.msra.mxu0 0.0
          %2202 = vmatprep.subr.mxu0 0.0
          %2203 = vmatpush1.msra.mxu0 0.0
          %2204 = vmatprep.subr.mxu0 0.0
          %2205 = vmatpush1.msra.mxu0 0.0
          %2206 = vmatprep.subr.mxu0 0.0
          %2207 = vmatpush1.msra.mxu0 0.0
          %2208 = vmatprep.mubr.f32.mxu0 0.0
          %v2209 = vand.u32 %v1888, 4294901760
          %v2210 = vsub.f32 %v1888, %v2209
          %v2211 = vand.u32 %v2210, 4294901760
          %2212 = vmatmul.mubr.f32.gmra.mrb[0].mxu0 %v2211
          %v2213 = vpop.f32.mrb[0].mxu0
          %v2214 = vadd.f32 %v2137, %v2213
          %v2215 = vpop.f32.mrb[0].mxu0
          %2216 = vdwg.mxu0
          %2217 = vmatprep.subr.mxu0 0.0
          %v2218 = vand.u32 %v291, 4294901760
          %v2219 = vsub.f32 %v291, %v2218
          %v2220 = vand.u32 %v2219, 4294901760
          %2221 = vmatpush1.msra.mxu0 %v2220
          %2222 = vmatprep.subr.mxu0 0.0
          %v2223 = vand.u32 %v292, 4294901760
          %v2224 = vsub.f32 %v292, %v2223
          %v2225 = vand.u32 %v2224, 4294901760
          %2226 = vmatpush1.msra.mxu0 %v2225
          %2227 = vmatprep.subr.mxu0 0.0
          %v2228 = vand.u32 %v293, 4294901760
          %v2229 = vsub.f32 %v293, %v2228
          %v2230 = vand.u32 %v2229, 4294901760
          %2231 = vmatpush1.msra.mxu0 %v2230
          %2232 = vmatprep.subr.mxu0 0.0
          %v2233 = vand.u32 %v294, 4294901760
          %v2234 = vsub.f32 %v294, %v2233
          %v2235 = vand.u32 %v2234, 4294901760
          %2236 = vmatpush1.msra.mxu0 %v2235
          %2237 = vmatprep.subr.mxu0 0.0
          %2238 = vmatpush1.msra.mxu0 0.0
          %2239 = vmatprep.subr.mxu0 0.0
          %2240 = vmatpush1.msra.mxu0 0.0
          %2241 = vmatprep.subr.mxu0 0.0
          %2242 = vmatpush1.msra.mxu0 0.0
          %2243 = vmatprep.subr.mxu0 0.0
          %2244 = vmatpush1.msra.mxu0 0.0
          %2245 = vmatprep.subr.mxu0 0.0
          %2246 = vmatpush1.msra.mxu0 0.0
          %2247 = vmatprep.subr.mxu0 0.0
          %2248 = vmatpush1.msra.mxu0 0.0
          %2249 = vmatprep.subr.mxu0 0.0
          %2250 = vmatpush1.msra.mxu0 0.0
          %2251 = vmatprep.subr.mxu0 0.0
          %2252 = vmatpush1.msra.mxu0 0.0
          %2253 = vmatprep.subr.mxu0 0.0
          %2254 = vmatpush1.msra.mxu0 0.0
          %2255 = vmatprep.subr.mxu0 0.0
          %2256 = vmatpush1.msra.mxu0 0.0
          %2257 = vmatprep.subr.mxu0 0.0
          %2258 = vmatpush1.msra.mxu0 0.0
          %2259 = vmatprep.subr.mxu0 0.0
          %2260 = vmatpush1.msra.mxu0 0.0
          %2261 = vmatprep.subr.mxu0 0.0
          %2262 = vmatpush1.msra.mxu0 0.0
          %2263 = vmatprep.subr.mxu0 0.0
          %2264 = vmatpush1.msra.mxu0 0.0
          %2265 = vmatprep.subr.mxu0 0.0
          %2266 = vmatpush1.msra.mxu0 0.0
          %2267 = vmatprep.subr.mxu0 0.0
          %2268 = vmatpush1.msra.mxu0 0.0
          %2269 = vmatprep.subr.mxu0 0.0
          %2270 = vmatpush1.msra.mxu0 0.0
          %2271 = vmatprep.subr.mxu0 0.0
          %2272 = vmatpush1.msra.mxu0 0.0
          %2273 = vmatprep.subr.mxu0 0.0
          %2274 = vmatpush1.msra.mxu0 0.0
          %2275 = vmatprep.subr.mxu0 0.0
          %2276 = vmatpush1.msra.mxu0 0.0
          %2277 = vmatprep.subr.mxu0 0.0
          %2278 = vmatpush1.msra.mxu0 0.0
          %2279 = vmatprep.subr.mxu0 0.0
          %2280 = vmatpush1.msra.mxu0 0.0
          %2281 = vmatprep.subr.mxu0 0.0
          %2282 = vmatpush1.msra.mxu0 0.0
          %2283 = vmatprep.subr.mxu0 0.0
          %2284 = vmatpush1.msra.mxu0 0.0
          %2285 = vmatprep.subr.mxu0 0.0
          %2286 = vmatpush1.msra.mxu0 0.0
          %2287 = vmatprep.subr.mxu0 0.0
          %2288 = vmatpush1.msra.mxu0 0.0
          %2289 = vmatprep.subr.mxu0 0.0
          %2290 = vmatpush1.msra.mxu0 0.0
          %2291 = vmatprep.subr.mxu0 0.0
          %2292 = vmatpush1.msra.mxu0 0.0
          %2293 = vmatprep.mubr.f32.mxu0 0.0
          %v2294 = vand.u32 %v1888, 4294901760
          %2295 = vmatmul.mubr.f32.gmra.mrb[0].mxu0 %v2294
          %v2296 = vpop.f32.mrb[0].mxu0
          %v2297 = vadd.f32 %v2214, %v2296
          %v2298 = vpop.f32.mrb[0].mxu0
          %2299 = vdwg.mxu0
          %2300 = vmatprep.subr.mxu0 0.0
          %v2301 = vand.u32 %v291, 4294901760
          %2302 = vmatpush1.msra.mxu0 %v2301
          %2303 = vmatprep.subr.mxu0 0.0
          %v2304 = vand.u32 %v292, 4294901760
          %2305 = vmatpush1.msra.mxu0 %v2304
          %2306 = vmatprep.subr.mxu0 0.0
          %v2307 = vand.u32 %v293, 4294901760
          %2308 = vmatpush1.msra.mxu0 %v2307
          %2309 = vmatprep.subr.mxu0 0.0
          %v2310 = vand.u32 %v294, 4294901760
          %2311 = vmatpush1.msra.mxu0 %v2310
          %2312 = vmatprep.subr.mxu0 0.0
          %2313 = vmatpush1.msra.mxu0 0.0
          %2314 = vmatprep.subr.mxu0 0.0
          %2315 = vmatpush1.msra.mxu0 0.0
          %2316 = vmatprep.subr.mxu0 0.0
          %2317 = vmatpush1.msra.mxu0 0.0
          %2318 = vmatprep.subr.mxu0 0.0
          %2319 = vmatpush1.msra.mxu0 0.0
          %2320 = vmatprep.subr.mxu0 0.0
          %2321 = vmatpush1.msra.mxu0 0.0
          %2322 = vmatprep.subr.mxu0 0.0
          %2323 = vmatpush1.msra.mxu0 0.0
          %2324 = vmatprep.subr.mxu0 0.0
          %2325 = vmatpush1.msra.mxu0 0.0
          %2326 = vmatprep.subr.mxu0 0.0
          %2327 = vmatpush1.msra.mxu0 0.0
          %2328 = vmatprep.subr.mxu0 0.0
          %2329 = vmatpush1.msra.mxu0 0.0
          %2330 = vmatprep.subr.mxu0 0.0
          %2331 = vmatpush1.msra.mxu0 0.0
          %2332 = vmatprep.subr.mxu0 0.0
          %2333 = vmatpush1.msra.mxu0 0.0
          %2334 = vmatprep.subr.mxu0 0.0
          %2335 = vmatpush1.msra.mxu0 0.0
          %2336 = vmatprep.subr.mxu0 0.0
          %2337 = vmatpush1.msra.mxu0 0.0
          %2338 = vmatprep.subr.mxu0 0.0
          %2339 = vmatpush1.msra.mxu0 0.0
          %2340 = vmatprep.subr.mxu0 0.0
          %2341 = vmatpush1.msra.mxu0 0.0
          %2342 = vmatprep.subr.mxu0 0.0
          %2343 = vmatpush1.msra.mxu0 0.0
          %2344 = vmatprep.subr.mxu0 0.0
          %2345 = vmatpush1.msra.mxu0 0.0
          %2346 = vmatprep.subr.mxu0 0.0
          %2347 = vmatpush1.msra.mxu0 0.0
          %2348 = vmatprep.subr.mxu0 0.0
          %2349 = vmatpush1.msra.mxu0 0.0
          %2350 = vmatprep.subr.mxu0 0.0
          %2351 = vmatpush1.msra.mxu0 0.0
          %2352 = vmatprep.subr.mxu0 0.0
          %2353 = vmatpush1.msra.mxu0 0.0
          %2354 = vmatprep.subr.mxu0 0.0
          %2355 = vmatpush1.msra.mxu0 0.0
          %2356 = vmatprep.subr.mxu0 0.0
          %2357 = vmatpush1.msra.mxu0 0.0
          %2358 = vmatprep.subr.mxu0 0.0
          %2359 = vmatpush1.msra.mxu0 0.0
          %2360 = vmatprep.subr.mxu0 0.0
          %2361 = vmatpush1.msra.mxu0 0.0
          %2362 = vmatprep.subr.mxu0 0.0
          %2363 = vmatpush1.msra.mxu0 0.0
          %2364 = vmatprep.subr.mxu0 0.0
          %2365 = vmatpush1.msra.mxu0 0.0
          %2366 = vmatprep.subr.mxu0 0.0
          %2367 = vmatpush1.msra.mxu0 0.0
          %2368 = vmatprep.mubr.f32.mxu0 0.0
          %v2369 = vand.u32 %v1888, 4294901760
          %2370 = vmatmul.mubr.f32.gmra.mrb[0].mxu0 %v2369
          %v2371 = vpop.f32.mrb[0].mxu0
          %v2372 = vadd.f32 %v2297, %v2371
          %v2373 = vpop.f32.mrb[0].mxu0
          %2374 = vdwg.mxu0
          %v2376 = vsel %vm819, %v1885, 0
          %2378 = vmatprep.subr.mxu0 0.0
          %v2379 = vand.u32 %v291, 4294901760
          %2380 = vmatpush1.msra.mxu0 %v2379
          %2381 = vmatprep.subr.mxu0 0.0
          %v2382 = vand.u32 %v292, 4294901760
          %2383 = vmatpush1.msra.mxu0 %v2382
          %2384 = vmatprep.subr.mxu0 0.0
          %v2385 = vand.u32 %v293, 4294901760
          %2386 = vmatpush1.msra.mxu0 %v2385
          %2387 = vmatprep.subr.mxu0 0.0
          %v2388 = vand.u32 %v294, 4294901760
          %2389 = vmatpush1.msra.mxu0 %v2388
          %2390 = vmatprep.subr.mxu0 0.0
          %2391 = vmatpush1.msra.mxu0 0.0
          %2392 = vmatprep.subr.mxu0 0.0
          %2393 = vmatpush1.msra.mxu0 0.0
          %2394 = vmatprep.subr.mxu0 0.0
          %2395 = vmatpush1.msra.mxu0 0.0
          %2396 = vmatprep.subr.mxu0 0.0
          %2397 = vmatpush1.msra.mxu0 0.0
          %2398 = vmatprep.subr.mxu0 0.0
          %2399 = vmatpush1.msra.mxu0 0.0
          %2400 = vmatprep.subr.mxu0 0.0
          %2401 = vmatpush1.msra.mxu0 0.0
          %2402 = vmatprep.subr.mxu0 0.0
          %2403 = vmatpush1.msra.mxu0 0.0
          %2404 = vmatprep.subr.mxu0 0.0
          %2405 = vmatpush1.msra.mxu0 0.0
          %2406 = vmatprep.subr.mxu0 0.0
          %2407 = vmatpush1.msra.mxu0 0.0
          %2408 = vmatprep.subr.mxu0 0.0
          %2409 = vmatpush1.msra.mxu0 0.0
          %2410 = vmatprep.subr.mxu0 0.0
          %2411 = vmatpush1.msra.mxu0 0.0
          %2412 = vmatprep.subr.mxu0 0.0
          %2413 = vmatpush1.msra.mxu0 0.0
          %2414 = vmatprep.subr.mxu0 0.0
          %2415 = vmatpush1.msra.mxu0 0.0
          %2416 = vmatprep.subr.mxu0 0.0
          %2417 = vmatpush1.msra.mxu0 0.0
          %2418 = vmatprep.subr.mxu0 0.0
          %2419 = vmatpush1.msra.mxu0 0.0
          %2420 = vmatprep.subr.mxu0 0.0
          %2421 = vmatpush1.msra.mxu0 0.0
          %2422 = vmatprep.subr.mxu0 0.0
          %2423 = vmatpush1.msra.mxu0 0.0
          %2424 = vmatprep.subr.mxu0 0.0
          %2425 = vmatpush1.msra.mxu0 0.0
          %2426 = vmatprep.subr.mxu0 0.0
          %2427 = vmatpush1.msra.mxu0 0.0
          %2428 = vmatprep.subr.mxu0 0.0
          %2429 = vmatpush1.msra.mxu0 0.0
          %2430 = vmatprep.subr.mxu0 0.0
          %2431 = vmatpush1.msra.mxu0 0.0
          %2432 = vmatprep.subr.mxu0 0.0
          %2433 = vmatpush1.msra.mxu0 0.0
          %2434 = vmatprep.subr.mxu0 0.0
          %2435 = vmatpush1.msra.mxu0 0.0
          %2436 = vmatprep.subr.mxu0 0.0
          %2437 = vmatpush1.msra.mxu0 0.0
          %2438 = vmatprep.subr.mxu0 0.0
          %2439 = vmatpush1.msra.mxu0 0.0
          %2440 = vmatprep.subr.mxu0 0.0
          %2441 = vmatpush1.msra.mxu0 0.0
          %2442 = vmatprep.subr.mxu0 0.0
          %2443 = vmatpush1.msra.mxu0 0.0
          %2444 = vmatprep.subr.mxu0 0.0
          %2445 = vmatpush1.msra.mxu0 0.0
          %2446 = vmatprep.mubr.f32.mxu0 0.0
          %v2447 = vand.u32 %v2376, 4294901760
          %v2448 = vsub.f32 %v2376, %v2447
          %v2449 = vand.u32 %v2448, 4294901760
          %v2450 = vsub.f32 %v2448, %v2449
          %v2451 = vand.u32 %v2450, 4294901760
          %2452 = vmatmul.mubr.f32.gmra.mrb[0].mxu0 %v2451
          %v2453 = vpop.f32.mrb[0].mxu0
          %v2454 = vadd.f32 0.0, %v2453
          %v2455 = vpop.f32.mrb[0].mxu0
          %2456 = vdwg.mxu0
          %2457 = vmatprep.subr.mxu0 0.0
          %v2458 = vand.u32 %v291, 4294901760
          %v2459 = vsub.f32 %v291, %v2458
          %v2460 = vand.u32 %v2459, 4294901760
          %v2461 = vsub.f32 %v2459, %v2460
          %v2462 = vand.u32 %v2461, 4294901760
          %2463 = vmatpush1.msra.mxu0 %v2462
          %2464 = vmatprep.subr.mxu0 0.0
          %v2465 = vand.u32 %v292, 4294901760
          %v2466 = vsub.f32 %v292, %v2465
          %v2467 = vand.u32 %v2466, 4294901760
          %v2468 = vsub.f32 %v2466, %v2467
          %v2469 = vand.u32 %v2468, 4294901760
          %2470 = vmatpush1.msra.mxu0 %v2469
          %2471 = vmatprep.subr.mxu0 0.0
          %v2472 = vand.u32 %v293, 4294901760
          %v2473 = vsub.f32 %v293, %v2472
          %v2474 = vand.u32 %v2473, 4294901760
          %v2475 = vsub.f32 %v2473, %v2474
          %v2476 = vand.u32 %v2475, 4294901760
          %2477 = vmatpush1.msra.mxu0 %v2476
          %2478 = vmatprep.subr.mxu0 0.0
          %v2479 = vand.u32 %v294, 4294901760
          %v2480 = vsub.f32 %v294, %v2479
          %v2481 = vand.u32 %v2480, 4294901760
          %v2482 = vsub.f32 %v2480, %v2481
          %v2483 = vand.u32 %v2482, 4294901760
          %2484 = vmatpush1.msra.mxu0 %v2483
          %2485 = vmatprep.subr.mxu0 0.0
          %2486 = vmatpush1.msra.mxu0 0.0
          %2487 = vmatprep.subr.mxu0 0.0
          %2488 = vmatpush1.msra.mxu0 0.0
          %2489 = vmatprep.subr.mxu0 0.0
          %2490 = vmatpush1.msra.mxu0 0.0
          %2491 = vmatprep.subr.mxu0 0.0
          %2492 = vmatpush1.msra.mxu0 0.0
          %2493 = vmatprep.subr.mxu0 0.0
          %2494 = vmatpush1.msra.mxu0 0.0
          %2495 = vmatprep.subr.mxu0 0.0
          %2496 = vmatpush1.msra.mxu0 0.0
          %2497 = vmatprep.subr.mxu0 0.0
          %2498 = vmatpush1.msra.mxu0 0.0
          %2499 = vmatprep.subr.mxu0 0.0
          %2500 = vmatpush1.msra.mxu0 0.0
          %2501 = vmatprep.subr.mxu0 0.0
          %2502 = vmatpush1.msra.mxu0 0.0
          %2503 = vmatprep.subr.mxu0 0.0
          %2504 = vmatpush1.msra.mxu0 0.0
          %2505 = vmatprep.subr.mxu0 0.0
          %2506 = vmatpush1.msra.mxu0 0.0
          %2507 = vmatprep.subr.mxu0 0.0
          %2508 = vmatpush1.msra.mxu0 0.0
          %2509 = vmatprep.subr.mxu0 0.0
          %2510 = vmatpush1.msra.mxu0 0.0
          %2511 = vmatprep.subr.mxu0 0.0
          %2512 = vmatpush1.msra.mxu0 0.0
          %2513 = vmatprep.subr.mxu0 0.0
          %2514 = vmatpush1.msra.mxu0 0.0
          %2515 = vmatprep.subr.mxu0 0.0
          %2516 = vmatpush1.msra.mxu0 0.0
          %2517 = vmatprep.subr.mxu0 0.0
          %2518 = vmatpush1.msra.mxu0 0.0
          %2519 = vmatprep.subr.mxu0 0.0
          %2520 = vmatpush1.msra.mxu0 0.0
          %2521 = vmatprep.subr.mxu0 0.0
          %2522 = vmatpush1.msra.mxu0 0.0
          %2523 = vmatprep.subr.mxu0 0.0
          %2524 = vmatpush1.msra.mxu0 0.0
          %2525 = vmatprep.subr.mxu0 0.0
          %2526 = vmatpush1.msra.mxu0 0.0
          %2527 = vmatprep.subr.mxu0 0.0
          %2528 = vmatpush1.msra.mxu0 0.0
          %2529 = vmatprep.subr.mxu0 0.0
          %2530 = vmatpush1.msra.mxu0 0.0
          %2531 = vmatprep.subr.mxu0 0.0
          %2532 = vmatpush1.msra.mxu0 0.0
          %2533 = vmatprep.subr.mxu0 0.0
          %2534 = vmatpush1.msra.mxu0 0.0
          %2535 = vmatprep.subr.mxu0 0.0
          %2536 = vmatpush1.msra.mxu0 0.0
          %2537 = vmatprep.subr.mxu0 0.0
          %2538 = vmatpush1.msra.mxu0 0.0
          %2539 = vmatprep.subr.mxu0 0.0
          %2540 = vmatpush1.msra.mxu0 0.0
          %2541 = vmatprep.mubr.f32.mxu0 0.0
          %v2542 = vand.u32 %v2376, 4294901760
          %2543 = vmatmul.mubr.f32.gmra.mrb[0].mxu0 %v2542
          %v2544 = vpop.f32.mrb[0].mxu0
          %v2545 = vadd.f32 %v2454, %v2544
          %v2546 = vpop.f32.mrb[0].mxu0
          %2547 = vdwg.mxu0
          %2548 = vmatprep.subr.mxu0 0.0
          %v2549 = vand.u32 %v291, 4294901760
          %v2550 = vsub.f32 %v291, %v2549
          %2551 = vmatpush1.msra.mxu0 %v2550
          %2552 = vmatprep.subr.mxu0 0.0
          %v2553 = vand.u32 %v292, 4294901760
          %v2554 = vsub.f32 %v292, %v2553
          %2555 = vmatpush1.msra.mxu0 %v2554
          %2556 = vmatprep.subr.mxu0 0.0
          %v2557 = vand.u32 %v293, 4294901760
          %v2558 = vsub.f32 %v293, %v2557
          %2559 = vmatpush1.msra.mxu0 %v2558
          %2560 = vmatprep.subr.mxu0 0.0
          %v2561 = vand.u32 %v294, 4294901760
          %v2562 = vsub.f32 %v294, %v2561
          %2563 = vmatpush1.msra.mxu0 %v2562
          %2564 = vmatprep.subr.mxu0 0.0
          %2565 = vmatpush1.msra.mxu0 0.0
          %2566 = vmatprep.subr.mxu0 0.0
          %2567 = vmatpush1.msra.mxu0 0.0
          %2568 = vmatprep.subr.mxu0 0.0
          %2569 = vmatpush1.msra.mxu0 0.0
          %2570 = vmatprep.subr.mxu0 0.0
          %2571 = vmatpush1.msra.mxu0 0.0
          %2572 = vmatprep.subr.mxu0 0.0
          %2573 = vmatpush1.msra.mxu0 0.0
          %2574 = vmatprep.subr.mxu0 0.0
          %2575 = vmatpush1.msra.mxu0 0.0
          %2576 = vmatprep.subr.mxu0 0.0
          %2577 = vmatpush1.msra.mxu0 0.0
          %2578 = vmatprep.subr.mxu0 0.0
          %2579 = vmatpush1.msra.mxu0 0.0
          %2580 = vmatprep.subr.mxu0 0.0
          %2581 = vmatpush1.msra.mxu0 0.0
          %2582 = vmatprep.subr.mxu0 0.0
          %2583 = vmatpush1.msra.mxu0 0.0
          %2584 = vmatprep.subr.mxu0 0.0
          %2585 = vmatpush1.msra.mxu0 0.0
          %2586 = vmatprep.subr.mxu0 0.0
          %2587 = vmatpush1.msra.mxu0 0.0
          %2588 = vmatprep.subr.mxu0 0.0
          %2589 = vmatpush1.msra.mxu0 0.0
          %2590 = vmatprep.subr.mxu0 0.0
          %2591 = vmatpush1.msra.mxu0 0.0
          %2592 = vmatprep.subr.mxu0 0.0
          %2593 = vmatpush1.msra.mxu0 0.0
          %2594 = vmatprep.subr.mxu0 0.0
          %2595 = vmatpush1.msra.mxu0 0.0
          %2596 = vmatprep.subr.mxu0 0.0
          %2597 = vmatpush1.msra.mxu0 0.0
          %2598 = vmatprep.subr.mxu0 0.0
          %2599 = vmatpush1.msra.mxu0 0.0
          %2600 = vmatprep.subr.mxu0 0.0
          %2601 = vmatpush1.msra.mxu0 0.0
          %2602 = vmatprep.subr.mxu0 0.0
          %2603 = vmatpush1.msra.mxu0 0.0
          %2604 = vmatprep.subr.mxu0 0.0
          %2605 = vmatpush1.msra.mxu0 0.0
          %2606 = vmatprep.subr.mxu0 0.0
          %2607 = vmatpush1.msra.mxu0 0.0
          %2608 = vmatprep.subr.mxu0 0.0
          %2609 = vmatpush1.msra.mxu0 0.0
          %2610 = vmatprep.subr.mxu0 0.0
          %2611 = vmatpush1.msra.mxu0 0.0
          %2612 = vmatprep.subr.mxu0 0.0
          %2613 = vmatpush1.msra.mxu0 0.0
          %2614 = vmatprep.subr.mxu0 0.0
          %2615 = vmatpush1.msra.mxu0 0.0
          %2616 = vmatprep.subr.mxu0 0.0
          %2617 = vmatpush1.msra.mxu0 0.0
          %2618 = vmatprep.subr.mxu0 0.0
          %2619 = vmatpush1.msra.mxu0 0.0
          %2620 = vmatprep.mubr.f32.mxu0 0.0
          %v2621 = vand.u32 %v2376, 4294901760
          %v2622 = vsub.f32 %v2376, %v2621
          %2623 = vmatmul.mubr.f32.gmra.mrb[0].mxu0 %v2622
          %v2624 = vpop.f32.mrb[0].mxu0
          %v2625 = vadd.f32 %v2545, %v2624
          %v2626 = vpop.f32.mrb[0].mxu0
          %2627 = vdwg.mxu0
          %2628 = vmatprep.subr.mxu0 0.0
          %v2629 = vand.u32 %v291, 4294901760
          %2630 = vmatpush1.msra.mxu0 %v2629
          %2631 = vmatprep.subr.mxu0 0.0
          %v2632 = vand.u32 %v292, 4294901760
          %2633 = vmatpush1.msra.mxu0 %v2632
          %2634 = vmatprep.subr.mxu0 0.0
          %v2635 = vand.u32 %v293, 4294901760
          %2636 = vmatpush1.msra.mxu0 %v2635
          %2637 = vmatprep.subr.mxu0 0.0
          %v2638 = vand.u32 %v294, 4294901760
          %2639 = vmatpush1.msra.mxu0 %v2638
          %2640 = vmatprep.subr.mxu0 0.0
          %2641 = vmatpush1.msra.mxu0 0.0
          %2642 = vmatprep.subr.mxu0 0.0
          %2643 = vmatpush1.msra.mxu0 0.0
          %2644 = vmatprep.subr.mxu0 0.0
          %2645 = vmatpush1.msra.mxu0 0.0
          %2646 = vmatprep.subr.mxu0 0.0
          %2647 = vmatpush1.msra.mxu0 0.0
          %2648 = vmatprep.subr.mxu0 0.0
          %2649 = vmatpush1.msra.mxu0 0.0
          %2650 = vmatprep.subr.mxu0 0.0
          %2651 = vmatpush1.msra.mxu0 0.0
          %2652 = vmatprep.subr.mxu0 0.0
          %2653 = vmatpush1.msra.mxu0 0.0
          %2654 = vmatprep.subr.mxu0 0.0
          %2655 = vmatpush1.msra.mxu0 0.0
          %2656 = vmatprep.subr.mxu0 0.0
          %2657 = vmatpush1.msra.mxu0 0.0
          %2658 = vmatprep.subr.mxu0 0.0
          %2659 = vmatpush1.msra.mxu0 0.0
          %2660 = vmatprep.subr.mxu0 0.0
          %2661 = vmatpush1.msra.mxu0 0.0
          %2662 = vmatprep.subr.mxu0 0.0
          %2663 = vmatpush1.msra.mxu0 0.0
          %2664 = vmatprep.subr.mxu0 0.0
          %2665 = vmatpush1.msra.mxu0 0.0
          %2666 = vmatprep.subr.mxu0 0.0
          %2667 = vmatpush1.msra.mxu0 0.0
          %2668 = vmatprep.subr.mxu0 0.0
          %2669 = vmatpush1.msra.mxu0 0.0
          %2670 = vmatprep.subr.mxu0 0.0
          %2671 = vmatpush1.msra.mxu0 0.0
          %2672 = vmatprep.subr.mxu0 0.0
          %2673 = vmatpush1.msra.mxu0 0.0
          %2674 = vmatprep.subr.mxu0 0.0
          %2675 = vmatpush1.msra.mxu0 0.0
          %2676 = vmatprep.subr.mxu0 0.0
          %2677 = vmatpush1.msra.mxu0 0.0
          %2678 = vmatprep.subr.mxu0 0.0
          %2679 = vmatpush1.msra.mxu0 0.0
          %2680 = vmatprep.subr.mxu0 0.0
          %2681 = vmatpush1.msra.mxu0 0.0
          %2682 = vmatprep.subr.mxu0 0.0
          %2683 = vmatpush1.msra.mxu0 0.0
          %2684 = vmatprep.subr.mxu0 0.0
          %2685 = vmatpush1.msra.mxu0 0.0
          %2686 = vmatprep.subr.mxu0 0.0
          %2687 = vmatpush1.msra.mxu0 0.0
          %2688 = vmatprep.subr.mxu0 0.0
          %2689 = vmatpush1.msra.mxu0 0.0
          %2690 = vmatprep.subr.mxu0 0.0
          %2691 = vmatpush1.msra.mxu0 0.0
          %2692 = vmatprep.subr.mxu0 0.0
          %2693 = vmatpush1.msra.mxu0 0.0
          %2694 = vmatprep.subr.mxu0 0.0
          %2695 = vmatpush1.msra.mxu0 0.0
          %2696 = vmatprep.mubr.f32.mxu0 0.0
          %v2697 = vand.u32 %v2376, 4294901760
          %v2698 = vsub.f32 %v2376, %v2697
          %v2699 = vand.u32 %v2698, 4294901760
          %2700 = vmatmul.mubr.f32.gmra.mrb[0].mxu0 %v2699
          %v2701 = vpop.f32.mrb[0].mxu0
          %v2702 = vadd.f32 %v2625, %v2701
          %v2703 = vpop.f32.mrb[0].mxu0
          %2704 = vdwg.mxu0
          %2705 = vmatprep.subr.mxu0 0.0
          %v2706 = vand.u32 %v291, 4294901760
          %v2707 = vsub.f32 %v291, %v2706
          %v2708 = vand.u32 %v2707, 4294901760
          %2709 = vmatpush1.msra.mxu0 %v2708
          %2710 = vmatprep.subr.mxu0 0.0
          %v2711 = vand.u32 %v292, 4294901760
          %v2712 = vsub.f32 %v292, %v2711
          %v2713 = vand.u32 %v2712, 4294901760
          %2714 = vmatpush1.msra.mxu0 %v2713
          %2715 = vmatprep.subr.mxu0 0.0
          %v2716 = vand.u32 %v293, 4294901760
          %v2717 = vsub.f32 %v293, %v2716
          %v2718 = vand.u32 %v2717, 4294901760
          %2719 = vmatpush1.msra.mxu0 %v2718
          %2720 = vmatprep.subr.mxu0 0.0
          %v2721 = vand.u32 %v294, 4294901760
          %v2722 = vsub.f32 %v294, %v2721
          %v2723 = vand.u32 %v2722, 4294901760
          %2724 = vmatpush1.msra.mxu0 %v2723
          %2725 = vmatprep.subr.mxu0 0.0
          %2726 = vmatpush1.msra.mxu0 0.0
          %2727 = vmatprep.subr.mxu0 0.0
          %2728 = vmatpush1.msra.mxu0 0.0
          %2729 = vmatprep.subr.mxu0 0.0
          %2730 = vmatpush1.msra.mxu0 0.0
          %2731 = vmatprep.subr.mxu0 0.0
          %2732 = vmatpush1.msra.mxu0 0.0
          %2733 = vmatprep.subr.mxu0 0.0
          %2734 = vmatpush1.msra.mxu0 0.0
          %2735 = vmatprep.subr.mxu0 0.0
          %2736 = vmatpush1.msra.mxu0 0.0
          %2737 = vmatprep.subr.mxu0 0.0
          %2738 = vmatpush1.msra.mxu0 0.0
          %2739 = vmatprep.subr.mxu0 0.0
          %2740 = vmatpush1.msra.mxu0 0.0
          %2741 = vmatprep.subr.mxu0 0.0
          %2742 = vmatpush1.msra.mxu0 0.0
          %2743 = vmatprep.subr.mxu0 0.0
          %2744 = vmatpush1.msra.mxu0 0.0
          %2745 = vmatprep.subr.mxu0 0.0
          %2746 = vmatpush1.msra.mxu0 0.0
          %2747 = vmatprep.subr.mxu0 0.0
          %2748 = vmatpush1.msra.mxu0 0.0
          %2749 = vmatprep.subr.mxu0 0.0
          %2750 = vmatpush1.msra.mxu0 0.0
          %2751 = vmatprep.subr.mxu0 0.0
          %2752 = vmatpush1.msra.mxu0 0.0
          %2753 = vmatprep.subr.mxu0 0.0
          %2754 = vmatpush1.msra.mxu0 0.0
          %2755 = vmatprep.subr.mxu0 0.0
          %2756 = vmatpush1.msra.mxu0 0.0
          %2757 = vmatprep.subr.mxu0 0.0
          %2758 = vmatpush1.msra.mxu0 0.0
          %2759 = vmatprep.subr.mxu0 0.0
          %2760 = vmatpush1.msra.mxu0 0.0
          %2761 = vmatprep.subr.mxu0 0.0
          %2762 = vmatpush1.msra.mxu0 0.0
          %2763 = vmatprep.subr.mxu0 0.0
          %2764 = vmatpush1.msra.mxu0 0.0
          %2765 = vmatprep.subr.mxu0 0.0
          %2766 = vmatpush1.msra.mxu0 0.0
          %2767 = vmatprep.subr.mxu0 0.0
          %2768 = vmatpush1.msra.mxu0 0.0
          %2769 = vmatprep.subr.mxu0 0.0
          %2770 = vmatpush1.msra.mxu0 0.0
          %2771 = vmatprep.subr.mxu0 0.0
          %2772 = vmatpush1.msra.mxu0 0.0
          %2773 = vmatprep.subr.mxu0 0.0
          %2774 = vmatpush1.msra.mxu0 0.0
          %2775 = vmatprep.subr.mxu0 0.0
          %2776 = vmatpush1.msra.mxu0 0.0
          %2777 = vmatprep.subr.mxu0 0.0
          %2778 = vmatpush1.msra.mxu0 0.0
          %2779 = vmatprep.subr.mxu0 0.0
          %2780 = vmatpush1.msra.mxu0 0.0
          %2781 = vmatprep.mubr.f32.mxu0 0.0
          %v2782 = vand.u32 %v2376, 4294901760
          %2783 = vmatmul.mubr.f32.gmra.mrb[0].mxu0 %v2782
          %v2784 = vpop.f32.mrb[0].mxu0
          %v2785 = vadd.f32 %v2702, %v2784
          %v2786 = vpop.f32.mrb[0].mxu0
          %2787 = vdwg.mxu0
          %2788 = vmatprep.subr.mxu0 0.0
          %v2789 = vand.u32 %v291, 4294901760
          %2790 = vmatpush1.msra.mxu0 %v2789
          %2791 = vmatprep.subr.mxu0 0.0
          %v2792 = vand.u32 %v292, 4294901760
          %2793 = vmatpush1.msra.mxu0 %v2792
          %2794 = vmatprep.subr.mxu0 0.0
          %v2795 = vand.u32 %v293, 4294901760
          %2796 = vmatpush1.msra.mxu0 %v2795
          %2797 = vmatprep.subr.mxu0 0.0
          %v2798 = vand.u32 %v294, 4294901760
          %2799 = vmatpush1.msra.mxu0 %v2798
          %2800 = vmatprep.subr.mxu0 0.0
          %2801 = vmatpush1.msra.mxu0 0.0
          %2802 = vmatprep.subr.mxu0 0.0
          %2803 = vmatpush1.msra.mxu0 0.0
          %2804 = vmatprep.subr.mxu0 0.0
          %2805 = vmatpush1.msra.mxu0 0.0
          %2806 = vmatprep.subr.mxu0 0.0
          %2807 = vmatpush1.msra.mxu0 0.0
          %2808 = vmatprep.subr.mxu0 0.0
          %2809 = vmatpush1.msra.mxu0 0.0
          %2810 = vmatprep.subr.mxu0 0.0
          %2811 = vmatpush1.msra.mxu0 0.0
          %2812 = vmatprep.subr.mxu0 0.0
          %2813 = vmatpush1.msra.mxu0 0.0
          %2814 = vmatprep.subr.mxu0 0.0
          %2815 = vmatpush1.msra.mxu0 0.0
          %2816 = vmatprep.subr.mxu0 0.0
          %2817 = vmatpush1.msra.mxu0 0.0
          %2818 = vmatprep.subr.mxu0 0.0
          %2819 = vmatpush1.msra.mxu0 0.0
          %2820 = vmatprep.subr.mxu0 0.0
          %2821 = vmatpush1.msra.mxu0 0.0
          %2822 = vmatprep.subr.mxu0 0.0
          %2823 = vmatpush1.msra.mxu0 0.0
          %2824 = vmatprep.subr.mxu0 0.0
          %2825 = vmatpush1.msra.mxu0 0.0
          %2826 = vmatprep.subr.mxu0 0.0
          %2827 = vmatpush1.msra.mxu0 0.0
          %2828 = vmatprep.subr.mxu0 0.0
          %2829 = vmatpush1.msra.mxu0 0.0
          %2830 = vmatprep.subr.mxu0 0.0
          %2831 = vmatpush1.msra.mxu0 0.0
          %2832 = vmatprep.subr.mxu0 0.0
          %2833 = vmatpush1.msra.mxu0 0.0
          %2834 = vmatprep.subr.mxu0 0.0
          %2835 = vmatpush1.msra.mxu0 0.0
          %2836 = vmatprep.subr.mxu0 0.0
          %2837 = vmatpush1.msra.mxu0 0.0
          %2838 = vmatprep.subr.mxu0 0.0
          %2839 = vmatpush1.msra.mxu0 0.0
          %2840 = vmatprep.subr.mxu0 0.0
          %2841 = vmatpush1.msra.mxu0 0.0
          %2842 = vmatprep.subr.mxu0 0.0
          %2843 = vmatpush1.msra.mxu0 0.0
          %2844 = vmatprep.subr.mxu0 0.0
          %2845 = vmatpush1.msra.mxu0 0.0
          %2846 = vmatprep.subr.mxu0 0.0
          %2847 = vmatpush1.msra.mxu0 0.0
          %2848 = vmatprep.subr.mxu0 0.0
          %2849 = vmatpush1.msra.mxu0 0.0
          %2850 = vmatprep.subr.mxu0 0.0
          %2851 = vmatpush1.msra.mxu0 0.0
          %2852 = vmatprep.subr.mxu0 0.0
          %2853 = vmatpush1.msra.mxu0 0.0
          %2854 = vmatprep.subr.mxu0 0.0
          %2855 = vmatpush1.msra.mxu0 0.0
          %2856 = vmatprep.mubr.f32.mxu0 0.0
          %v2857 = vand.u32 %v2376, 4294901760
          %2858 = vmatmul.mubr.f32.gmra.mrb[0].mxu0 %v2857
          %v2859 = vpop.f32.mrb[0].mxu0
          %v2860 = vadd.f32 %v2785, %v2859
          %v2861 = vpop.f32.mrb[0].mxu0
          %2862 = vdwg.mxu0
          %v2863 = vld [vmem:[%s2] sm:$0x1]
          %v2864 = vmul.f32 %v2860, %v2863
          %2865 = vst [vmem:[%s276] sm:$0x1] %v2864
          %v2866 = vld [vmem:[%s3] sm:$0x1]
          %v2867 = vmul.f32 %v2372, %v2864
          %v2868 = vsub.f32 %v2866, %v2867
          %2869 = vst [vmem:[%s282] sm:$0x1] %v2868
        $region52: #{tpu_custom_call.1} parent=35 // pred_fallthru
          _
        %s2870 = sand.u32 %s138, 1
        %s2871 = scalar_lea.sflag [#allocation6], %s2870
        %s2872 = sand.u32 %s138, 1
        %s2873 = scalar_lea.vmem [#allocation9], %s2872
        %s2874 = sand.u32 %s164, 1
        %s2875 = scalar_lea.sflag [#allocation11], %s2874
        %s2876 = sand.u32 %s164, 1
        %s2877 = scalar_lea.vmem [#allocation10], %s2876
        // Predicated region
        $region53: #{tpu_custom_call.1} parent=35 // pred_check
          %p2878 = pneg %p148
        $region54: #{tpu_custom_call.1} parent=35 // pred_check_branch
          %2880 = sbr.rel (%p2878) target = $region56
        $region55: #{tpu_custom_call.1} parent=35 // pred_region
          %s2882 = ssub.s32 16, 16
          %2883 = vsyncadd %s2871, %s2882
          %s2884 = smul.addr %s31, 16
          %s2885 = scalar_lea.hbm %s4, %s2884
          %s2887 = sshll.u32 %s2873, 4
          %s2888 = int_to_ptr.vmem [resolvable:$true] %s2887
          %2890 = dma.vmem_to_hbm [thread:$0]  %s2888, 16, %s2885, %s2871
        $region56: #{tpu_custom_call.1} parent=35 // pred_fallthru
          _
        // Predicated region
        $region57: #{tpu_custom_call.1} parent=35 // pred_check
          %p2891 = pneg %p174
        $region58: #{tpu_custom_call.1} parent=35 // pred_check_branch
          %2893 = sbr.rel (%p2891) target = $region60
        $region59: #{tpu_custom_call.1} parent=35 // pred_region
          %s2895 = ssub.s32 16, 16
          %2896 = vsyncadd %s2875, %s2895
          %s2897 = smul.addr %s31, 16
          %s2898 = scalar_lea.hbm %s5, %s2897
          %s2900 = sshll.u32 %s2877, 4
          %s2901 = int_to_ptr.vmem [resolvable:$true] %s2900
          %2903 = dma.vmem_to_hbm [thread:$0]  %s2901, 16, %s2898, %s2875
        $region60: #{tpu_custom_call.1} parent=35 // pred_fallthru
          _
      $region36: #{tpu_custom_call.1} parent=5 // pred_fallthru
        _
      %p2904 = scmp.le.s32.totalorder 2, %s22
      // Predicated region
      $region61: #{tpu_custom_call.1} parent=5 // pred_check
        %p2905 = pneg %p2904
      $region62: #{tpu_custom_call.1} parent=5 // pred_check_branch
        %2907 = sbr.rel (%p2905) target = $region64
      $region63: #{tpu_custom_call.1} parent=5 // pred_region
        %s2908 = ssub.s32 %s22, 2
        // Predicated region
        $region65: #{tpu_custom_call.1} parent=63 // pred_check
          %p2909 = pneg %p154
        $region66: #{tpu_custom_call.1} parent=63 // pred_check_branch
          %2911 = sbr.rel (%p2909) target = $region68
        $region67: #{tpu_custom_call.1} parent=63 // pred_region
          %s2912 = sand.u32 %s139, 1
          %s2913 = scalar_lea.sflag [#allocation6], %s2912
          %s2914 = sand.u32 %s139, 1
          %s2915 = scalar_lea.vmem [#allocation9], %s2914
          %2916 = dma.done %s2913, 16
        $region68: #{tpu_custom_call.1} parent=63 // pred_fallthru
          _
        // Predicated region
        $region69: #{tpu_custom_call.1} parent=63 // pred_check
          %p2917 = pneg %p180
        $region70: #{tpu_custom_call.1} parent=63 // pred_check_branch
          %2919 = sbr.rel (%p2917) target = $region72
        $region71: #{tpu_custom_call.1} parent=63 // pred_region
          %s2920 = sand.u32 %s165, 1
          %s2921 = scalar_lea.sflag [#allocation11], %s2920
          %s2922 = sand.u32 %s165, 1
          %s2923 = scalar_lea.vmem [#allocation10], %s2922
          %2924 = dma.done %s2921, 16
        $region72: #{tpu_custom_call.1} parent=63 // pred_fallthru
          _
      $region64: #{tpu_custom_call.1} parent=5 // pred_fallthru
        _
    $region6: #{tpu_custom_call.1} parent=1 // loop_footer
      %s26 = sadd.s32 1, %s22
    $region7: #{tpu_custom_call.1} parent=1 // loop_footer_branch
      %21 = sbr.rel target = $region3
    $region8: #{tpu_custom_call.1} parent=1 // loop_exit
      _
    %2925 = vsyncpa [#allocation5], 1
    %s2926 = scalar_lea.sflag [#allocation5], 1
    %2927 = vsyncpa %s2926, 1
    %2928 = vsyncpa [#allocation8], 1
    %2929 = vsyncpa [#allocation6], 1
    %s2930 = scalar_lea.sflag [#allocation6], 1
    %2931 = vsyncpa %s2930, 1
    %2932 = vsyncpa [#allocation11], 1
    %s2933 = scalar_lea.sflag [#allocation11], 1
    %2934 = vsyncpa %s2933, 1

</llo_original>
